<compile_context>
chip_gen: v5e
topology: v5e:2x2
jax: 0.10.0
libtpu: 0.0.40
codegen_flags: <defaults>
</compile_context>

<pallas_src>
import functools

import jax
import jax.numpy as jnp
from jax import lax
from jax.experimental import pallas as pl
from jax.experimental.pallas import tpu as pltpu

# ------------------- SMOKECoder constants (deterministic, in-script) -----------
DEPTH_REF = (28.01, 16.32)                                    # (mean, std)
DIM_REF = jnp.array([[3.88, 1.63, 1.53],
                     [1.78, 1.70, 0.58],
                     [0.88, 1.73, 0.67]], dtype=jnp.float32)  # per-class dim reference

DET_THRESHOLD = 0.25   # cfg.TEST.DETECTIONS_THRESHOLD
MAX_DETECTION = 8      # cfg.TEST.DETECTIONS_PER_IMG
PRED_2D = True         # cfg.TEST.PRED_2D


# ================================ Pallas kernel =================================
def _make_smoke_kernel(W, HW, C, C_reg, K):
    """nms_hm (3x3 max-pool keep-local-maxima) + select_topk + fused POI gather.

    Single grid step over the whole batch:
      hm (B, C, HW), reg (B, C_reg, HW) -> out (B, K, C_reg + 4) packed as
      [poi(0:C_reg) | score | class | xs | ys], all f32.
    Only Python scalars are closed over (no captured jnp constants).
    """
    NEG = float("-inf")
    BIG = int(C * HW)                       # sentinel > any valid class-major flat index
    pow2_w = W > 0 and (W & (W - 1)) == 0
    pow2_hw = HW > 0 and (HW & (HW - 1)) == 0
    split = (HW % 256) == 0                 # two 128-lane-aligned partitions

    def _div_mod(idx, div, is_pow2):
        if is_pow2:
            sh = div.bit_length() - 1
            return idx >> sh, idx & (div - 1)
        # TODO(synk): non-power-of-two fallback keeps the float floor-div trick (exact below 2^24).
        q = jnp.floor(idx.astype(jnp.float32) / float(div)).astype(jnp.int32)
        return q, idx - q * div

    def kernel(hm_ref, reg_ref, out_ref):
        Bs = hm_ref.shape[0]
        hm = hm_ref[...].astype(jnp.float32)                         # (Bs, C, HW)

        # ---- lane-dense index helpers (built entirely in-kernel) ----
        lane = lax.broadcasted_iota(jnp.int32, (1, 1, HW), 2)        # flat spatial idx
        _, col = _div_mod(lane, W, pow2_w)
        has_left = col >= 1
        has_right = col <= W - 2
        has_up = lane >= W
        has_down = lane < HW - W

        # ---- nms_hm: separable 3x3 max-pool (stride 1, pad 1); keep local maxima ----
        left = jnp.where(has_left, pltpu.roll(hm, shift=1, axis=2), NEG)
        right = jnp.where(has_right, pltpu.roll(hm, shift=HW - 1, axis=2), NEG)
        xmax = jnp.maximum(jnp.maximum(left, hm), right)
        up = jnp.where(has_up, pltpu.roll(xmax, shift=W, axis=2), NEG)
        down = jnp.where(has_down, pltpu.roll(xmax, shift=HW - W, axis=2), NEG)
        hmax = jnp.maximum(jnp.maximum(up, xmax), down)
        nms = jnp.where(hmax == hm, hm, 0.0)

        cls_i = lax.broadcasted_iota(jnp.int32, (1, C, 1), 1)        # class index
        lane_k = lax.broadcasted_iota(jnp.int32, (1, K), 1)          # (1, K)

        # ---- top-K: iterative masked argmax; the partitions are independent chains
        # so their per-pass XLU reductions can interleave across the XLU pipes. ----
        def topk_chains(keys, flats):
            n = len(keys)
            scs = [jnp.zeros((Bs, K), jnp.float32) for _ in range(n)]
            pss = [jnp.zeros((Bs, K), jnp.int32) for _ in range(n)]
            for k in range(K):                                       # K static -> unrolled
                sel = lane_k == k
                for p in range(n):
                    m = jnp.max(jnp.max(keys[p], axis=2, keepdims=True),
                                axis=1, keepdims=True)               # (Bs,1,1)
                    cand = jnp.where(keys[p] >= m, flats[p], BIG)
                    pos = jnp.min(jnp.min(cand, axis=2, keepdims=True),
                                  axis=1, keepdims=True)             # min-flat-index tie-break
                    scs[p] = jnp.where(sel, m[:, :, 0], scs[p])
                    pss[p] = jnp.where(sel, pos[:, :, 0], pss[p])
                    keys[p] = jnp.where(flats[p] == pos, NEG, keys[p])
            return scs, pss

        if split:
            half = HW // 2                                           # 128-lane aligned halves
            flat0 = cls_i * HW + lane[:, :, :half]
            flat1 = flat0 + half
            scs, pss = topk_chains([nms[:, :, :half], nms[:, :, half:]],
                                   [flat0, flat1])
            cand_sc = jnp.concatenate(scs, axis=1)                   # (Bs, 2K)
            cand_ps = jnp.concatenate(pss, axis=1)                   # (Bs, 2K)
            sc = jnp.zeros((Bs, K), jnp.float32)
            ps = jnp.zeros((Bs, K), jnp.int32)
            for k in range(K):                                       # cheap (Bs,2K) merge passes
                m = jnp.max(cand_sc, axis=1, keepdims=True)          # (Bs,1)
                pos = jnp.min(jnp.where(cand_sc >= m, cand_ps, BIG),
                              axis=1, keepdims=True)                 # (Bs,1)
                sel = lane_k == k
                sc = jnp.where(sel, m, sc)
                ps = jnp.where(sel, pos, ps)
                cand_sc = jnp.where(cand_ps == pos, NEG, cand_sc)
        else:
            flat = cls_i * HW + lane
            scs, pss = topk_chains([nms], [flat])
            sc, ps = scs[0], pss[0]

        # ---- decompose class-major flat index with integer shifts/ands ----
        cls_sel, sp = _div_mod(ps, HW, pow2_hw)                      # (Bs, K)
        ys_sel, xs_sel = _div_mod(sp, W, pow2_w)                     # (Bs, K)

        # ---- fused select_point_of_interest: one-hot x reg on the (idle) MXU ----
        onehot = (sp[:, :, None] == lane).astype(jnp.float32)        # (Bs, K, HW)
        reg = reg_ref[...].astype(jnp.float32)                       # (Bs, C_reg, HW)
        poi = jnp.einsum('bkh,bch->bkc', onehot, reg,
                         preferred_element_type=jnp.float32)         # (Bs, K, C_reg)

        # ---- pack in-register, single full-tile store ----
        packed = jnp.concatenate(
            [poi,
             sc[:, :, None],
             cls_sel.astype(jnp.float32)[:, :, None],
             xs_sel.astype(jnp.float32)[:, :, None],
             ys_sel.astype(jnp.float32)[:, :, None]], axis=2)        # (Bs, K, C_reg+4)
        out_ref[...] = packed

    return kernel


def nms_topk_poi(pred_hmp, pred_reg, K):
    """Pallas wrapper: NMS + top-K + regression POI gather in one kernel call."""
    B, C, H, W = pred_hmp.shape
    C_reg = pred_reg.shape[1]
    HW = H * W
    OUTW = C_reg + 4
    hm_flat = pred_hmp.reshape(B, C, HW)       # contiguous collapse: free
    reg_flat = pred_reg.reshape(B, C_reg, HW)
    kernel = _make_smoke_kernel(W, HW, C, C_reg, K)

    out = pl.pallas_call(
        kernel,
        out_shape=jax.ShapeDtypeStruct((B, K, OUTW), jnp.float32),
        grid_spec=pltpu.PrefetchScalarGridSpec(
            num_scalar_prefetch=0,
            grid=(1,),                                    # whole batch in one kernel step
            in_specs=[pl.BlockSpec((B, C, HW), lambda i: (0, 0, 0)),
                      pl.BlockSpec((B, C_reg, HW), lambda i: (0, 0, 0))],
            out_specs=pl.BlockSpec((B, K, OUTW), lambda i: (0, 0, 0))),
        compiler_params=pltpu.CompilerParams(dimension_semantics=("arbitrary",)),
    )(hm_flat, reg_flat)

    scores = out[:, :, C_reg]                             # (B, K)
    classes = out[:, :, C_reg + 1].astype(jnp.int32)      # (B, K)
    xs = out[:, :, C_reg + 2]                             # (B, K)
    ys = out[:, :, C_reg + 3]                             # (B, K)
    pois = out[:, :, :C_reg]                              # (B, K, C_reg)
    return scores, classes, xs, ys, pois


# ============================ SMOKECoder (JAX glue) =============================
def _inv3x3(m):
    """Closed-form adjugate/determinant inverse for (..., 3, 3) matrices."""
    a, b, c = m[..., 0, 0], m[..., 0, 1], m[..., 0, 2]
    d, e, f = m[..., 1, 0], m[..., 1, 1], m[..., 1, 2]
    g, h, i = m[..., 2, 0], m[..., 2, 1], m[..., 2, 2]
    A = e * i - f * h
    B = -(d * i - f * g)
    C = d * h - e * g
    det = a * A + b * B + c * C
    inv = jnp.stack([
        jnp.stack([A, -(b * i - c * h), (b * f - c * e)], axis=-1),
        jnp.stack([B, (a * i - c * g), -(a * f - c * d)], axis=-1),
        jnp.stack([C, -(a * h - b * g), (a * e - b * d)], axis=-1),
    ], axis=-2)
    return inv / det[..., None, None]


def decode_depth(dep_offset):
    return dep_offset * DEPTH_REF[1] + DEPTH_REF[0]


def decode_loc3d(points, points_offset, depths, Ks, trans_mats):
    N = points_offset.shape[0]
    Nb = Ks.shape[0]
    obj_id = jnp.repeat(jnp.arange(Nb), N // Nb)
    trans_inv = _inv3x3(trans_mats)[obj_id]                      # (N, 3, 3)
    Ks_inv = _inv3x3(Ks)[obj_id]                                 # (N, 3, 3)
    proj = points + points_offset                                # (N, 2)
    proj_h = jnp.concatenate([proj, jnp.ones((N, 1), jnp.float32)], axis=1)[:, :, None]
    img = jnp.matmul(trans_inv, proj_h) * depths.reshape(N, 1, 1)
    locs = jnp.matmul(Ks_inv, img)
    return locs[:, :, 0]


def decode_dim3d(cls_ids, dims_offset):
    sel = DIM_REF[cls_ids.reshape(-1)]
    return jnp.exp(dims_offset) * sel


def decode_orient(vector_ori, locations):
    PI = jnp.pi
    rays = jnp.arctan(locations[:, 0] / (locations[:, 2] + 1e-7))
    alphas = jnp.arctan(vector_ori[:, 0] / (vector_ori[:, 1] + 1e-7))
    alphas = jnp.where(vector_ori[:, 1] >= 0, alphas - PI / 2, alphas + PI / 2)
    rotys = alphas + rays
    rotys = jnp.where(rotys > PI, rotys - 2 * PI, rotys)
    rotys = jnp.where(rotys < -PI, rotys + 2 * PI, rotys)
    alphas = jnp.where(alphas > PI, alphas - 2 * PI, alphas)
    alphas = jnp.where(alphas < -PI, alphas + 2 * PI, alphas)
    return rotys, alphas


def encode_box3d(rotys, dims, locs):
    N = rotys.shape[0]
    c, s = jnp.cos(rotys), jnp.sin(rotys)
    z, o = jnp.zeros_like(c), jnp.ones_like(c)
    R = jnp.stack([c, z, s, z, o, z, -s, z, c], axis=1).reshape(N, 3, 3)
    sx = 0.5 * jnp.array([-1., 1., 1., 1., 1., -1., -1., -1.], jnp.float32)
    sy = jnp.array([-1., -1., 0., 0., -1., -1., 0., 0.], jnp.float32)
    sz = 0.5 * jnp.array([-1., -1., -1., 1., 1., 1., 1., -1.], jnp.float32)
    corners = jnp.stack([dims[:, 0:1] * sx, dims[:, 1:2] * sy, dims[:, 2:3] * sz], axis=1)
    return jnp.matmul(R, corners) + locs[:, :, None]             # (N, 3, 8)


def encode_box2d(Ks, rotys, dims, locs, img_size, obj_id):
    img_size = img_size.reshape(-1)
    box3d = encode_box3d(rotys, dims, locs)
    box3d_img = jnp.matmul(Ks[obj_id], box3d)                    # per-object intrinsics (torch broadcasts for B=1)
    xy = box3d_img[:, :2, :] / box3d_img[:, 2:3, :]
    xmins = jnp.clip(xy[:, 0, :].min(axis=1), 0.0, img_size[0])
    xmaxs = jnp.clip(xy[:, 0, :].max(axis=1), 0.0, img_size[0])
    ymins = jnp.clip(xy[:, 1, :].min(axis=1), 0.0, img_size[1])
    ymaxs = jnp.clip(xy[:, 1, :].max(axis=1), 0.0, img_size[1])
    return jnp.stack([xmins, ymins, xmaxs, ymaxs], axis=1)


# ============================ SMOKEProcessor.forward ============================
@functools.partial(jax.jit, static_argnames=("max_detection", "pred_2d"))
def _smoke_forward_fixed(pred_hmp, pred_reg, Kmat, trans_mat, size, *,
                         max_detection, pred_2d):
    B = pred_hmp.shape[0]
    C_reg = pred_reg.shape[1]

    # hot path in Pallas: nms_hm + select_topk + select_point_of_interest
    scores, classes, xs, ys, pois = nms_topk_poi(pred_hmp, pred_reg, max_detection)

    pred_reg_pois = pois.reshape(-1, C_reg)
    pred_proj_points = jnp.concatenate([xs.reshape(-1, 1), ys.reshape(-1, 1)], axis=1)
    pred_dep_offset = pred_reg_pois[:, 0]
    pred_pts_offset = pred_reg_pois[:, 1:3]
    pred_dim_offset = pred_reg_pois[:, 3:6]
    pred_ori_offset = pred_reg_pois[:, 6:]

    N = pred_reg_pois.shape[0]
    obj_id = jnp.repeat(jnp.arange(B), N // B)

    pred_depth = decode_depth(pred_dep_offset)
    pred_loc3d = decode_loc3d(pred_proj_points, pred_pts_offset, pred_depth, Kmat, trans_mat)
    cls_flat = classes.reshape(-1)
    pred_dim3d = decode_dim3d(cls_flat, pred_dim_offset)
    pred_loc3d = pred_loc3d.at[:, 1].add(pred_dim3d[:, 1] / 2)
    pred_rty3d, pred_alpha = decode_orient(pred_ori_offset, pred_loc3d)

    if pred_2d:
        pred_box2d = encode_box2d(Kmat, pred_rty3d, pred_dim3d, pred_loc3d, size, obj_id)
    else:
        # TODO(synk): torch returns a bare tensor([0,0,0,0]) here (not cat-compatible); emit zeros per row.
        pred_box2d = jnp.zeros((N, 4), jnp.float32)

    scores_col = scores.reshape(-1, 1)
    classes_col = cls_flat.reshape(-1, 1).astype(jnp.float32)
    alpha_col = pred_alpha.reshape(-1, 1)
    rty_col = pred_rty3d.reshape(-1, 1)
    dim_rolled = jnp.roll(pred_dim3d, shift=-1, axis=1)
    result = jnp.concatenate([classes_col, alpha_col, pred_box2d, dim_rolled,
                              pred_loc3d, rty_col, scores_col], axis=1)     # (N, 14)
    return result, scores_col


def smoke_processor_forward(predictions, target_vars,
                            det_threshold=DET_THRESHOLD,
                            max_detection=MAX_DETECTION,
                            pred_2d=PRED_2D):
    pred_hmp, pred_reg = predictions['cls'], predictions['reg']
    result, scores_col = _smoke_forward_fixed(
        pred_hmp, pred_reg, target_vars['K'], target_vars['trans_mat'], target_vars['size'],
        max_detection=max_detection, pred_2d=pred_2d)

    # final dynamic-shape score-threshold filter stays eager (matches torch semantics)
    # TODO(synk): downstream consumers that accept a fixed (B*K, 14) result + validity
    # mask can skip this device->host sync entirely.
    keep_idx = result[:, -1] >= det_threshold
    result = result[keep_idx]

    eval_utils = {'dis_ious': None, 'vis_scores': scores_col}
    vis_sources = {'heat_map': pred_hmp}
    return result, eval_utils, vis_sources


# ===================================== main =====================================
if __name__ == "__main__":
    key = jax.random.PRNGKey(0)
    B, C_cls, C_reg, H, W = 2, 3, 8, 16, 16
    k1, k2 = jax.random.split(key)
    pred_hmp = jax.nn.sigmoid(jax.random.normal(k1, (B, C_cls, H, W), jnp.float32))
    pred_reg = 0.1 * jax.random.normal(k2, (B, C_reg, H, W), jnp.float32)

    # synthetic targets: camera intrinsics K, image->feature affine trans_mat, image size
    fx, fy, cx, cy = 721.5, 721.5, 64.0, 32.0
    Kmat = jnp.tile(jnp.array([[fx, 0., cx], [0., fy, cy], [0., 0., 1.]],
                              jnp.float32)[None], (B, 1, 1))
    trans_mat = jnp.tile(jnp.array([[W / 128., 0., 0.], [0., H / 64., 0.], [0., 0., 1.]],
                                   jnp.float32)[None], (B, 1, 1))
    size = jnp.tile(jnp.array([[128., 64.]], jnp.float32), (B, 1))
    target_vars = dict(K=Kmat, trans_mat=trans_mat, size=size)

    result, eval_utils, vis_sources = smoke_processor_forward(
        {'cls': pred_hmp, 'reg': pred_reg}, target_vars)
    jax.block_until_ready(result)
    jax.block_until_ready(eval_utils['vis_scores'])
    jax.block_until_ready(vis_sources['heat_map'])
    print("KERNEL_OK")
</pallas_src>

<mosaic_0001>
module attributes {stable_mosaic.version = 11 : i64} {
  func.func @kernel(%arg0: i32, %arg1: memref<2x3x256xf32, #tpu.memory_space<vmem>>, %arg2: memref<2x8x256xf32, #tpu.memory_space<vmem>>, %arg3: memref<2x8x12xf32, #tpu.memory_space<vmem>>) attributes {dimension_semantics = [#tpu.dimension_semantics<arbitrary>], iteration_bounds = array<i64: 1>, scalar_prefetch = 0 : i64, scratch_operands = 0 : i64, tpu.core_type = #tpu.core_type<tc>, window_params = [{pipeline_mode = #tpu.pipeline_mode<synchronous>, transform_indices = @transform_0, window_bounds = array<i64: 2, 3, 256>}, {pipeline_mode = #tpu.pipeline_mode<synchronous>, transform_indices = @transform_1, window_bounds = array<i64: 2, 8, 256>}, {pipeline_mode = #tpu.pipeline_mode<synchronous>, transform_indices = @transform_2, window_bounds = array<i64: 2, 8, 12>}]} {
    %c0 = arith.constant 0 : index
    %c0_0 = arith.constant 0 : index
    %c0_1 = arith.constant 0 : index
    %0 = vector.load %arg1[%c0, %c0_0, %c0_1] : memref<2x3x256xf32, #tpu.memory_space<vmem>>, vector<2x3x256xf32>
    %1 = tpu.iota {dimensions = array<i32: 2>} : vector<1x1x256xi32>
    %c15_i32 = arith.constant 15 : i32
    %2 = vector.broadcast %c15_i32 : i32 to vector<1x1x256xi32>
    %3 = arith.andi %1, %2 : vector<1x1x256xi32>
    %c1_i32 = arith.constant 1 : i32
    %4 = vector.broadcast %c1_i32 : i32 to vector<1x1x256xi32>
    %5 = arith.cmpi sge, %3, %4 : vector<1x1x256xi32>
    %c14_i32 = arith.constant 14 : i32
    %6 = vector.broadcast %c14_i32 : i32 to vector<1x1x256xi32>
    %7 = arith.cmpi sle, %3, %6 : vector<1x1x256xi32>
    %c16_i32 = arith.constant 16 : i32
    %8 = vector.broadcast %c16_i32 : i32 to vector<1x1x256xi32>
    %9 = arith.cmpi sge, %1, %8 : vector<1x1x256xi32>
    %c240_i32 = arith.constant 240 : i32
    %10 = vector.broadcast %c240_i32 : i32 to vector<1x1x256xi32>
    %11 = arith.cmpi slt, %1, %10 : vector<1x1x256xi32>
    %c1_i32_2 = arith.constant 1 : i32
    %12 = tpu.dynamic_rotate %0 by %c1_i32_2 dim 2 : vector<2x3x256xf32>, i32 -> vector<2x3x256xf32>
    %cst = arith.constant 0xFF800000 : f32
    %13 = vector.shape_cast %5 : vector<1x1x256xi1> to vector<1x1x256xi1>
    %14 = vector.broadcast %13 : vector<1x1x256xi1> to vector<2x3x256xi1>
    %15 = vector.broadcast %cst : f32 to vector<2x3x256xf32>
    %16 = arith.select %14, %12, %15 : vector<2x3x256xi1>, vector<2x3x256xf32>
    %c255_i32 = arith.constant 255 : i32
    %17 = tpu.dynamic_rotate %0 by %c255_i32 dim 2 : vector<2x3x256xf32>, i32 -> vector<2x3x256xf32>
    %cst_3 = arith.constant 0xFF800000 : f32
    %18 = vector.shape_cast %7 : vector<1x1x256xi1> to vector<1x1x256xi1>
    %19 = vector.broadcast %18 : vector<1x1x256xi1> to vector<2x3x256xi1>
    %20 = vector.broadcast %cst_3 : f32 to vector<2x3x256xf32>
    %21 = arith.select %19, %17, %20 : vector<2x3x256xi1>, vector<2x3x256xf32>
    %22 = arith.maximumf %16, %0 : vector<2x3x256xf32>
    %23 = arith.maximumf %22, %21 : vector<2x3x256xf32>
    %c16_i32_4 = arith.constant 16 : i32
    %24 = tpu.dynamic_rotate %23 by %c16_i32_4 dim 2 : vector<2x3x256xf32>, i32 -> vector<2x3x256xf32>
    %cst_5 = arith.constant 0xFF800000 : f32
    %25 = vector.shape_cast %9 : vector<1x1x256xi1> to vector<1x1x256xi1>
    %26 = vector.broadcast %25 : vector<1x1x256xi1> to vector<2x3x256xi1>
    %27 = vector.broadcast %cst_5 : f32 to vector<2x3x256xf32>
    %28 = arith.select %26, %24, %27 : vector<2x3x256xi1>, vector<2x3x256xf32>
    %c240_i32_6 = arith.constant 240 : i32
    %29 = tpu.dynamic_rotate %23 by %c240_i32_6 dim 2 : vector<2x3x256xf32>, i32 -> vector<2x3x256xf32>
    %cst_7 = arith.constant 0xFF800000 : f32
    %30 = vector.shape_cast %11 : vector<1x1x256xi1> to vector<1x1x256xi1>
    %31 = vector.broadcast %30 : vector<1x1x256xi1> to vector<2x3x256xi1>
    %32 = vector.broadcast %cst_7 : f32 to vector<2x3x256xf32>
    %33 = arith.select %31, %29, %32 : vector<2x3x256xi1>, vector<2x3x256xf32>
    %34 = arith.maximumf %28, %23 : vector<2x3x256xf32>
    %35 = arith.maximumf %34, %33 : vector<2x3x256xf32>
    %36 = arith.cmpf oeq, %35, %0 : vector<2x3x256xf32>
    %cst_8 = arith.constant 0.000000e+00 : f32
    %37 = vector.broadcast %cst_8 : f32 to vector<2x3x256xf32>
    %38 = arith.select %36, %0, %37 : vector<2x3x256xi1>, vector<2x3x256xf32>
    %39 = tpu.iota {dimensions = array<i32: 1>} : vector<1x3x1xi32>
    %40 = tpu.iota {dimensions = array<i32: 1>} : vector<1x8xi32>
    %c256_i32 = arith.constant 256 : i32
    %41 = vector.broadcast %c256_i32 : i32 to vector<1x3x1xi32>
    %42 = arith.muli %39, %41 : vector<1x3x1xi32>
    %43 = vector.extract_strided_slice %1 {offsets = [0, 0, 0], sizes = [1, 1, 128], strides = [1, 1, 1]} : vector<1x1x256xi32> to vector<1x1x128xi32>
    %44 = vector.broadcast %42 : vector<1x3x1xi32> to vector<1x3x128xi32>
    %45 = vector.broadcast %43 : vector<1x1x128xi32> to vector<1x3x128xi32>
    %46 = arith.addi %44, %45 : vector<1x3x128xi32>
    %c128_i32 = arith.constant 128 : i32
    %47 = vector.broadcast %c128_i32 : i32 to vector<1x3x128xi32>
    %48 = arith.addi %46, %47 : vector<1x3x128xi32>
    %49 = vector.extract_strided_slice %38 {offsets = [0, 0, 0], sizes = [2, 3, 128], strides = [1, 1, 1]} : vector<2x3x256xf32> to vector<2x3x128xf32>
    %50 = vector.extract_strided_slice %38 {offsets = [0, 0, 128], sizes = [2, 3, 128], strides = [1, 1, 1]} : vector<2x3x256xf32> to vector<2x3x128xf32>
    %cst_9 = arith.constant 0.000000e+00 : f32
    %51 = vector.broadcast %cst_9 : f32 to vector<2x8xf32>
    %cst_10 = arith.constant 0.000000e+00 : f32
    %52 = vector.broadcast %cst_10 : f32 to vector<2x8xf32>
    %c0_i32 = arith.constant 0 : i32
    %53 = vector.broadcast %c0_i32 : i32 to vector<2x8xi32>
    %c0_i32_11 = arith.constant 0 : i32
    %54 = vector.broadcast %c0_i32_11 : i32 to vector<2x8xi32>
    %c0_i32_12 = arith.constant 0 : i32
    %55 = vector.broadcast %c0_i32_12 : i32 to vector<1x8xi32>
    %56 = arith.cmpi eq, %40, %55 : vector<1x8xi32>
    %cst_13 = arith.constant dense<0xFF800000> : vector<2x3xf32>
    %57 = vector.multi_reduction <maximumf>, %49, %cst_13 [2] : vector<2x3x128xf32> to vector<2x3xf32>
    %58 = vector.shape_cast %57 : vector<2x3xf32> to vector<2x3x1xf32>
    %cst_14 = arith.constant dense<0xFF800000> : vector<2x1xf32>
    %59 = vector.multi_reduction <maximumf>, %58, %cst_14 [1] : vector<2x3x1xf32> to vector<2x1xf32>
    %60 = vector.shape_cast %59 : vector<2x1xf32> to vector<2x1x1xf32>
    %61 = vector.broadcast %60 : vector<2x1x1xf32> to vector<2x3x128xf32>
    %62 = arith.cmpf oge, %49, %61 : vector<2x3x128xf32>
    %c768_i32 = arith.constant 768 : i32
    %63 = vector.shape_cast %46 : vector<1x3x128xi32> to vector<1x3x128xi32>
    %64 = vector.broadcast %63 : vector<1x3x128xi32> to vector<2x3x128xi32>
    %65 = vector.broadcast %c768_i32 : i32 to vector<2x3x128xi32>
    %66 = arith.select %62, %64, %65 : vector<2x3x128xi1>, vector<2x3x128xi32>
    %cst_15 = arith.constant dense<2147483647> : vector<2x3xi32>
    %67 = vector.multi_reduction <minsi>, %66, %cst_15 [2] : vector<2x3x128xi32> to vector<2x3xi32>
    %68 = vector.shape_cast %67 : vector<2x3xi32> to vector<2x3x1xi32>
    %cst_16 = arith.constant dense<2147483647> : vector<2x1xi32>
    %69 = vector.multi_reduction <minsi>, %68, %cst_16 [1] : vector<2x3x1xi32> to vector<2x1xi32>
    %70 = vector.shape_cast %69 : vector<2x1xi32> to vector<2x1x1xi32>
    %71 = vector.shape_cast %60 : vector<2x1x1xf32> to vector<2x1xf32>
    %72 = vector.shape_cast %56 : vector<1x8xi1> to vector<1x8xi1>
    %73 = vector.broadcast %72 : vector<1x8xi1> to vector<2x8xi1>
    %74 = vector.shape_cast %71 : vector<2x1xf32> to vector<2x1xf32>
    %75 = vector.broadcast %74 : vector<2x1xf32> to vector<2x8xf32>
    %76 = arith.select %73, %75, %51 : vector<2x8xi1>, vector<2x8xf32>
    %77 = vector.shape_cast %70 : vector<2x1x1xi32> to vector<2x1xi32>
    %78 = vector.shape_cast %56 : vector<1x8xi1> to vector<1x8xi1>
    %79 = vector.broadcast %78 : vector<1x8xi1> to vector<2x8xi1>
    %80 = vector.shape_cast %77 : vector<2x1xi32> to vector<2x1xi32>
    %81 = vector.broadcast %80 : vector<2x1xi32> to vector<2x8xi32>
    %82 = arith.select %79, %81, %53 : vector<2x8xi1>, vector<2x8xi32>
    %83 = vector.broadcast %46 : vector<1x3x128xi32> to vector<2x3x128xi32>
    %84 = vector.broadcast %70 : vector<2x1x1xi32> to vector<2x3x128xi32>
    %85 = arith.cmpi eq, %83, %84 : vector<2x3x128xi32>
    %cst_17 = arith.constant 0xFF800000 : f32
    %86 = vector.broadcast %cst_17 : f32 to vector<2x3x128xf32>
    %87 = arith.select %85, %86, %49 : vector<2x3x128xi1>, vector<2x3x128xf32>
    %cst_18 = arith.constant dense<0xFF800000> : vector<2x3xf32>
    %88 = vector.multi_reduction <maximumf>, %50, %cst_18 [2] : vector<2x3x128xf32> to vector<2x3xf32>
    %89 = vector.shape_cast %88 : vector<2x3xf32> to vector<2x3x1xf32>
    %cst_19 = arith.constant dense<0xFF800000> : vector<2x1xf32>
    %90 = vector.multi_reduction <maximumf>, %89, %cst_19 [1] : vector<2x3x1xf32> to vector<2x1xf32>
    %91 = vector.shape_cast %90 : vector<2x1xf32> to vector<2x1x1xf32>
    %92 = vector.broadcast %91 : vector<2x1x1xf32> to vector<2x3x128xf32>
    %93 = arith.cmpf oge, %50, %92 : vector<2x3x128xf32>
    %c768_i32_20 = arith.constant 768 : i32
    %94 = vector.shape_cast %48 : vector<1x3x128xi32> to vector<1x3x128xi32>
    %95 = vector.broadcast %94 : vector<1x3x128xi32> to vector<2x3x128xi32>
    %96 = vector.broadcast %c768_i32_20 : i32 to vector<2x3x128xi32>
    %97 = arith.select %93, %95, %96 : vector<2x3x128xi1>, vector<2x3x128xi32>
    %cst_21 = arith.constant dense<2147483647> : vector<2x3xi32>
    %98 = vector.multi_reduction <minsi>, %97, %cst_21 [2] : vector<2x3x128xi32> to vector<2x3xi32>
    %99 = vector.shape_cast %98 : vector<2x3xi32> to vector<2x3x1xi32>
    %cst_22 = arith.constant dense<2147483647> : vector<2x1xi32>
    %100 = vector.multi_reduction <minsi>, %99, %cst_22 [1] : vector<2x3x1xi32> to vector<2x1xi32>
    %101 = vector.shape_cast %100 : vector<2x1xi32> to vector<2x1x1xi32>
    %102 = vector.shape_cast %91 : vector<2x1x1xf32> to vector<2x1xf32>
    %103 = vector.shape_cast %56 : vector<1x8xi1> to vector<1x8xi1>
    %104 = vector.broadcast %103 : vector<1x8xi1> to vector<2x8xi1>
    %105 = vector.shape_cast %102 : vector<2x1xf32> to vector<2x1xf32>
    %106 = vector.broadcast %105 : vector<2x1xf32> to vector<2x8xf32>
    %107 = arith.select %104, %106, %52 : vector<2x8xi1>, vector<2x8xf32>
    %108 = vector.shape_cast %101 : vector<2x1x1xi32> to vector<2x1xi32>
    %109 = vector.shape_cast %56 : vector<1x8xi1> to vector<1x8xi1>
    %110 = vector.broadcast %109 : vector<1x8xi1> to vector<2x8xi1>
    %111 = vector.shape_cast %108 : vector<2x1xi32> to vector<2x1xi32>
    %112 = vector.broadcast %111 : vector<2x1xi32> to vector<2x8xi32>
    %113 = arith.select %110, %112, %54 : vector<2x8xi1>, vector<2x8xi32>
    %114 = vector.broadcast %48 : vector<1x3x128xi32> to vector<2x3x128xi32>
    %115 = vector.broadcast %101 : vector<2x1x1xi32> to vector<2x3x128xi32>
    %116 = arith.cmpi eq, %114, %115 : vector<2x3x128xi32>
    %cst_23 = arith.constant 0xFF800000 : f32
    %117 = vector.broadcast %cst_23 : f32 to vector<2x3x128xf32>
    %118 = arith.select %116, %117, %50 : vector<2x3x128xi1>, vector<2x3x128xf32>
    %c1_i32_24 = arith.constant 1 : i32
    %119 = vector.broadcast %c1_i32_24 : i32 to vector<1x8xi32>
    %120 = arith.cmpi eq, %40, %119 : vector<1x8xi32>
    %cst_25 = arith.constant dense<0xFF800000> : vector<2x3xf32>
    %121 = vector.multi_reduction <maximumf>, %87, %cst_25 [2] : vector<2x3x128xf32> to vector<2x3xf32>
    %122 = vector.shape_cast %121 : vector<2x3xf32> to vector<2x3x1xf32>
    %cst_26 = arith.constant dense<0xFF800000> : vector<2x1xf32>
    %123 = vector.multi_reduction <maximumf>, %122, %cst_26 [1] : vector<2x3x1xf32> to vector<2x1xf32>
    %124 = vector.shape_cast %123 : vector<2x1xf32> to vector<2x1x1xf32>
    %125 = vector.broadcast %124 : vector<2x1x1xf32> to vector<2x3x128xf32>
    %126 = arith.cmpf oge, %87, %125 : vector<2x3x128xf32>
    %c768_i32_27 = arith.constant 768 : i32
    %127 = vector.shape_cast %46 : vector<1x3x128xi32> to vector<1x3x128xi32>
    %128 = vector.broadcast %127 : vector<1x3x128xi32> to vector<2x3x128xi32>
    %129 = vector.broadcast %c768_i32_27 : i32 to vector<2x3x128xi32>
    %130 = arith.select %126, %128, %129 : vector<2x3x128xi1>, vector<2x3x128xi32>
    %cst_28 = arith.constant dense<2147483647> : vector<2x3xi32>
    %131 = vector.multi_reduction <minsi>, %130, %cst_28 [2] : vector<2x3x128xi32> to vector<2x3xi32>
    %132 = vector.shape_cast %131 : vector<2x3xi32> to vector<2x3x1xi32>
    %cst_29 = arith.constant dense<2147483647> : vector<2x1xi32>
    %133 = vector.multi_reduction <minsi>, %132, %cst_29 [1] : vector<2x3x1xi32> to vector<2x1xi32>
    %134 = vector.shape_cast %133 : vector<2x1xi32> to vector<2x1x1xi32>
    %135 = vector.shape_cast %124 : vector<2x1x1xf32> to vector<2x1xf32>
    %136 = vector.shape_cast %120 : vector<1x8xi1> to vector<1x8xi1>
    %137 = vector.broadcast %136 : vector<1x8xi1> to vector<2x8xi1>
    %138 = vector.shape_cast %135 : vector<2x1xf32> to vector<2x1xf32>
    %139 = vector.broadcast %138 : vector<2x1xf32> to vector<2x8xf32>
    %140 = arith.select %137, %139, %76 : vector<2x8xi1>, vector<2x8xf32>
    %141 = vector.shape_cast %134 : vector<2x1x1xi32> to vector<2x1xi32>
    %142 = vector.shape_cast %120 : vector<1x8xi1> to vector<1x8xi1>
    %143 = vector.broadcast %142 : vector<1x8xi1> to vector<2x8xi1>
    %144 = vector.shape_cast %141 : vector<2x1xi32> to vector<2x1xi32>
    %145 = vector.broadcast %144 : vector<2x1xi32> to vector<2x8xi32>
    %146 = arith.select %143, %145, %82 : vector<2x8xi1>, vector<2x8xi32>
    %147 = vector.broadcast %46 : vector<1x3x128xi32> to vector<2x3x128xi32>
    %148 = vector.broadcast %134 : vector<2x1x1xi32> to vector<2x3x128xi32>
    %149 = arith.cmpi eq, %147, %148 : vector<2x3x128xi32>
    %cst_30 = arith.constant 0xFF800000 : f32
    %150 = vector.broadcast %cst_30 : f32 to vector<2x3x128xf32>
    %151 = arith.select %149, %150, %87 : vector<2x3x128xi1>, vector<2x3x128xf32>
    %cst_31 = arith.constant dense<0xFF800000> : vector<2x3xf32>
    %152 = vector.multi_reduction <maximumf>, %118, %cst_31 [2] : vector<2x3x128xf32> to vector<2x3xf32>
    %153 = vector.shape_cast %152 : vector<2x3xf32> to vector<2x3x1xf32>
    %cst_32 = arith.constant dense<0xFF800000> : vector<2x1xf32>
    %154 = vector.multi_reduction <maximumf>, %153, %cst_32 [1] : vector<2x3x1xf32> to vector<2x1xf32>
    %155 = vector.shape_cast %154 : vector<2x1xf32> to vector<2x1x1xf32>
    %156 = vector.broadcast %155 : vector<2x1x1xf32> to vector<2x3x128xf32>
    %157 = arith.cmpf oge, %118, %156 : vector<2x3x128xf32>
    %c768_i32_33 = arith.constant 768 : i32
    %158 = vector.shape_cast %48 : vector<1x3x128xi32> to vector<1x3x128xi32>
    %159 = vector.broadcast %158 : vector<1x3x128xi32> to vector<2x3x128xi32>
    %160 = vector.broadcast %c768_i32_33 : i32 to vector<2x3x128xi32>
    %161 = arith.select %157, %159, %160 : vector<2x3x128xi1>, vector<2x3x128xi32>
    %cst_34 = arith.constant dense<2147483647> : vector<2x3xi32>
    %162 = vector.multi_reduction <minsi>, %161, %cst_34 [2] : vector<2x3x128xi32> to vector<2x3xi32>
    %163 = vector.shape_cast %162 : vector<2x3xi32> to vector<2x3x1xi32>
    %cst_35 = arith.constant dense<2147483647> : vector<2x1xi32>
    %164 = vector.multi_reduction <minsi>, %163, %cst_35 [1] : vector<2x3x1xi32> to vector<2x1xi32>
    %165 = vector.shape_cast %164 : vector<2x1xi32> to vector<2x1x1xi32>
    %166 = vector.shape_cast %155 : vector<2x1x1xf32> to vector<2x1xf32>
    %167 = vector.shape_cast %120 : vector<1x8xi1> to vector<1x8xi1>
    %168 = vector.broadcast %167 : vector<1x8xi1> to vector<2x8xi1>
    %169 = vector.shape_cast %166 : vector<2x1xf32> to vector<2x1xf32>
    %170 = vector.broadcast %169 : vector<2x1xf32> to vector<2x8xf32>
    %171 = arith.select %168, %170, %107 : vector<2x8xi1>, vector<2x8xf32>
    %172 = vector.shape_cast %165 : vector<2x1x1xi32> to vector<2x1xi32>
    %173 = vector.shape_cast %120 : vector<1x8xi1> to vector<1x8xi1>
    %174 = vector.broadcast %173 : vector<1x8xi1> to vector<2x8xi1>
    %175 = vector.shape_cast %172 : vector<2x1xi32> to vector<2x1xi32>
    %176 = vector.broadcast %175 : vector<2x1xi32> to vector<2x8xi32>
    %177 = arith.select %174, %176, %113 : vector<2x8xi1>, vector<2x8xi32>
    %178 = vector.broadcast %48 : vector<1x3x128xi32> to vector<2x3x128xi32>
    %179 = vector.broadcast %165 : vector<2x1x1xi32> to vector<2x3x128xi32>
    %180 = arith.cmpi eq, %178, %179 : vector<2x3x128xi32>
    %cst_36 = arith.constant 0xFF800000 : f32
    %181 = vector.broadcast %cst_36 : f32 to vector<2x3x128xf32>
    %182 = arith.select %180, %181, %118 : vector<2x3x128xi1>, vector<2x3x128xf32>
    %c2_i32 = arith.constant 2 : i32
    %183 = vector.broadcast %c2_i32 : i32 to vector<1x8xi32>
    %184 = arith.cmpi eq, %40, %183 : vector<1x8xi32>
    %cst_37 = arith.constant dense<0xFF800000> : vector<2x3xf32>
    %185 = vector.multi_reduction <maximumf>, %151, %cst_37 [2] : vector<2x3x128xf32> to vector<2x3xf32>
    %186 = vector.shape_cast %185 : vector<2x3xf32> to vector<2x3x1xf32>
    %cst_38 = arith.constant dense<0xFF800000> : vector<2x1xf32>
    %187 = vector.multi_reduction <maximumf>, %186, %cst_38 [1] : vector<2x3x1xf32> to vector<2x1xf32>
    %188 = vector.shape_cast %187 : vector<2x1xf32> to vector<2x1x1xf32>
    %189 = vector.broadcast %188 : vector<2x1x1xf32> to vector<2x3x128xf32>
    %190 = arith.cmpf oge, %151, %189 : vector<2x3x128xf32>
    %c768_i32_39 = arith.constant 768 : i32
    %191 = vector.shape_cast %46 : vector<1x3x128xi32> to vector<1x3x128xi32>
    %192 = vector.broadcast %191 : vector<1x3x128xi32> to vector<2x3x128xi32>
    %193 = vector.broadcast %c768_i32_39 : i32 to vector<2x3x128xi32>
    %194 = arith.select %190, %192, %193 : vector<2x3x128xi1>, vector<2x3x128xi32>
    %cst_40 = arith.constant dense<2147483647> : vector<2x3xi32>
    %195 = vector.multi_reduction <minsi>, %194, %cst_40 [2] : vector<2x3x128xi32> to vector<2x3xi32>
    %196 = vector.shape_cast %195 : vector<2x3xi32> to vector<2x3x1xi32>
    %cst_41 = arith.constant dense<2147483647> : vector<2x1xi32>
    %197 = vector.multi_reduction <minsi>, %196, %cst_41 [1] : vector<2x3x1xi32> to vector<2x1xi32>
    %198 = vector.shape_cast %197 : vector<2x1xi32> to vector<2x1x1xi32>
    %199 = vector.shape_cast %188 : vector<2x1x1xf32> to vector<2x1xf32>
    %200 = vector.shape_cast %184 : vector<1x8xi1> to vector<1x8xi1>
    %201 = vector.broadcast %200 : vector<1x8xi1> to vector<2x8xi1>
    %202 = vector.shape_cast %199 : vector<2x1xf32> to vector<2x1xf32>
    %203 = vector.broadcast %202 : vector<2x1xf32> to vector<2x8xf32>
    %204 = arith.select %201, %203, %140 : vector<2x8xi1>, vector<2x8xf32>
    %205 = vector.shape_cast %198 : vector<2x1x1xi32> to vector<2x1xi32>
    %206 = vector.shape_cast %184 : vector<1x8xi1> to vector<1x8xi1>
    %207 = vector.broadcast %206 : vector<1x8xi1> to vector<2x8xi1>
    %208 = vector.shape_cast %205 : vector<2x1xi32> to vector<2x1xi32>
    %209 = vector.broadcast %208 : vector<2x1xi32> to vector<2x8xi32>
    %210 = arith.select %207, %209, %146 : vector<2x8xi1>, vector<2x8xi32>
    %211 = vector.broadcast %46 : vector<1x3x128xi32> to vector<2x3x128xi32>
    %212 = vector.broadcast %198 : vector<2x1x1xi32> to vector<2x3x128xi32>
    %213 = arith.cmpi eq, %211, %212 : vector<2x3x128xi32>
    %cst_42 = arith.constant 0xFF800000 : f32
    %214 = vector.broadcast %cst_42 : f32 to vector<2x3x128xf32>
    %215 = arith.select %213, %214, %151 : vector<2x3x128xi1>, vector<2x3x128xf32>
    %cst_43 = arith.constant dense<0xFF800000> : vector<2x3xf32>
    %216 = vector.multi_reduction <maximumf>, %182, %cst_43 [2] : vector<2x3x128xf32> to vector<2x3xf32>
    %217 = vector.shape_cast %216 : vector<2x3xf32> to vector<2x3x1xf32>
    %cst_44 = arith.constant dense<0xFF800000> : vector<2x1xf32>
    %218 = vector.multi_reduction <maximumf>, %217, %cst_44 [1] : vector<2x3x1xf32> to vector<2x1xf32>
    %219 = vector.shape_cast %218 : vector<2x1xf32> to vector<2x1x1xf32>
    %220 = vector.broadcast %219 : vector<2x1x1xf32> to vector<2x3x128xf32>
    %221 = arith.cmpf oge, %182, %220 : vector<2x3x128xf32>
    %c768_i32_45 = arith.constant 768 : i32
    %222 = vector.shape_cast %48 : vector<1x3x128xi32> to vector<1x3x128xi32>
    %223 = vector.broadcast %222 : vector<1x3x128xi32> to vector<2x3x128xi32>
    %224 = vector.broadcast %c768_i32_45 : i32 to vector<2x3x128xi32>
    %225 = arith.select %221, %223, %224 : vector<2x3x128xi1>, vector<2x3x128xi32>
    %cst_46 = arith.constant dense<2147483647> : vector<2x3xi32>
    %226 = vector.multi_reduction <minsi>, %225, %cst_46 [2] : vector<2x3x128xi32> to vector<2x3xi32>
    %227 = vector.shape_cast %226 : vector<2x3xi32> to vector<2x3x1xi32>
    %cst_47 = arith.constant dense<2147483647> : vector<2x1xi32>
    %228 = vector.multi_reduction <minsi>, %227, %cst_47 [1] : vector<2x3x1xi32> to vector<2x1xi32>
    %229 = vector.shape_cast %228 : vector<2x1xi32> to vector<2x1x1xi32>
    %230 = vector.shape_cast %219 : vector<2x1x1xf32> to vector<2x1xf32>
    %231 = vector.shape_cast %184 : vector<1x8xi1> to vector<1x8xi1>
    %232 = vector.broadcast %231 : vector<1x8xi1> to vector<2x8xi1>
    %233 = vector.shape_cast %230 : vector<2x1xf32> to vector<2x1xf32>
    %234 = vector.broadcast %233 : vector<2x1xf32> to vector<2x8xf32>
    %235 = arith.select %232, %234, %171 : vector<2x8xi1>, vector<2x8xf32>
    %236 = vector.shape_cast %229 : vector<2x1x1xi32> to vector<2x1xi32>
    %237 = vector.shape_cast %184 : vector<1x8xi1> to vector<1x8xi1>
    %238 = vector.broadcast %237 : vector<1x8xi1> to vector<2x8xi1>
    %239 = vector.shape_cast %236 : vector<2x1xi32> to vector<2x1xi32>
    %240 = vector.broadcast %239 : vector<2x1xi32> to vector<2x8xi32>
    %241 = arith.select %238, %240, %177 : vector<2x8xi1>, vector<2x8xi32>
    %242 = vector.broadcast %48 : vector<1x3x128xi32> to vector<2x3x128xi32>
    %243 = vector.broadcast %229 : vector<2x1x1xi32> to vector<2x3x128xi32>
    %244 = arith.cmpi eq, %242, %243 : vector<2x3x128xi32>
    %cst_48 = arith.constant 0xFF800000 : f32
    %245 = vector.broadcast %cst_48 : f32 to vector<2x3x128xf32>
    %246 = arith.select %244, %245, %182 : vector<2x3x128xi1>, vector<2x3x128xf32>
    %c3_i32 = arith.constant 3 : i32
    %247 = vector.broadcast %c3_i32 : i32 to vector<1x8xi32>
    %248 = arith.cmpi eq, %40, %247 : vector<1x8xi32>
    %cst_49 = arith.constant dense<0xFF800000> : vector<2x3xf32>
    %249 = vector.multi_reduction <maximumf>, %215, %cst_49 [2] : vector<2x3x128xf32> to vector<2x3xf32>
    %250 = vector.shape_cast %249 : vector<2x3xf32> to vector<2x3x1xf32>
    %cst_50 = arith.constant dense<0xFF800000> : vector<2x1xf32>
    %251 = vector.multi_reduction <maximumf>, %250, %cst_50 [1] : vector<2x3x1xf32> to vector<2x1xf32>
    %252 = vector.shape_cast %251 : vector<2x1xf32> to vector<2x1x1xf32>
    %253 = vector.broadcast %252 : vector<2x1x1xf32> to vector<2x3x128xf32>
    %254 = arith.cmpf oge, %215, %253 : vector<2x3x128xf32>
    %c768_i32_51 = arith.constant 768 : i32
    %255 = vector.shape_cast %46 : vector<1x3x128xi32> to vector<1x3x128xi32>
    %256 = vector.broadcast %255 : vector<1x3x128xi32> to vector<2x3x128xi32>
    %257 = vector.broadcast %c768_i32_51 : i32 to vector<2x3x128xi32>
    %258 = arith.select %254, %256, %257 : vector<2x3x128xi1>, vector<2x3x128xi32>
    %cst_52 = arith.constant dense<2147483647> : vector<2x3xi32>
    %259 = vector.multi_reduction <minsi>, %258, %cst_52 [2] : vector<2x3x128xi32> to vector<2x3xi32>
    %260 = vector.shape_cast %259 : vector<2x3xi32> to vector<2x3x1xi32>
    %cst_53 = arith.constant dense<2147483647> : vector<2x1xi32>
    %261 = vector.multi_reduction <minsi>, %260, %cst_53 [1] : vector<2x3x1xi32> to vector<2x1xi32>
    %262 = vector.shape_cast %261 : vector<2x1xi32> to vector<2x1x1xi32>
    %263 = vector.shape_cast %252 : vector<2x1x1xf32> to vector<2x1xf32>
    %264 = vector.shape_cast %248 : vector<1x8xi1> to vector<1x8xi1>
    %265 = vector.broadcast %264 : vector<1x8xi1> to vector<2x8xi1>
    %266 = vector.shape_cast %263 : vector<2x1xf32> to vector<2x1xf32>
    %267 = vector.broadcast %266 : vector<2x1xf32> to vector<2x8xf32>
    %268 = arith.select %265, %267, %204 : vector<2x8xi1>, vector<2x8xf32>
    %269 = vector.shape_cast %262 : vector<2x1x1xi32> to vector<2x1xi32>
    %270 = vector.shape_cast %248 : vector<1x8xi1> to vector<1x8xi1>
    %271 = vector.broadcast %270 : vector<1x8xi1> to vector<2x8xi1>
    %272 = vector.shape_cast %269 : vector<2x1xi32> to vector<2x1xi32>
    %273 = vector.broadcast %272 : vector<2x1xi32> to vector<2x8xi32>
    %274 = arith.select %271, %273, %210 : vector<2x8xi1>, vector<2x8xi32>
    %275 = vector.broadcast %46 : vector<1x3x128xi32> to vector<2x3x128xi32>
    %276 = vector.broadcast %262 : vector<2x1x1xi32> to vector<2x3x128xi32>
    %277 = arith.cmpi eq, %275, %276 : vector<2x3x128xi32>
    %cst_54 = arith.constant 0xFF800000 : f32
    %278 = vector.broadcast %cst_54 : f32 to vector<2x3x128xf32>
    %279 = arith.select %277, %278, %215 : vector<2x3x128xi1>, vector<2x3x128xf32>
    %cst_55 = arith.constant dense<0xFF800000> : vector<2x3xf32>
    %280 = vector.multi_reduction <maximumf>, %246, %cst_55 [2] : vector<2x3x128xf32> to vector<2x3xf32>
    %281 = vector.shape_cast %280 : vector<2x3xf32> to vector<2x3x1xf32>
    %cst_56 = arith.constant dense<0xFF800000> : vector<2x1xf32>
    %282 = vector.multi_reduction <maximumf>, %281, %cst_56 [1] : vector<2x3x1xf32> to vector<2x1xf32>
    %283 = vector.shape_cast %282 : vector<2x1xf32> to vector<2x1x1xf32>
    %284 = vector.broadcast %283 : vector<2x1x1xf32> to vector<2x3x128xf32>
    %285 = arith.cmpf oge, %246, %284 : vector<2x3x128xf32>
    %c768_i32_57 = arith.constant 768 : i32
    %286 = vector.shape_cast %48 : vector<1x3x128xi32> to vector<1x3x128xi32>
    %287 = vector.broadcast %286 : vector<1x3x128xi32> to vector<2x3x128xi32>
    %288 = vector.broadcast %c768_i32_57 : i32 to vector<2x3x128xi32>
    %289 = arith.select %285, %287, %288 : vector<2x3x128xi1>, vector<2x3x128xi32>
    %cst_58 = arith.constant dense<2147483647> : vector<2x3xi32>
    %290 = vector.multi_reduction <minsi>, %289, %cst_58 [2] : vector<2x3x128xi32> to vector<2x3xi32>
    %291 = vector.shape_cast %290 : vector<2x3xi32> to vector<2x3x1xi32>
    %cst_59 = arith.constant dense<2147483647> : vector<2x1xi32>
    %292 = vector.multi_reduction <minsi>, %291, %cst_59 [1] : vector<2x3x1xi32> to vector<2x1xi32>
    %293 = vector.shape_cast %292 : vector<2x1xi32> to vector<2x1x1xi32>
    %294 = vector.shape_cast %283 : vector<2x1x1xf32> to vector<2x1xf32>
    %295 = vector.shape_cast %248 : vector<1x8xi1> to vector<1x8xi1>
    %296 = vector.broadcast %295 : vector<1x8xi1> to vector<2x8xi1>
    %297 = vector.shape_cast %294 : vector<2x1xf32> to vector<2x1xf32>
    %298 = vector.broadcast %297 : vector<2x1xf32> to vector<2x8xf32>
    %299 = arith.select %296, %298, %235 : vector<2x8xi1>, vector<2x8xf32>
    %300 = vector.shape_cast %293 : vector<2x1x1xi32> to vector<2x1xi32>
    %301 = vector.shape_cast %248 : vector<1x8xi1> to vector<1x8xi1>
    %302 = vector.broadcast %301 : vector<1x8xi1> to vector<2x8xi1>
    %303 = vector.shape_cast %300 : vector<2x1xi32> to vector<2x1xi32>
    %304 = vector.broadcast %303 : vector<2x1xi32> to vector<2x8xi32>
    %305 = arith.select %302, %304, %241 : vector<2x8xi1>, vector<2x8xi32>
    %306 = vector.broadcast %48 : vector<1x3x128xi32> to vector<2x3x128xi32>
    %307 = vector.broadcast %293 : vector<2x1x1xi32> to vector<2x3x128xi32>
    %308 = arith.cmpi eq, %306, %307 : vector<2x3x128xi32>
    %cst_60 = arith.constant 0xFF800000 : f32
    %309 = vector.broadcast %cst_60 : f32 to vector<2x3x128xf32>
    %310 = arith.select %308, %309, %246 : vector<2x3x128xi1>, vector<2x3x128xf32>
    %c4_i32 = arith.constant 4 : i32
    %311 = vector.broadcast %c4_i32 : i32 to vector<1x8xi32>
    %312 = arith.cmpi eq, %40, %311 : vector<1x8xi32>
    %cst_61 = arith.constant dense<0xFF800000> : vector<2x3xf32>
    %313 = vector.multi_reduction <maximumf>, %279, %cst_61 [2] : vector<2x3x128xf32> to vector<2x3xf32>
    %314 = vector.shape_cast %313 : vector<2x3xf32> to vector<2x3x1xf32>
    %cst_62 = arith.constant dense<0xFF800000> : vector<2x1xf32>
    %315 = vector.multi_reduction <maximumf>, %314, %cst_62 [1] : vector<2x3x1xf32> to vector<2x1xf32>
    %316 = vector.shape_cast %315 : vector<2x1xf32> to vector<2x1x1xf32>
    %317 = vector.broadcast %316 : vector<2x1x1xf32> to vector<2x3x128xf32>
    %318 = arith.cmpf oge, %279, %317 : vector<2x3x128xf32>
    %c768_i32_63 = arith.constant 768 : i32
    %319 = vector.shape_cast %46 : vector<1x3x128xi32> to vector<1x3x128xi32>
    %320 = vector.broadcast %319 : vector<1x3x128xi32> to vector<2x3x128xi32>
    %321 = vector.broadcast %c768_i32_63 : i32 to vector<2x3x128xi32>
    %322 = arith.select %318, %320, %321 : vector<2x3x128xi1>, vector<2x3x128xi32>
    %cst_64 = arith.constant dense<2147483647> : vector<2x3xi32>
    %323 = vector.multi_reduction <minsi>, %322, %cst_64 [2] : vector<2x3x128xi32> to vector<2x3xi32>
    %324 = vector.shape_cast %323 : vector<2x3xi32> to vector<2x3x1xi32>
    %cst_65 = arith.constant dense<2147483647> : vector<2x1xi32>
    %325 = vector.multi_reduction <minsi>, %324, %cst_65 [1] : vector<2x3x1xi32> to vector<2x1xi32>
    %326 = vector.shape_cast %325 : vector<2x1xi32> to vector<2x1x1xi32>
    %327 = vector.shape_cast %316 : vector<2x1x1xf32> to vector<2x1xf32>
    %328 = vector.shape_cast %312 : vector<1x8xi1> to vector<1x8xi1>
    %329 = vector.broadcast %328 : vector<1x8xi1> to vector<2x8xi1>
    %330 = vector.shape_cast %327 : vector<2x1xf32> to vector<2x1xf32>
    %331 = vector.broadcast %330 : vector<2x1xf32> to vector<2x8xf32>
    %332 = arith.select %329, %331, %268 : vector<2x8xi1>, vector<2x8xf32>
    %333 = vector.shape_cast %326 : vector<2x1x1xi32> to vector<2x1xi32>
    %334 = vector.shape_cast %312 : vector<1x8xi1> to vector<1x8xi1>
    %335 = vector.broadcast %334 : vector<1x8xi1> to vector<2x8xi1>
    %336 = vector.shape_cast %333 : vector<2x1xi32> to vector<2x1xi32>
    %337 = vector.broadcast %336 : vector<2x1xi32> to vector<2x8xi32>
    %338 = arith.select %335, %337, %274 : vector<2x8xi1>, vector<2x8xi32>
    %339 = vector.broadcast %46 : vector<1x3x128xi32> to vector<2x3x128xi32>
    %340 = vector.broadcast %326 : vector<2x1x1xi32> to vector<2x3x128xi32>
    %341 = arith.cmpi eq, %339, %340 : vector<2x3x128xi32>
    %cst_66 = arith.constant 0xFF800000 : f32
    %342 = vector.broadcast %cst_66 : f32 to vector<2x3x128xf32>
    %343 = arith.select %341, %342, %279 : vector<2x3x128xi1>, vector<2x3x128xf32>
    %cst_67 = arith.constant dense<0xFF800000> : vector<2x3xf32>
    %344 = vector.multi_reduction <maximumf>, %310, %cst_67 [2] : vector<2x3x128xf32> to vector<2x3xf32>
    %345 = vector.shape_cast %344 : vector<2x3xf32> to vector<2x3x1xf32>
    %cst_68 = arith.constant dense<0xFF800000> : vector<2x1xf32>
    %346 = vector.multi_reduction <maximumf>, %345, %cst_68 [1] : vector<2x3x1xf32> to vector<2x1xf32>
    %347 = vector.shape_cast %346 : vector<2x1xf32> to vector<2x1x1xf32>
    %348 = vector.broadcast %347 : vector<2x1x1xf32> to vector<2x3x128xf32>
    %349 = arith.cmpf oge, %310, %348 : vector<2x3x128xf32>
    %c768_i32_69 = arith.constant 768 : i32
    %350 = vector.shape_cast %48 : vector<1x3x128xi32> to vector<1x3x128xi32>
    %351 = vector.broadcast %350 : vector<1x3x128xi32> to vector<2x3x128xi32>
    %352 = vector.broadcast %c768_i32_69 : i32 to vector<2x3x128xi32>
    %353 = arith.select %349, %351, %352 : vector<2x3x128xi1>, vector<2x3x128xi32>
    %cst_70 = arith.constant dense<2147483647> : vector<2x3xi32>
    %354 = vector.multi_reduction <minsi>, %353, %cst_70 [2] : vector<2x3x128xi32> to vector<2x3xi32>
    %355 = vector.shape_cast %354 : vector<2x3xi32> to vector<2x3x1xi32>
    %cst_71 = arith.constant dense<2147483647> : vector<2x1xi32>
    %356 = vector.multi_reduction <minsi>, %355, %cst_71 [1] : vector<2x3x1xi32> to vector<2x1xi32>
    %357 = vector.shape_cast %356 : vector<2x1xi32> to vector<2x1x1xi32>
    %358 = vector.shape_cast %347 : vector<2x1x1xf32> to vector<2x1xf32>
    %359 = vector.shape_cast %312 : vector<1x8xi1> to vector<1x8xi1>
    %360 = vector.broadcast %359 : vector<1x8xi1> to vector<2x8xi1>
    %361 = vector.shape_cast %358 : vector<2x1xf32> to vector<2x1xf32>
    %362 = vector.broadcast %361 : vector<2x1xf32> to vector<2x8xf32>
    %363 = arith.select %360, %362, %299 : vector<2x8xi1>, vector<2x8xf32>
    %364 = vector.shape_cast %357 : vector<2x1x1xi32> to vector<2x1xi32>
    %365 = vector.shape_cast %312 : vector<1x8xi1> to vector<1x8xi1>
    %366 = vector.broadcast %365 : vector<1x8xi1> to vector<2x8xi1>
    %367 = vector.shape_cast %364 : vector<2x1xi32> to vector<2x1xi32>
    %368 = vector.broadcast %367 : vector<2x1xi32> to vector<2x8xi32>
    %369 = arith.select %366, %368, %305 : vector<2x8xi1>, vector<2x8xi32>
    %370 = vector.broadcast %48 : vector<1x3x128xi32> to vector<2x3x128xi32>
    %371 = vector.broadcast %357 : vector<2x1x1xi32> to vector<2x3x128xi32>
    %372 = arith.cmpi eq, %370, %371 : vector<2x3x128xi32>
    %cst_72 = arith.constant 0xFF800000 : f32
    %373 = vector.broadcast %cst_72 : f32 to vector<2x3x128xf32>
    %374 = arith.select %372, %373, %310 : vector<2x3x128xi1>, vector<2x3x128xf32>
    %c5_i32 = arith.constant 5 : i32
    %375 = vector.broadcast %c5_i32 : i32 to vector<1x8xi32>
    %376 = arith.cmpi eq, %40, %375 : vector<1x8xi32>
    %cst_73 = arith.constant dense<0xFF800000> : vector<2x3xf32>
    %377 = vector.multi_reduction <maximumf>, %343, %cst_73 [2] : vector<2x3x128xf32> to vector<2x3xf32>
    %378 = vector.shape_cast %377 : vector<2x3xf32> to vector<2x3x1xf32>
    %cst_74 = arith.constant dense<0xFF800000> : vector<2x1xf32>
    %379 = vector.multi_reduction <maximumf>, %378, %cst_74 [1] : vector<2x3x1xf32> to vector<2x1xf32>
    %380 = vector.shape_cast %379 : vector<2x1xf32> to vector<2x1x1xf32>
    %381 = vector.broadcast %380 : vector<2x1x1xf32> to vector<2x3x128xf32>
    %382 = arith.cmpf oge, %343, %381 : vector<2x3x128xf32>
    %c768_i32_75 = arith.constant 768 : i32
    %383 = vector.shape_cast %46 : vector<1x3x128xi32> to vector<1x3x128xi32>
    %384 = vector.broadcast %383 : vector<1x3x128xi32> to vector<2x3x128xi32>
    %385 = vector.broadcast %c768_i32_75 : i32 to vector<2x3x128xi32>
    %386 = arith.select %382, %384, %385 : vector<2x3x128xi1>, vector<2x3x128xi32>
    %cst_76 = arith.constant dense<2147483647> : vector<2x3xi32>
    %387 = vector.multi_reduction <minsi>, %386, %cst_76 [2] : vector<2x3x128xi32> to vector<2x3xi32>
    %388 = vector.shape_cast %387 : vector<2x3xi32> to vector<2x3x1xi32>
    %cst_77 = arith.constant dense<2147483647> : vector<2x1xi32>
    %389 = vector.multi_reduction <minsi>, %388, %cst_77 [1] : vector<2x3x1xi32> to vector<2x1xi32>
    %390 = vector.shape_cast %389 : vector<2x1xi32> to vector<2x1x1xi32>
    %391 = vector.shape_cast %380 : vector<2x1x1xf32> to vector<2x1xf32>
    %392 = vector.shape_cast %376 : vector<1x8xi1> to vector<1x8xi1>
    %393 = vector.broadcast %392 : vector<1x8xi1> to vector<2x8xi1>
    %394 = vector.shape_cast %391 : vector<2x1xf32> to vector<2x1xf32>
    %395 = vector.broadcast %394 : vector<2x1xf32> to vector<2x8xf32>
    %396 = arith.select %393, %395, %332 : vector<2x8xi1>, vector<2x8xf32>
    %397 = vector.shape_cast %390 : vector<2x1x1xi32> to vector<2x1xi32>
    %398 = vector.shape_cast %376 : vector<1x8xi1> to vector<1x8xi1>
    %399 = vector.broadcast %398 : vector<1x8xi1> to vector<2x8xi1>
    %400 = vector.shape_cast %397 : vector<2x1xi32> to vector<2x1xi32>
    %401 = vector.broadcast %400 : vector<2x1xi32> to vector<2x8xi32>
    %402 = arith.select %399, %401, %338 : vector<2x8xi1>, vector<2x8xi32>
    %403 = vector.broadcast %46 : vector<1x3x128xi32> to vector<2x3x128xi32>
    %404 = vector.broadcast %390 : vector<2x1x1xi32> to vector<2x3x128xi32>
    %405 = arith.cmpi eq, %403, %404 : vector<2x3x128xi32>
    %cst_78 = arith.constant 0xFF800000 : f32
    %406 = vector.broadcast %cst_78 : f32 to vector<2x3x128xf32>
    %407 = arith.select %405, %406, %343 : vector<2x3x128xi1>, vector<2x3x128xf32>
    %cst_79 = arith.constant dense<0xFF800000> : vector<2x3xf32>
    %408 = vector.multi_reduction <maximumf>, %374, %cst_79 [2] : vector<2x3x128xf32> to vector<2x3xf32>
    %409 = vector.shape_cast %408 : vector<2x3xf32> to vector<2x3x1xf32>
    %cst_80 = arith.constant dense<0xFF800000> : vector<2x1xf32>
    %410 = vector.multi_reduction <maximumf>, %409, %cst_80 [1] : vector<2x3x1xf32> to vector<2x1xf32>
    %411 = vector.shape_cast %410 : vector<2x1xf32> to vector<2x1x1xf32>
    %412 = vector.broadcast %411 : vector<2x1x1xf32> to vector<2x3x128xf32>
    %413 = arith.cmpf oge, %374, %412 : vector<2x3x128xf32>
    %c768_i32_81 = arith.constant 768 : i32
    %414 = vector.shape_cast %48 : vector<1x3x128xi32> to vector<1x3x128xi32>
    %415 = vector.broadcast %414 : vector<1x3x128xi32> to vector<2x3x128xi32>
    %416 = vector.broadcast %c768_i32_81 : i32 to vector<2x3x128xi32>
    %417 = arith.select %413, %415, %416 : vector<2x3x128xi1>, vector<2x3x128xi32>
    %cst_82 = arith.constant dense<2147483647> : vector<2x3xi32>
    %418 = vector.multi_reduction <minsi>, %417, %cst_82 [2] : vector<2x3x128xi32> to vector<2x3xi32>
    %419 = vector.shape_cast %418 : vector<2x3xi32> to vector<2x3x1xi32>
    %cst_83 = arith.constant dense<2147483647> : vector<2x1xi32>
    %420 = vector.multi_reduction <minsi>, %419, %cst_83 [1] : vector<2x3x1xi32> to vector<2x1xi32>
    %421 = vector.shape_cast %420 : vector<2x1xi32> to vector<2x1x1xi32>
    %422 = vector.shape_cast %411 : vector<2x1x1xf32> to vector<2x1xf32>
    %423 = vector.shape_cast %376 : vector<1x8xi1> to vector<1x8xi1>
    %424 = vector.broadcast %423 : vector<1x8xi1> to vector<2x8xi1>
    %425 = vector.shape_cast %422 : vector<2x1xf32> to vector<2x1xf32>
    %426 = vector.broadcast %425 : vector<2x1xf32> to vector<2x8xf32>
    %427 = arith.select %424, %426, %363 : vector<2x8xi1>, vector<2x8xf32>
    %428 = vector.shape_cast %421 : vector<2x1x1xi32> to vector<2x1xi32>
    %429 = vector.shape_cast %376 : vector<1x8xi1> to vector<1x8xi1>
    %430 = vector.broadcast %429 : vector<1x8xi1> to vector<2x8xi1>
    %431 = vector.shape_cast %428 : vector<2x1xi32> to vector<2x1xi32>
    %432 = vector.broadcast %431 : vector<2x1xi32> to vector<2x8xi32>
    %433 = arith.select %430, %432, %369 : vector<2x8xi1>, vector<2x8xi32>
    %434 = vector.broadcast %48 : vector<1x3x128xi32> to vector<2x3x128xi32>
    %435 = vector.broadcast %421 : vector<2x1x1xi32> to vector<2x3x128xi32>
    %436 = arith.cmpi eq, %434, %435 : vector<2x3x128xi32>
    %cst_84 = arith.constant 0xFF800000 : f32
    %437 = vector.broadcast %cst_84 : f32 to vector<2x3x128xf32>
    %438 = arith.select %436, %437, %374 : vector<2x3x128xi1>, vector<2x3x128xf32>
    %c6_i32 = arith.constant 6 : i32
    %439 = vector.broadcast %c6_i32 : i32 to vector<1x8xi32>
    %440 = arith.cmpi eq, %40, %439 : vector<1x8xi32>
    %cst_85 = arith.constant dense<0xFF800000> : vector<2x3xf32>
    %441 = vector.multi_reduction <maximumf>, %407, %cst_85 [2] : vector<2x3x128xf32> to vector<2x3xf32>
    %442 = vector.shape_cast %441 : vector<2x3xf32> to vector<2x3x1xf32>
    %cst_86 = arith.constant dense<0xFF800000> : vector<2x1xf32>
    %443 = vector.multi_reduction <maximumf>, %442, %cst_86 [1] : vector<2x3x1xf32> to vector<2x1xf32>
    %444 = vector.shape_cast %443 : vector<2x1xf32> to vector<2x1x1xf32>
    %445 = vector.broadcast %444 : vector<2x1x1xf32> to vector<2x3x128xf32>
    %446 = arith.cmpf oge, %407, %445 : vector<2x3x128xf32>
    %c768_i32_87 = arith.constant 768 : i32
    %447 = vector.shape_cast %46 : vector<1x3x128xi32> to vector<1x3x128xi32>
    %448 = vector.broadcast %447 : vector<1x3x128xi32> to vector<2x3x128xi32>
    %449 = vector.broadcast %c768_i32_87 : i32 to vector<2x3x128xi32>
    %450 = arith.select %446, %448, %449 : vector<2x3x128xi1>, vector<2x3x128xi32>
    %cst_88 = arith.constant dense<2147483647> : vector<2x3xi32>
    %451 = vector.multi_reduction <minsi>, %450, %cst_88 [2] : vector<2x3x128xi32> to vector<2x3xi32>
    %452 = vector.shape_cast %451 : vector<2x3xi32> to vector<2x3x1xi32>
    %cst_89 = arith.constant dense<2147483647> : vector<2x1xi32>
    %453 = vector.multi_reduction <minsi>, %452, %cst_89 [1] : vector<2x3x1xi32> to vector<2x1xi32>
    %454 = vector.shape_cast %453 : vector<2x1xi32> to vector<2x1x1xi32>
    %455 = vector.shape_cast %444 : vector<2x1x1xf32> to vector<2x1xf32>
    %456 = vector.shape_cast %440 : vector<1x8xi1> to vector<1x8xi1>
    %457 = vector.broadcast %456 : vector<1x8xi1> to vector<2x8xi1>
    %458 = vector.shape_cast %455 : vector<2x1xf32> to vector<2x1xf32>
    %459 = vector.broadcast %458 : vector<2x1xf32> to vector<2x8xf32>
    %460 = arith.select %457, %459, %396 : vector<2x8xi1>, vector<2x8xf32>
    %461 = vector.shape_cast %454 : vector<2x1x1xi32> to vector<2x1xi32>
    %462 = vector.shape_cast %440 : vector<1x8xi1> to vector<1x8xi1>
    %463 = vector.broadcast %462 : vector<1x8xi1> to vector<2x8xi1>
    %464 = vector.shape_cast %461 : vector<2x1xi32> to vector<2x1xi32>
    %465 = vector.broadcast %464 : vector<2x1xi32> to vector<2x8xi32>
    %466 = arith.select %463, %465, %402 : vector<2x8xi1>, vector<2x8xi32>
    %467 = vector.broadcast %46 : vector<1x3x128xi32> to vector<2x3x128xi32>
    %468 = vector.broadcast %454 : vector<2x1x1xi32> to vector<2x3x128xi32>
    %469 = arith.cmpi eq, %467, %468 : vector<2x3x128xi32>
    %cst_90 = arith.constant 0xFF800000 : f32
    %470 = vector.broadcast %cst_90 : f32 to vector<2x3x128xf32>
    %471 = arith.select %469, %470, %407 : vector<2x3x128xi1>, vector<2x3x128xf32>
    %cst_91 = arith.constant dense<0xFF800000> : vector<2x3xf32>
    %472 = vector.multi_reduction <maximumf>, %438, %cst_91 [2] : vector<2x3x128xf32> to vector<2x3xf32>
    %473 = vector.shape_cast %472 : vector<2x3xf32> to vector<2x3x1xf32>
    %cst_92 = arith.constant dense<0xFF800000> : vector<2x1xf32>
    %474 = vector.multi_reduction <maximumf>, %473, %cst_92 [1] : vector<2x3x1xf32> to vector<2x1xf32>
    %475 = vector.shape_cast %474 : vector<2x1xf32> to vector<2x1x1xf32>
    %476 = vector.broadcast %475 : vector<2x1x1xf32> to vector<2x3x128xf32>
    %477 = arith.cmpf oge, %438, %476 : vector<2x3x128xf32>
    %c768_i32_93 = arith.constant 768 : i32
    %478 = vector.shape_cast %48 : vector<1x3x128xi32> to vector<1x3x128xi32>
    %479 = vector.broadcast %478 : vector<1x3x128xi32> to vector<2x3x128xi32>
    %480 = vector.broadcast %c768_i32_93 : i32 to vector<2x3x128xi32>
    %481 = arith.select %477, %479, %480 : vector<2x3x128xi1>, vector<2x3x128xi32>
    %cst_94 = arith.constant dense<2147483647> : vector<2x3xi32>
    %482 = vector.multi_reduction <minsi>, %481, %cst_94 [2] : vector<2x3x128xi32> to vector<2x3xi32>
    %483 = vector.shape_cast %482 : vector<2x3xi32> to vector<2x3x1xi32>
    %cst_95 = arith.constant dense<2147483647> : vector<2x1xi32>
    %484 = vector.multi_reduction <minsi>, %483, %cst_95 [1] : vector<2x3x1xi32> to vector<2x1xi32>
    %485 = vector.shape_cast %484 : vector<2x1xi32> to vector<2x1x1xi32>
    %486 = vector.shape_cast %475 : vector<2x1x1xf32> to vector<2x1xf32>
    %487 = vector.shape_cast %440 : vector<1x8xi1> to vector<1x8xi1>
    %488 = vector.broadcast %487 : vector<1x8xi1> to vector<2x8xi1>
    %489 = vector.shape_cast %486 : vector<2x1xf32> to vector<2x1xf32>
    %490 = vector.broadcast %489 : vector<2x1xf32> to vector<2x8xf32>
    %491 = arith.select %488, %490, %427 : vector<2x8xi1>, vector<2x8xf32>
    %492 = vector.shape_cast %485 : vector<2x1x1xi32> to vector<2x1xi32>
    %493 = vector.shape_cast %440 : vector<1x8xi1> to vector<1x8xi1>
    %494 = vector.broadcast %493 : vector<1x8xi1> to vector<2x8xi1>
    %495 = vector.shape_cast %492 : vector<2x1xi32> to vector<2x1xi32>
    %496 = vector.broadcast %495 : vector<2x1xi32> to vector<2x8xi32>
    %497 = arith.select %494, %496, %433 : vector<2x8xi1>, vector<2x8xi32>
    %498 = vector.broadcast %48 : vector<1x3x128xi32> to vector<2x3x128xi32>
    %499 = vector.broadcast %485 : vector<2x1x1xi32> to vector<2x3x128xi32>
    %500 = arith.cmpi eq, %498, %499 : vector<2x3x128xi32>
    %cst_96 = arith.constant 0xFF800000 : f32
    %501 = vector.broadcast %cst_96 : f32 to vector<2x3x128xf32>
    %502 = arith.select %500, %501, %438 : vector<2x3x128xi1>, vector<2x3x128xf32>
    %c7_i32 = arith.constant 7 : i32
    %503 = vector.broadcast %c7_i32 : i32 to vector<1x8xi32>
    %504 = arith.cmpi eq, %40, %503 : vector<1x8xi32>
    %cst_97 = arith.constant dense<0xFF800000> : vector<2x3xf32>
    %505 = vector.multi_reduction <maximumf>, %471, %cst_97 [2] : vector<2x3x128xf32> to vector<2x3xf32>
    %506 = vector.shape_cast %505 : vector<2x3xf32> to vector<2x3x1xf32>
    %cst_98 = arith.constant dense<0xFF800000> : vector<2x1xf32>
    %507 = vector.multi_reduction <maximumf>, %506, %cst_98 [1] : vector<2x3x1xf32> to vector<2x1xf32>
    %508 = vector.shape_cast %507 : vector<2x1xf32> to vector<2x1x1xf32>
    %509 = vector.broadcast %508 : vector<2x1x1xf32> to vector<2x3x128xf32>
    %510 = arith.cmpf oge, %471, %509 : vector<2x3x128xf32>
    %c768_i32_99 = arith.constant 768 : i32
    %511 = vector.shape_cast %46 : vector<1x3x128xi32> to vector<1x3x128xi32>
    %512 = vector.broadcast %511 : vector<1x3x128xi32> to vector<2x3x128xi32>
    %513 = vector.broadcast %c768_i32_99 : i32 to vector<2x3x128xi32>
    %514 = arith.select %510, %512, %513 : vector<2x3x128xi1>, vector<2x3x128xi32>
    %cst_100 = arith.constant dense<2147483647> : vector<2x3xi32>
    %515 = vector.multi_reduction <minsi>, %514, %cst_100 [2] : vector<2x3x128xi32> to vector<2x3xi32>
    %516 = vector.shape_cast %515 : vector<2x3xi32> to vector<2x3x1xi32>
    %cst_101 = arith.constant dense<2147483647> : vector<2x1xi32>
    %517 = vector.multi_reduction <minsi>, %516, %cst_101 [1] : vector<2x3x1xi32> to vector<2x1xi32>
    %518 = vector.shape_cast %517 : vector<2x1xi32> to vector<2x1x1xi32>
    %519 = vector.shape_cast %508 : vector<2x1x1xf32> to vector<2x1xf32>
    %520 = vector.shape_cast %504 : vector<1x8xi1> to vector<1x8xi1>
    %521 = vector.broadcast %520 : vector<1x8xi1> to vector<2x8xi1>
    %522 = vector.shape_cast %519 : vector<2x1xf32> to vector<2x1xf32>
    %523 = vector.broadcast %522 : vector<2x1xf32> to vector<2x8xf32>
    %524 = arith.select %521, %523, %460 : vector<2x8xi1>, vector<2x8xf32>
    %525 = vector.shape_cast %518 : vector<2x1x1xi32> to vector<2x1xi32>
    %526 = vector.shape_cast %504 : vector<1x8xi1> to vector<1x8xi1>
    %527 = vector.broadcast %526 : vector<1x8xi1> to vector<2x8xi1>
    %528 = vector.shape_cast %525 : vector<2x1xi32> to vector<2x1xi32>
    %529 = vector.broadcast %528 : vector<2x1xi32> to vector<2x8xi32>
    %530 = arith.select %527, %529, %466 : vector<2x8xi1>, vector<2x8xi32>
    %cst_102 = arith.constant dense<0xFF800000> : vector<2x3xf32>
    %531 = vector.multi_reduction <maximumf>, %502, %cst_102 [2] : vector<2x3x128xf32> to vector<2x3xf32>
    %532 = vector.shape_cast %531 : vector<2x3xf32> to vector<2x3x1xf32>
    %cst_103 = arith.constant dense<0xFF800000> : vector<2x1xf32>
    %533 = vector.multi_reduction <maximumf>, %532, %cst_103 [1] : vector<2x3x1xf32> to vector<2x1xf32>
    %534 = vector.shape_cast %533 : vector<2x1xf32> to vector<2x1x1xf32>
    %535 = vector.broadcast %534 : vector<2x1x1xf32> to vector<2x3x128xf32>
    %536 = arith.cmpf oge, %502, %535 : vector<2x3x128xf32>
    %c768_i32_104 = arith.constant 768 : i32
    %537 = vector.shape_cast %48 : vector<1x3x128xi32> to vector<1x3x128xi32>
    %538 = vector.broadcast %537 : vector<1x3x128xi32> to vector<2x3x128xi32>
    %539 = vector.broadcast %c768_i32_104 : i32 to vector<2x3x128xi32>
    %540 = arith.select %536, %538, %539 : vector<2x3x128xi1>, vector<2x3x128xi32>
    %cst_105 = arith.constant dense<2147483647> : vector<2x3xi32>
    %541 = vector.multi_reduction <minsi>, %540, %cst_105 [2] : vector<2x3x128xi32> to vector<2x3xi32>
    %542 = vector.shape_cast %541 : vector<2x3xi32> to vector<2x3x1xi32>
    %cst_106 = arith.constant dense<2147483647> : vector<2x1xi32>
    %543 = vector.multi_reduction <minsi>, %542, %cst_106 [1] : vector<2x3x1xi32> to vector<2x1xi32>
    %544 = vector.shape_cast %543 : vector<2x1xi32> to vector<2x1x1xi32>
    %545 = vector.shape_cast %534 : vector<2x1x1xf32> to vector<2x1xf32>
    %546 = vector.shape_cast %504 : vector<1x8xi1> to vector<1x8xi1>
    %547 = vector.broadcast %546 : vector<1x8xi1> to vector<2x8xi1>
    %548 = vector.shape_cast %545 : vector<2x1xf32> to vector<2x1xf32>
    %549 = vector.broadcast %548 : vector<2x1xf32> to vector<2x8xf32>
    %550 = arith.select %547, %549, %491 : vector<2x8xi1>, vector<2x8xf32>
    %551 = vector.shape_cast %544 : vector<2x1x1xi32> to vector<2x1xi32>
    %552 = vector.shape_cast %504 : vector<1x8xi1> to vector<1x8xi1>
    %553 = vector.broadcast %552 : vector<1x8xi1> to vector<2x8xi1>
    %554 = vector.shape_cast %551 : vector<2x1xi32> to vector<2x1xi32>
    %555 = vector.broadcast %554 : vector<2x1xi32> to vector<2x8xi32>
    %556 = arith.select %553, %555, %497 : vector<2x8xi1>, vector<2x8xi32>
    %557 = tpu.concatenate %524, %550 in 1 : vector<2x8xf32>, vector<2x8xf32> -> vector<2x16xf32>
    %558 = tpu.concatenate %530, %556 in 1 : vector<2x8xi32>, vector<2x8xi32> -> vector<2x16xi32>
    %cst_107 = arith.constant 0.000000e+00 : f32
    %559 = vector.broadcast %cst_107 : f32 to vector<2x8xf32>
    %c0_i32_108 = arith.constant 0 : i32
    %560 = vector.broadcast %c0_i32_108 : i32 to vector<2x8xi32>
    %cst_109 = arith.constant dense<0xFF800000> : vector<2xf32>
    %561 = vector.multi_reduction <maximumf>, %557, %cst_109 [1] : vector<2x16xf32> to vector<2xf32>
    %562 = vector.shape_cast %561 : vector<2xf32> to vector<2x1xf32>
    %563 = vector.broadcast %562 : vector<2x1xf32> to vector<2x16xf32>
    %564 = arith.cmpf oge, %557, %563 : vector<2x16xf32>
    %c768_i32_110 = arith.constant 768 : i32
    %565 = vector.broadcast %c768_i32_110 : i32 to vector<2x16xi32>
    %566 = arith.select %564, %558, %565 : vector<2x16xi1>, vector<2x16xi32>
    %cst_111 = arith.constant dense<2147483647> : vector<2xi32>
    %567 = vector.multi_reduction <minsi>, %566, %cst_111 [1] : vector<2x16xi32> to vector<2xi32>
    %568 = vector.shape_cast %567 : vector<2xi32> to vector<2x1xi32>
    %c0_i32_112 = arith.constant 0 : i32
    %569 = vector.broadcast %c0_i32_112 : i32 to vector<1x8xi32>
    %570 = arith.cmpi eq, %40, %569 : vector<1x8xi32>
    %571 = vector.shape_cast %570 : vector<1x8xi1> to vector<1x8xi1>
    %572 = vector.broadcast %571 : vector<1x8xi1> to vector<2x8xi1>
    %573 = vector.shape_cast %562 : vector<2x1xf32> to vector<2x1xf32>
    %574 = vector.broadcast %573 : vector<2x1xf32> to vector<2x8xf32>
    %575 = arith.select %572, %574, %559 : vector<2x8xi1>, vector<2x8xf32>
    %576 = vector.shape_cast %570 : vector<1x8xi1> to vector<1x8xi1>
    %577 = vector.broadcast %576 : vector<1x8xi1> to vector<2x8xi1>
    %578 = vector.shape_cast %568 : vector<2x1xi32> to vector<2x1xi32>
    %579 = vector.broadcast %578 : vector<2x1xi32> to vector<2x8xi32>
    %580 = arith.select %577, %579, %560 : vector<2x8xi1>, vector<2x8xi32>
    %581 = vector.broadcast %568 : vector<2x1xi32> to vector<2x16xi32>
    %582 = arith.cmpi eq, %558, %581 : vector<2x16xi32>
    %cst_113 = arith.constant 0xFF800000 : f32
    %583 = vector.broadcast %cst_113 : f32 to vector<2x16xf32>
    %584 = arith.select %582, %583, %557 : vector<2x16xi1>, vector<2x16xf32>
    %cst_114 = arith.constant dense<0xFF800000> : vector<2xf32>
    %585 = vector.multi_reduction <maximumf>, %584, %cst_114 [1] : vector<2x16xf32> to vector<2xf32>
    %586 = vector.shape_cast %585 : vector<2xf32> to vector<2x1xf32>
    %587 = vector.broadcast %586 : vector<2x1xf32> to vector<2x16xf32>
    %588 = arith.cmpf oge, %584, %587 : vector<2x16xf32>
    %c768_i32_115 = arith.constant 768 : i32
    %589 = vector.broadcast %c768_i32_115 : i32 to vector<2x16xi32>
    %590 = arith.select %588, %558, %589 : vector<2x16xi1>, vector<2x16xi32>
    %cst_116 = arith.constant dense<2147483647> : vector<2xi32>
    %591 = vector.multi_reduction <minsi>, %590, %cst_116 [1] : vector<2x16xi32> to vector<2xi32>
    %592 = vector.shape_cast %591 : vector<2xi32> to vector<2x1xi32>
    %c1_i32_117 = arith.constant 1 : i32
    %593 = vector.broadcast %c1_i32_117 : i32 to vector<1x8xi32>
    %594 = arith.cmpi eq, %40, %593 : vector<1x8xi32>
    %595 = vector.shape_cast %594 : vector<1x8xi1> to vector<1x8xi1>
    %596 = vector.broadcast %595 : vector<1x8xi1> to vector<2x8xi1>
    %597 = vector.shape_cast %586 : vector<2x1xf32> to vector<2x1xf32>
    %598 = vector.broadcast %597 : vector<2x1xf32> to vector<2x8xf32>
    %599 = arith.select %596, %598, %575 : vector<2x8xi1>, vector<2x8xf32>
    %600 = vector.shape_cast %594 : vector<1x8xi1> to vector<1x8xi1>
    %601 = vector.broadcast %600 : vector<1x8xi1> to vector<2x8xi1>
    %602 = vector.shape_cast %592 : vector<2x1xi32> to vector<2x1xi32>
    %603 = vector.broadcast %602 : vector<2x1xi32> to vector<2x8xi32>
    %604 = arith.select %601, %603, %580 : vector<2x8xi1>, vector<2x8xi32>
    %605 = vector.broadcast %592 : vector<2x1xi32> to vector<2x16xi32>
    %606 = arith.cmpi eq, %558, %605 : vector<2x16xi32>
    %cst_118 = arith.constant 0xFF800000 : f32
    %607 = vector.broadcast %cst_118 : f32 to vector<2x16xf32>
    %608 = arith.select %606, %607, %584 : vector<2x16xi1>, vector<2x16xf32>
    %cst_119 = arith.constant dense<0xFF800000> : vector<2xf32>
    %609 = vector.multi_reduction <maximumf>, %608, %cst_119 [1] : vector<2x16xf32> to vector<2xf32>
    %610 = vector.shape_cast %609 : vector<2xf32> to vector<2x1xf32>
    %611 = vector.broadcast %610 : vector<2x1xf32> to vector<2x16xf32>
    %612 = arith.cmpf oge, %608, %611 : vector<2x16xf32>
    %c768_i32_120 = arith.constant 768 : i32
    %613 = vector.broadcast %c768_i32_120 : i32 to vector<2x16xi32>
    %614 = arith.select %612, %558, %613 : vector<2x16xi1>, vector<2x16xi32>
    %cst_121 = arith.constant dense<2147483647> : vector<2xi32>
    %615 = vector.multi_reduction <minsi>, %614, %cst_121 [1] : vector<2x16xi32> to vector<2xi32>
    %616 = vector.shape_cast %615 : vector<2xi32> to vector<2x1xi32>
    %c2_i32_122 = arith.constant 2 : i32
    %617 = vector.broadcast %c2_i32_122 : i32 to vector<1x8xi32>
    %618 = arith.cmpi eq, %40, %617 : vector<1x8xi32>
    %619 = vector.shape_cast %618 : vector<1x8xi1> to vector<1x8xi1>
    %620 = vector.broadcast %619 : vector<1x8xi1> to vector<2x8xi1>
    %621 = vector.shape_cast %610 : vector<2x1xf32> to vector<2x1xf32>
    %622 = vector.broadcast %621 : vector<2x1xf32> to vector<2x8xf32>
    %623 = arith.select %620, %622, %599 : vector<2x8xi1>, vector<2x8xf32>
    %624 = vector.shape_cast %618 : vector<1x8xi1> to vector<1x8xi1>
    %625 = vector.broadcast %624 : vector<1x8xi1> to vector<2x8xi1>
    %626 = vector.shape_cast %616 : vector<2x1xi32> to vector<2x1xi32>
    %627 = vector.broadcast %626 : vector<2x1xi32> to vector<2x8xi32>
    %628 = arith.select %625, %627, %604 : vector<2x8xi1>, vector<2x8xi32>
    %629 = vector.broadcast %616 : vector<2x1xi32> to vector<2x16xi32>
    %630 = arith.cmpi eq, %558, %629 : vector<2x16xi32>
    %cst_123 = arith.constant 0xFF800000 : f32
    %631 = vector.broadcast %cst_123 : f32 to vector<2x16xf32>
    %632 = arith.select %630, %631, %608 : vector<2x16xi1>, vector<2x16xf32>
    %cst_124 = arith.constant dense<0xFF800000> : vector<2xf32>
    %633 = vector.multi_reduction <maximumf>, %632, %cst_124 [1] : vector<2x16xf32> to vector<2xf32>
    %634 = vector.shape_cast %633 : vector<2xf32> to vector<2x1xf32>
    %635 = vector.broadcast %634 : vector<2x1xf32> to vector<2x16xf32>
    %636 = arith.cmpf oge, %632, %635 : vector<2x16xf32>
    %c768_i32_125 = arith.constant 768 : i32
    %637 = vector.broadcast %c768_i32_125 : i32 to vector<2x16xi32>
    %638 = arith.select %636, %558, %637 : vector<2x16xi1>, vector<2x16xi32>
    %cst_126 = arith.constant dense<2147483647> : vector<2xi32>
    %639 = vector.multi_reduction <minsi>, %638, %cst_126 [1] : vector<2x16xi32> to vector<2xi32>
    %640 = vector.shape_cast %639 : vector<2xi32> to vector<2x1xi32>
    %c3_i32_127 = arith.constant 3 : i32
    %641 = vector.broadcast %c3_i32_127 : i32 to vector<1x8xi32>
    %642 = arith.cmpi eq, %40, %641 : vector<1x8xi32>
    %643 = vector.shape_cast %642 : vector<1x8xi1> to vector<1x8xi1>
    %644 = vector.broadcast %643 : vector<1x8xi1> to vector<2x8xi1>
    %645 = vector.shape_cast %634 : vector<2x1xf32> to vector<2x1xf32>
    %646 = vector.broadcast %645 : vector<2x1xf32> to vector<2x8xf32>
    %647 = arith.select %644, %646, %623 : vector<2x8xi1>, vector<2x8xf32>
    %648 = vector.shape_cast %642 : vector<1x8xi1> to vector<1x8xi1>
    %649 = vector.broadcast %648 : vector<1x8xi1> to vector<2x8xi1>
    %650 = vector.shape_cast %640 : vector<2x1xi32> to vector<2x1xi32>
    %651 = vector.broadcast %650 : vector<2x1xi32> to vector<2x8xi32>
    %652 = arith.select %649, %651, %628 : vector<2x8xi1>, vector<2x8xi32>
    %653 = vector.broadcast %640 : vector<2x1xi32> to vector<2x16xi32>
    %654 = arith.cmpi eq, %558, %653 : vector<2x16xi32>
    %cst_128 = arith.constant 0xFF800000 : f32
    %655 = vector.broadcast %cst_128 : f32 to vector<2x16xf32>
    %656 = arith.select %654, %655, %632 : vector<2x16xi1>, vector<2x16xf32>
    %cst_129 = arith.constant dense<0xFF800000> : vector<2xf32>
    %657 = vector.multi_reduction <maximumf>, %656, %cst_129 [1] : vector<2x16xf32> to vector<2xf32>
    %658 = vector.shape_cast %657 : vector<2xf32> to vector<2x1xf32>
    %659 = vector.broadcast %658 : vector<2x1xf32> to vector<2x16xf32>
    %660 = arith.cmpf oge, %656, %659 : vector<2x16xf32>
    %c768_i32_130 = arith.constant 768 : i32
    %661 = vector.broadcast %c768_i32_130 : i32 to vector<2x16xi32>
    %662 = arith.select %660, %558, %661 : vector<2x16xi1>, vector<2x16xi32>
    %cst_131 = arith.constant dense<2147483647> : vector<2xi32>
    %663 = vector.multi_reduction <minsi>, %662, %cst_131 [1] : vector<2x16xi32> to vector<2xi32>
    %664 = vector.shape_cast %663 : vector<2xi32> to vector<2x1xi32>
    %c4_i32_132 = arith.constant 4 : i32
    %665 = vector.broadcast %c4_i32_132 : i32 to vector<1x8xi32>
    %666 = arith.cmpi eq, %40, %665 : vector<1x8xi32>
    %667 = vector.shape_cast %666 : vector<1x8xi1> to vector<1x8xi1>
    %668 = vector.broadcast %667 : vector<1x8xi1> to vector<2x8xi1>
    %669 = vector.shape_cast %658 : vector<2x1xf32> to vector<2x1xf32>
    %670 = vector.broadcast %669 : vector<2x1xf32> to vector<2x8xf32>
    %671 = arith.select %668, %670, %647 : vector<2x8xi1>, vector<2x8xf32>
    %672 = vector.shape_cast %666 : vector<1x8xi1> to vector<1x8xi1>
    %673 = vector.broadcast %672 : vector<1x8xi1> to vector<2x8xi1>
    %674 = vector.shape_cast %664 : vector<2x1xi32> to vector<2x1xi32>
    %675 = vector.broadcast %674 : vector<2x1xi32> to vector<2x8xi32>
    %676 = arith.select %673, %675, %652 : vector<2x8xi1>, vector<2x8xi32>
    %677 = vector.broadcast %664 : vector<2x1xi32> to vector<2x16xi32>
    %678 = arith.cmpi eq, %558, %677 : vector<2x16xi32>
    %cst_133 = arith.constant 0xFF800000 : f32
    %679 = vector.broadcast %cst_133 : f32 to vector<2x16xf32>
    %680 = arith.select %678, %679, %656 : vector<2x16xi1>, vector<2x16xf32>
    %cst_134 = arith.constant dense<0xFF800000> : vector<2xf32>
    %681 = vector.multi_reduction <maximumf>, %680, %cst_134 [1] : vector<2x16xf32> to vector<2xf32>
    %682 = vector.shape_cast %681 : vector<2xf32> to vector<2x1xf32>
    %683 = vector.broadcast %682 : vector<2x1xf32> to vector<2x16xf32>
    %684 = arith.cmpf oge, %680, %683 : vector<2x16xf32>
    %c768_i32_135 = arith.constant 768 : i32
    %685 = vector.broadcast %c768_i32_135 : i32 to vector<2x16xi32>
    %686 = arith.select %684, %558, %685 : vector<2x16xi1>, vector<2x16xi32>
    %cst_136 = arith.constant dense<2147483647> : vector<2xi32>
    %687 = vector.multi_reduction <minsi>, %686, %cst_136 [1] : vector<2x16xi32> to vector<2xi32>
    %688 = vector.shape_cast %687 : vector<2xi32> to vector<2x1xi32>
    %c5_i32_137 = arith.constant 5 : i32
    %689 = vector.broadcast %c5_i32_137 : i32 to vector<1x8xi32>
    %690 = arith.cmpi eq, %40, %689 : vector<1x8xi32>
    %691 = vector.shape_cast %690 : vector<1x8xi1> to vector<1x8xi1>
    %692 = vector.broadcast %691 : vector<1x8xi1> to vector<2x8xi1>
    %693 = vector.shape_cast %682 : vector<2x1xf32> to vector<2x1xf32>
    %694 = vector.broadcast %693 : vector<2x1xf32> to vector<2x8xf32>
    %695 = arith.select %692, %694, %671 : vector<2x8xi1>, vector<2x8xf32>
    %696 = vector.shape_cast %690 : vector<1x8xi1> to vector<1x8xi1>
    %697 = vector.broadcast %696 : vector<1x8xi1> to vector<2x8xi1>
    %698 = vector.shape_cast %688 : vector<2x1xi32> to vector<2x1xi32>
    %699 = vector.broadcast %698 : vector<2x1xi32> to vector<2x8xi32>
    %700 = arith.select %697, %699, %676 : vector<2x8xi1>, vector<2x8xi32>
    %701 = vector.broadcast %688 : vector<2x1xi32> to vector<2x16xi32>
    %702 = arith.cmpi eq, %558, %701 : vector<2x16xi32>
    %cst_138 = arith.constant 0xFF800000 : f32
    %703 = vector.broadcast %cst_138 : f32 to vector<2x16xf32>
    %704 = arith.select %702, %703, %680 : vector<2x16xi1>, vector<2x16xf32>
    %cst_139 = arith.constant dense<0xFF800000> : vector<2xf32>
    %705 = vector.multi_reduction <maximumf>, %704, %cst_139 [1] : vector<2x16xf32> to vector<2xf32>
    %706 = vector.shape_cast %705 : vector<2xf32> to vector<2x1xf32>
    %707 = vector.broadcast %706 : vector<2x1xf32> to vector<2x16xf32>
    %708 = arith.cmpf oge, %704, %707 : vector<2x16xf32>
    %c768_i32_140 = arith.constant 768 : i32
    %709 = vector.broadcast %c768_i32_140 : i32 to vector<2x16xi32>
    %710 = arith.select %708, %558, %709 : vector<2x16xi1>, vector<2x16xi32>
    %cst_141 = arith.constant dense<2147483647> : vector<2xi32>
    %711 = vector.multi_reduction <minsi>, %710, %cst_141 [1] : vector<2x16xi32> to vector<2xi32>
    %712 = vector.shape_cast %711 : vector<2xi32> to vector<2x1xi32>
    %c6_i32_142 = arith.constant 6 : i32
    %713 = vector.broadcast %c6_i32_142 : i32 to vector<1x8xi32>
    %714 = arith.cmpi eq, %40, %713 : vector<1x8xi32>
    %715 = vector.shape_cast %714 : vector<1x8xi1> to vector<1x8xi1>
    %716 = vector.broadcast %715 : vector<1x8xi1> to vector<2x8xi1>
    %717 = vector.shape_cast %706 : vector<2x1xf32> to vector<2x1xf32>
    %718 = vector.broadcast %717 : vector<2x1xf32> to vector<2x8xf32>
    %719 = arith.select %716, %718, %695 : vector<2x8xi1>, vector<2x8xf32>
    %720 = vector.shape_cast %714 : vector<1x8xi1> to vector<1x8xi1>
    %721 = vector.broadcast %720 : vector<1x8xi1> to vector<2x8xi1>
    %722 = vector.shape_cast %712 : vector<2x1xi32> to vector<2x1xi32>
    %723 = vector.broadcast %722 : vector<2x1xi32> to vector<2x8xi32>
    %724 = arith.select %721, %723, %700 : vector<2x8xi1>, vector<2x8xi32>
    %725 = vector.broadcast %712 : vector<2x1xi32> to vector<2x16xi32>
    %726 = arith.cmpi eq, %558, %725 : vector<2x16xi32>
    %cst_143 = arith.constant 0xFF800000 : f32
    %727 = vector.broadcast %cst_143 : f32 to vector<2x16xf32>
    %728 = arith.select %726, %727, %704 : vector<2x16xi1>, vector<2x16xf32>
    %cst_144 = arith.constant dense<0xFF800000> : vector<2xf32>
    %729 = vector.multi_reduction <maximumf>, %728, %cst_144 [1] : vector<2x16xf32> to vector<2xf32>
    %730 = vector.shape_cast %729 : vector<2xf32> to vector<2x1xf32>
    %731 = vector.broadcast %730 : vector<2x1xf32> to vector<2x16xf32>
    %732 = arith.cmpf oge, %728, %731 : vector<2x16xf32>
    %c768_i32_145 = arith.constant 768 : i32
    %733 = vector.broadcast %c768_i32_145 : i32 to vector<2x16xi32>
    %734 = arith.select %732, %558, %733 : vector<2x16xi1>, vector<2x16xi32>
    %cst_146 = arith.constant dense<2147483647> : vector<2xi32>
    %735 = vector.multi_reduction <minsi>, %734, %cst_146 [1] : vector<2x16xi32> to vector<2xi32>
    %736 = vector.shape_cast %735 : vector<2xi32> to vector<2x1xi32>
    %c7_i32_147 = arith.constant 7 : i32
    %737 = vector.broadcast %c7_i32_147 : i32 to vector<1x8xi32>
    %738 = arith.cmpi eq, %40, %737 : vector<1x8xi32>
    %739 = vector.shape_cast %738 : vector<1x8xi1> to vector<1x8xi1>
    %740 = vector.broadcast %739 : vector<1x8xi1> to vector<2x8xi1>
    %741 = vector.shape_cast %730 : vector<2x1xf32> to vector<2x1xf32>
    %742 = vector.broadcast %741 : vector<2x1xf32> to vector<2x8xf32>
    %743 = arith.select %740, %742, %719 : vector<2x8xi1>, vector<2x8xf32>
    %744 = vector.shape_cast %738 : vector<1x8xi1> to vector<1x8xi1>
    %745 = vector.broadcast %744 : vector<1x8xi1> to vector<2x8xi1>
    %746 = vector.shape_cast %736 : vector<2x1xi32> to vector<2x1xi32>
    %747 = vector.broadcast %746 : vector<2x1xi32> to vector<2x8xi32>
    %748 = arith.select %745, %747, %724 : vector<2x8xi1>, vector<2x8xi32>
    %c8_i32 = arith.constant 8 : i32
    %749 = vector.broadcast %c8_i32 : i32 to vector<2x8xi32>
    %750 = arith.shrsi %748, %749 : vector<2x8xi32>
    %c255_i32_148 = arith.constant 255 : i32
    %751 = vector.broadcast %c255_i32_148 : i32 to vector<2x8xi32>
    %752 = arith.andi %748, %751 : vector<2x8xi32>
    %c4_i32_149 = arith.constant 4 : i32
    %753 = vector.broadcast %c4_i32_149 : i32 to vector<2x8xi32>
    %754 = arith.shrsi %752, %753 : vector<2x8xi32>
    %c15_i32_150 = arith.constant 15 : i32
    %755 = vector.broadcast %c15_i32_150 : i32 to vector<2x8xi32>
    %756 = arith.andi %752, %755 : vector<2x8xi32>
    %757 = vector.shape_cast %752 : vector<2x8xi32> to vector<2x8x1xi32>
    %758 = vector.broadcast %757 : vector<2x8x1xi32> to vector<2x8x256xi32>
    %759 = vector.broadcast %1 : vector<1x1x256xi32> to vector<2x8x256xi32>
    %760 = arith.cmpi eq, %758, %759 : vector<2x8x256xi32>
    %761 = arith.extui %760 : vector<2x8x256xi1> to vector<2x8x256xi32>
    %762 = arith.sitofp %761 : vector<2x8x256xi32> to vector<2x8x256xf32>
    %c0_151 = arith.constant 0 : index
    %c0_152 = arith.constant 0 : index
    %c0_153 = arith.constant 0 : index
    %763 = vector.load %arg2[%c0_151, %c0_152, %c0_153] : memref<2x8x256xf32, #tpu.memory_space<vmem>>, vector<2x8x256xf32>
    "tpu.trace_start"() <{level = 10 : i32, message = "bkh,bch->bkc"}> : () -> ()
    %cst_154 = arith.constant dense<0.000000e+00> : vector<2x8x8xf32>
    %764 = tpu.matmul %762, %763, %cst_154 {dimension_numbers = #tpu.dot_dimension_numbers<[2], [2], [1], [1], [0, 0, 0, 1, 1, 1], [0], [0]>} : vector<2x8x256xf32>, vector<2x8x256xf32>, vector<2x8x8xf32> -> vector<2x8x8xf32>
    "tpu.trace_stop"() : () -> ()
    %765 = vector.shape_cast %743 : vector<2x8xf32> to vector<2x8x1xf32>
    %766 = arith.sitofp %750 : vector<2x8xi32> to vector<2x8xf32>
    %767 = vector.shape_cast %766 : vector<2x8xf32> to vector<2x8x1xf32>
    %768 = arith.sitofp %756 : vector<2x8xi32> to vector<2x8xf32>
    %769 = vector.shape_cast %768 : vector<2x8xf32> to vector<2x8x1xf32>
    %770 = arith.sitofp %754 : vector<2x8xi32> to vector<2x8xf32>
    %771 = vector.shape_cast %770 : vector<2x8xf32> to vector<2x8x1xf32>
    %772 = tpu.concatenate %764, %765, %767, %769, %771 in 2 : vector<2x8x8xf32>, vector<2x8x1xf32>, vector<2x8x1xf32>, vector<2x8x1xf32>, vector<2x8x1xf32> -> vector<2x8x12xf32>
    %c0_155 = arith.constant 0 : index
    %c0_156 = arith.constant 0 : index
    %c0_157 = arith.constant 0 : index
    %773 = vector.load %arg3[%c0_155, %c0_156, %c0_157] : memref<2x8x12xf32, #tpu.memory_space<vmem>>, vector<2x8x12xf32>
    tpu.vector_store %arg3[%c0_155, %c0_156, %c0_157], %772 {strides = array<i32>} : memref<2x8x12xf32, #tpu.memory_space<vmem>>, vector<2x8x12xf32>,
    return
  }
  func.func @transform_0(%arg0: i32) -> (i32, i32, i32) {
    %c0_i32 = arith.constant 0 : i32
    %c0_i32_0 = arith.constant 0 : i32
    %c0_i32_1 = arith.constant 0 : i32
    %c0_i32_2 = arith.constant 0 : i32
    return %c0_i32, %c0_i32_0, %c0_i32_1 : i32, i32, i32
  }
  func.func @transform_1(%arg0: i32) -> (i32, i32, i32) {
    %c0_i32 = arith.constant 0 : i32
    %c0_i32_0 = arith.constant 0 : i32
    %c0_i32_1 = arith.constant 0 : i32
    %c0_i32_2 = arith.constant 0 : i32
    return %c0_i32, %c0_i32_0, %c0_i32_1 : i32, i32, i32
  }
  func.func @transform_2(%arg0: i32) -> (i32, i32, i32) {
    %c0_i32 = arith.constant 0 : i32
    %c0_i32_0 = arith.constant 0 : i32
    %c0_i32_1 = arith.constant 0 : i32
    %c0_i32_2 = arith.constant 0 : i32
    return %c0_i32, %c0_i32_0, %c0_i32_1 : i32, i32, i32
  }
}

</mosaic_0001>

<llo_original>
// kernel: squeeze.39
$region0: #{squeeze.39}
  %s0 = inlined_call_operand.vmem [shape: f32[2,8], index: 0, kind: input, shape index: {}]
  %s1 = inlined_call_operand.vmem [shape: f32[16,1], index: 1, kind: output, shape index: {}]
  $region1: #{squeeze.39} parent=0
    #allocation0 [shape = 'u8[4096]{0}', space=vmem, size = 0x1000, scoped, tag = 'scoped mem for output reshape']
    #allocation1 [shape = 'u8[4096]{0}', space=vmem, size = 0x1000, scoped, tag = 'scoped mem for input reshape']
    %s3 = ssub.s32 4, 1
    %v4 = vld [vmem:[%s0] sm:%s3]
    %5 = vst [vmem:[#allocation1] sm:%s3] %v4
    %v6 = vld [vmem:[#allocation1] sm:$0x1]
    %vm7 = vcmask 64512
    %8 = vst.msk [vmem:[#allocation0] sm:$0x1] %vm7, %v6
    %s9 = scalar_lea.vmem [#allocation1], 1
    %v10 = vld [vmem:[%s9] sm:$0x1]
    %11 = vrot.lane.b32.xlu0 %v10, 8
    %v12 = vpop.permute.xlu0 %11
    %vm13 = vcmask 130112
    %14 = vst.msk [vmem:[#allocation0] sm:$0x1] %vm13, %v12
    %s16 = ssub.s32 2, 1
    %v17 = vld [vmem:[#allocation0] sm:%s16]
    %s19 = ssub.s32 2, 1
    %20 = vst [vmem:[%s1] sm:%s19] %v17

// kernel: cos.0
$region0: #{cos.0}
  #allocation0 [shape = 's32[1]{0}', space=sflag, size = 0x4, scoped, tag = 'scoped memory for cos.0']
  %s0 = inlined_call_operand.vmem [shape: f32[16,1], index: 0, kind: input, shape index: {}]
  %s1 = inlined_call_operand.vmem [shape: bf16[16,1], index: 1, kind: output, shape index: {}]
  %v2 = vld [vmem:[%s0] sm:$0xff]
  %v3 = vand.u32 2147483647, %v2
  %vm4 = vcmp.le.f32.partialorder %v3, 0.7853982
  %vm5 = vcmp.lt.s32.totalorder %v2, 0
  %v6 = vand.u32 %v2, 2139095040
  %v7 = vshrl.u32 %v6, 23
  %v8 = vsub.s32 %v7, 127
  %v9 = vand.u32 2147483647, %v2
  %v10 = vand.u32 %v9, 8388607
  %v11 = vor.u32 %v10, 8388608
  %v12 = vsub.s32 0, %v11
  %v13 = vadd.s32 %v8, 1
  %vm14 = vcmp.gt.s32.totalorder %v13, 0
  %v15 = vsel %vm14, %v13, 0
  %v16 = vshrl.u32 %v15, 5
  %v17 = vand.u32 %v15, 31
  %v18 = vsub.s32 32, %v17
  %v19 = vshrl.u32 683565275, %v18
  %v20 = vshll.u32 683565275, %v17
  %v21 = vshrl.u32 2475754826, %v18
  %v22 = vor.u32 %v20, %v21
  %v23 = vshll.u32 2475754826, %v17
  %v24 = vshrl.u32 2131351028, %v18
  %v25 = vor.u32 %v23, %v24
  %v26 = vshll.u32 2131351028, %v17
  %v27 = vshrl.u32 2102212464, %v18
  %v28 = vor.u32 %v26, %v27
  %v29 = vshll.u32 2102212464, %v17
  %v30 = vshrl.u32 920167782, %v18
  %v31 = vor.u32 %v29, %v30
  %v32 = vshll.u32 920167782, %v17
  %v33 = vshrl.u32 1326507024, %v18
  %v34 = vor.u32 %v32, %v33
  %vm35 = vcmp.lt.s32.totalorder %v16, 1
  %vm36 = vcmp.lt.s32.totalorder %v16, 2
  %vm37 = vcmp.lt.s32.totalorder %v16, 3
  %vm38 = vcmp.lt.s32.totalorder %v16, 4
  %v39 = vsel %vm35, %v19, %v22
  %v40 = vsel %vm38, %v28, 2102212464
  %v41 = vsel %vm37, %v25, %v40
  %v42 = vsel %vm36, %v39, %v41
  %v43 = vsel %vm35, %v22, %v25
  %v44 = vsel %vm38, %v31, 920167782
  %v45 = vsel %vm37, %v28, %v44
  %v46 = vsel %vm36, %v43, %v45
  %v47 = vsel %vm35, %v25, %v28
  %v48 = vsel %vm38, %v34, 1326507024
  %v49 = vsel %vm37, %v31, %v48
  %v50 = vsel %vm36, %v47, %v49
  %v51 = vshll.u32 %v11, 8
  %v52 = vand.u32 %v51, 65535
  %v53 = vshrl.u32 %v51, 16
  %v54 = vand.u32 %v50, 65535
  %v55 = vshrl.u32 %v50, 16
  %v56 = vmul.u32 %v52, %v54
  %v57 = vmul.u32 %v52, %v55
  %v58 = vmul.u32 %v53, %v54
  %v59 = vmul.u32 %v53, %v55
  %v60 = vshll.u32 %v57, 16
  %v61 = vshrl.u32 %v57, 16
  %v62 = vshll.u32 %v58, 16
  %v63 = vshrl.u32 %v58, 16
  %vm64 = vc.u32 %v56, %v60
  %v65 = vsel %vm64, 1, 0
  %v66 = vadd.s32 %v56, %v60
  %v67 = vadd.s32 %v59, %v65
  %vm68 = vc.u32 %v66, %v62
  %v69 = vsel %vm68, 1, 0
  %v70 = vadd.s32 %v66, %v62
  %v71 = vadd.s32 %v67, %v69
  %v72 = vadd.s32 %v71, %v61
  %v73 = vadd.s32 %v72, %v63
  %v74 = vand.u32 %v51, 65535
  %v75 = vshrl.u32 %v51, 16
  %v76 = vand.u32 %v46, 65535
  %v77 = vshrl.u32 %v46, 16
  %v78 = vmul.u32 %v74, %v76
  %v79 = vmul.u32 %v74, %v77
  %v80 = vmul.u32 %v75, %v76
  %v81 = vmul.u32 %v75, %v77
  %v82 = vshll.u32 %v79, 16
  %v83 = vshrl.u32 %v79, 16
  %v84 = vshll.u32 %v80, 16
  %v85 = vshrl.u32 %v80, 16
  %vm86 = vc.u32 %v78, %v82
  %v87 = vsel %vm86, 1, 0
  %v88 = vadd.s32 %v78, %v82
  %v89 = vadd.s32 %v81, %v87
  %vm90 = vc.u32 %v88, %v84
  %v91 = vsel %vm90, 1, 0
  %v92 = vadd.s32 %v88, %v84
  %v93 = vadd.s32 %v89, %v91
  %v94 = vadd.s32 %v93, %v83
  %v95 = vadd.s32 %v94, %v85
  %v96 = vmul.u32 %v51, %v42
  %v97 = vadd.s32 %v73, %v92
  %vm98 = vc.u32 %v73, %v92
  %v99 = vadd.s32 %v95, 1
  %v100 = vsel %vm98, %v99, %v95
  %v101 = vadd.s32 %v96, %v100
  %v102 = vadd.s32 %v101, 536870912
  %v103 = vshrl.u32 %v102, 30
  %v104 = vshll.u32 %v103, 30
  %v105 = vsub.s32 %v101, %v104
  %vm106 = vcmp.lt.s32.totalorder %v105, 0
  %v107 = vsub.s32 0, %v105
  %v108 = vsel %vm106, %v107, %v105
  %v109 = vclz %v108
  %v110 = vsub.s32 %v109, 2
  %vm111 = vcmp.gt.s32.totalorder 0, %v110
  %v112 = vsel %vm111, 0, %v110
  %v113 = vsub.s32 32, %v112
  %v114 = vshll.u32 %v105, %v112
  %v115 = vshrl.u32 %v97, %v113
  %v116 = vor.u32 %v114, %v115
  %v117 = vsub.s32 4294967266, %v112
  %v118 = vadd.s32 %v117, 127
  %v119 = vshll.u32 %v118, 23
  %v120 = vor.u32 4788187, %v119
  %v121 = vand.u32 2147483647, %v120
  %v123 = vcvt.s32.f32 %v116
  %v124 = vmul.f32 %v123, %v121
  %v125 = vxor.u32 %v124, 2147483648
  %v126 = vsel %vm5, %v125, %v124
  %v127 = vsub.s32 4, %v103
  %v128 = vsel %vm5, %v127, %v103
  %v129 = vsel %vm4, %v2, %v126
  %v130 = vsel %vm4, 0, %v128
  %v131 = vmul.f32 %v129, %v129
  %v132 = vmul.f32 %v131, -0.001358992
  %v133 = vadd.f32 %v132, 0.041655596
  %v134 = vmul.f32 %v131, %v133
  %v135 = vadd.f32 %v134, -0.4999988
  %v136 = vmul.f32 %v131, %v135
  %v137 = vadd.f32 1.0, %v136
  %v138 = vmul.f32 %v129, %v129
  %v139 = vmul.f32 %v138, -0.00019511016
  %v140 = vadd.f32 %v139, 0.008332121
  %v141 = vmul.f32 %v138, %v140
  %v142 = vadd.f32 %v141, -0.16666654
  %v143 = vmul.f32 %v138, %v142
  %v144 = vadd.f32 %v143, 1.0
  %v145 = vmul.f32 %v144, %v129
  %vm146 = vweird.f32 %v2
  %v147 = vand.u32 %v130, 3
  %vm148 = vcmp.lt.s32.totalorder %v147, 2
  %vm149 = vcmp.eq.s32.totalorder %v147, 0
  %v150 = vxor.u32 %v145, 2147483648
  %v151 = vsel %vm149, %v137, %v150
  %vm152 = vcmp.eq.s32.totalorder %v147, 2
  %v153 = vxor.u32 %v137, 2147483648
  %v154 = vsel %vm152, %v153, %v145
  %v155 = vsel %vm148, %v151, %v154
  %v156 = vsel %vm146, nan, %v155
  %v157 = vpack.c.bf16 0.0, %v156
  %158 = vst [vmem:[%s1] sm:$0xf] %v157
  %s159 = scalar_lea.vmem %s0, 8
  %v160 = vld [vmem:[%s159] sm:$0xff]
  %v161 = vand.u32 2147483647, %v160
  %vm162 = vcmp.le.f32.partialorder %v161, 0.7853982
  %vm163 = vcmp.lt.s32.totalorder %v160, 0
  %v164 = vand.u32 %v160, 2139095040
  %v165 = vshrl.u32 %v164, 23
  %v166 = vsub.s32 %v165, 127
  %v167 = vand.u32 2147483647, %v160
  %v168 = vand.u32 %v167, 8388607
  %v169 = vor.u32 %v168, 8388608
  %v170 = vsub.s32 0, %v169
  %v171 = vadd.s32 %v166, 1
  %vm172 = vcmp.gt.s32.totalorder %v171, 0
  %v173 = vsel %vm172, %v171, 0
  %v174 = vshrl.u32 %v173, 5
  %v175 = vand.u32 %v173, 31
  %v176 = vsub.s32 32, %v175
  %v177 = vshrl.u32 683565275, %v176
  %v178 = vshll.u32 683565275, %v175
  %v179 = vshrl.u32 2475754826, %v176
  %v180 = vor.u32 %v178, %v179
  %v181 = vshll.u32 2475754826, %v175
  %v182 = vshrl.u32 2131351028, %v176
  %v183 = vor.u32 %v181, %v182
  %v184 = vshll.u32 2131351028, %v175
  %v185 = vshrl.u32 2102212464, %v176
  %v186 = vor.u32 %v184, %v185
  %v187 = vshll.u32 2102212464, %v175
  %v188 = vshrl.u32 920167782, %v176
  %v189 = vor.u32 %v187, %v188
  %v190 = vshll.u32 920167782, %v175
  %v191 = vshrl.u32 1326507024, %v176
  %v192 = vor.u32 %v190, %v191
  %vm193 = vcmp.lt.s32.totalorder %v174, 1
  %vm194 = vcmp.lt.s32.totalorder %v174, 2
  %vm195 = vcmp.lt.s32.totalorder %v174, 3
  %vm196 = vcmp.lt.s32.totalorder %v174, 4
  %v197 = vsel %vm193, %v177, %v180
  %v198 = vsel %vm196, %v186, 2102212464
  %v199 = vsel %vm195, %v183, %v198
  %v200 = vsel %vm194, %v197, %v199
  %v201 = vsel %vm193, %v180, %v183
  %v202 = vsel %vm196, %v189, 920167782
  %v203 = vsel %vm195, %v186, %v202
  %v204 = vsel %vm194, %v201, %v203
  %v205 = vsel %vm193, %v183, %v186
  %v206 = vsel %vm196, %v192, 1326507024
  %v207 = vsel %vm195, %v189, %v206
  %v208 = vsel %vm194, %v205, %v207
  %v209 = vshll.u32 %v169, 8
  %v210 = vand.u32 %v209, 65535
  %v211 = vshrl.u32 %v209, 16
  %v212 = vand.u32 %v208, 65535
  %v213 = vshrl.u32 %v208, 16
  %v214 = vmul.u32 %v210, %v212
  %v215 = vmul.u32 %v210, %v213
  %v216 = vmul.u32 %v211, %v212
  %v217 = vmul.u32 %v211, %v213
  %v218 = vshll.u32 %v215, 16
  %v219 = vshrl.u32 %v215, 16
  %v220 = vshll.u32 %v216, 16
  %v221 = vshrl.u32 %v216, 16
  %vm222 = vc.u32 %v214, %v218
  %v223 = vsel %vm222, 1, 0
  %v224 = vadd.s32 %v214, %v218
  %v225 = vadd.s32 %v217, %v223
  %vm226 = vc.u32 %v224, %v220
  %v227 = vsel %vm226, 1, 0
  %v228 = vadd.s32 %v224, %v220
  %v229 = vadd.s32 %v225, %v227
  %v230 = vadd.s32 %v229, %v219
  %v231 = vadd.s32 %v230, %v221
  %v232 = vand.u32 %v209, 65535
  %v233 = vshrl.u32 %v209, 16
  %v234 = vand.u32 %v204, 65535
  %v235 = vshrl.u32 %v204, 16
  %v236 = vmul.u32 %v232, %v234
  %v237 = vmul.u32 %v232, %v235
  %v238 = vmul.u32 %v233, %v234
  %v239 = vmul.u32 %v233, %v235
  %v240 = vshll.u32 %v237, 16
  %v241 = vshrl.u32 %v237, 16
  %v242 = vshll.u32 %v238, 16
  %v243 = vshrl.u32 %v238, 16
  %vm244 = vc.u32 %v236, %v240
  %v245 = vsel %vm244, 1, 0
  %v246 = vadd.s32 %v236, %v240
  %v247 = vadd.s32 %v239, %v245
  %vm248 = vc.u32 %v246, %v242
  %v249 = vsel %vm248, 1, 0
  %v250 = vadd.s32 %v246, %v242
  %v251 = vadd.s32 %v247, %v249
  %v252 = vadd.s32 %v251, %v241
  %v253 = vadd.s32 %v252, %v243
  %v254 = vmul.u32 %v209, %v200
  %v255 = vadd.s32 %v231, %v250
  %vm256 = vc.u32 %v231, %v250
  %v257 = vadd.s32 %v253, 1
  %v258 = vsel %vm256, %v257, %v253
  %v259 = vadd.s32 %v254, %v258
  %v260 = vadd.s32 %v259, 536870912
  %v261 = vshrl.u32 %v260, 30
  %v262 = vshll.u32 %v261, 30
  %v263 = vsub.s32 %v259, %v262
  %vm264 = vcmp.lt.s32.totalorder %v263, 0
  %v265 = vsub.s32 0, %v263
  %v266 = vsel %vm264, %v265, %v263
  %v267 = vclz %v266
  %v268 = vsub.s32 %v267, 2
  %vm269 = vcmp.gt.s32.totalorder 0, %v268
  %v270 = vsel %vm269, 0, %v268
  %v271 = vsub.s32 32, %v270
  %v272 = vshll.u32 %v263, %v270
  %v273 = vshrl.u32 %v255, %v271
  %v274 = vor.u32 %v272, %v273
  %v275 = vsub.s32 4294967266, %v270
  %v276 = vadd.s32 %v275, 127
  %v277 = vshll.u32 %v276, 23
  %v278 = vor.u32 4788187, %v277
  %v279 = vand.u32 2147483647, %v278
  %v281 = vcvt.s32.f32 %v274
  %v282 = vmul.f32 %v281, %v279
  %v283 = vxor.u32 %v282, 2147483648
  %v284 = vsel %vm163, %v283, %v282
  %v285 = vsub.s32 4, %v261
  %v286 = vsel %vm163, %v285, %v261
  %v287 = vsel %vm162, %v160, %v284
  %v288 = vsel %vm162, 0, %v286
  %v289 = vmul.f32 %v287, %v287
  %v290 = vmul.f32 %v289, -0.001358992
  %v291 = vadd.f32 %v290, 0.041655596
  %v292 = vmul.f32 %v289, %v291
  %v293 = vadd.f32 %v292, -0.4999988
  %v294 = vmul.f32 %v289, %v293
  %v295 = vadd.f32 1.0, %v294
  %v296 = vmul.f32 %v287, %v287
  %v297 = vmul.f32 %v296, -0.00019511016
  %v298 = vadd.f32 %v297, 0.008332121
  %v299 = vmul.f32 %v296, %v298
  %v300 = vadd.f32 %v299, -0.16666654
  %v301 = vmul.f32 %v296, %v300
  %v302 = vadd.f32 %v301, 1.0
  %v303 = vmul.f32 %v302, %v287
  %vm304 = vweird.f32 %v160
  %v305 = vand.u32 %v288, 3
  %vm306 = vcmp.lt.s32.totalorder %v305, 2
  %vm307 = vcmp.eq.s32.totalorder %v305, 0
  %v308 = vxor.u32 %v303, 2147483648
  %v309 = vsel %vm307, %v295, %v308
  %vm310 = vcmp.eq.s32.totalorder %v305, 2
  %v311 = vxor.u32 %v295, 2147483648
  %v312 = vsel %vm310, %v311, %v303
  %v313 = vsel %vm306, %v309, %v312
  %v314 = vsel %vm304, nan, %v313
  %s315 = scalar_lea.vmem %s1, 4
  %v316 = vpack.c.bf16 0.0, %v314
  %317 = vst [vmem:[%s315] sm:$0xf] %v316

// kernel: neg.19
$region0: #{neg.19}
  #allocation0 [shape = 's32[1]{0}', space=sflag, size = 0x4, scoped, tag = 'scoped memory for neg.19']
  %s0 = inlined_call_operand.vmem [shape: f32[16,1], index: 0, kind: input, shape index: {}]
  %s1 = inlined_call_operand.vmem [shape: bf16[16,1], index: 1, kind: output, shape index: {}]
  %v2 = vld [vmem:[%s0] sm:$0xff]
  %3 = xla_tuple %v2
  %4 = xla_tuple %3
  %v5 = vxor.u32 %v2, 2147483648
  %6 = xla_tuple %v5
  %v7 = vpack.c.bf16 0.0, %v5
  %8 = vst [vmem:[%s1] sm:$0xf] %v7
  %s9 = scalar_lea.vmem %s0, 8
  %v10 = vld [vmem:[%s9] sm:$0xff]
  %11 = xla_tuple %v10
  %12 = xla_tuple %11
  %v13 = vxor.u32 %v10, 2147483648
  %14 = xla_tuple %v13
  %s15 = scalar_lea.vmem %s1, 4
  %v16 = vpack.c.bf16 0.0, %v13
  %17 = vst [vmem:[%s15] sm:$0xf] %v16

// kernel: squeeze.75
$region0: #{squeeze.75}
  %s0 = inlined_call_operand.vmem [shape: f32[2,8], index: 0, kind: input, shape index: {}]
  %s1 = inlined_call_operand.hbm [shape: f32[16,1], index: 1, kind: output, shape index: {}]
  $region1: #{squeeze.75} parent=0
    #allocation0 [shape = 'u8[512]{0}', space=vmem, size = 0x400, scoped, tag = 'operand span for operand 1']
    #allocation1 [shape = 's32[1]{0}', space=sflag, size = 0x4, scoped, tag = 'scoped memory for squeeze.75']
    #allocation2 [shape = 'u8[4096]{0}', space=vmem, size = 0x1000, scoped, tag = 'scoped mem for output reshape']
    #allocation3 [shape = 'u8[4096]{0}', space=vmem, size = 0x1000, scoped, tag = 'scoped mem for input reshape']
    %2 = vsyncpa [#allocation1], 0
    %s4 = ssub.s32 4, 1
    %v5 = vld [vmem:[%s0] sm:%s4]
    %6 = vst [vmem:[#allocation3] sm:%s4] %v5
    %v7 = vld [vmem:[#allocation3] sm:$0x1]
    %vm8 = vcmask 64512
    %9 = vst.msk [vmem:[#allocation2] sm:$0x1] %vm8, %v7
    %s10 = scalar_lea.vmem [#allocation3], 1
    %v11 = vld [vmem:[%s10] sm:$0x1]
    %12 = vrot.lane.b32.xlu0 %v11, 8
    %v13 = vpop.permute.xlu0 %12
    %vm14 = vcmask 130112
    %15 = vst.msk [vmem:[#allocation2] sm:$0x1] %vm14, %v13
    %s17 = ssub.s32 2, 1
    %v18 = vld [vmem:[#allocation2] sm:%s17]
    %s20 = ssub.s32 2, 1
    %21 = vst [vmem:[#allocation0] sm:%s20] %v18
    %23 = vsyncadd [#allocation1], 0
    %s25 = sshll.u32 [#allocation0], 4
    %s26 = int_to_ptr.vmem [resolvable:$true] %s25
    %s27 = sshll.u32 %s1, 4
    %s28 = int_to_ptr.hbm [resolvable:$true] %s27
    %30 = dma.vmem_to_hbm [thread:$0]  %s26, 16, %s28, [#allocation1]
    %32 = dma.done [#allocation1], 16
    %33 = vsyncpa [#allocation1], 1

// kernel: _smoke_forward_fixed.1
$region0: #{_smoke_forward_fixed.1}
  #allocation0 [shape = 'u32[]', space=smem, size = 0x4, offset = 0x4, fixed_abs, tag = 'smem constant byte address 0x4 - core index']
  #allocation1 [shape = 'u32[72,128]{1,0:T(1,128)}', space=vmem, size = 0x9000, scoped, tag = 'internal scratch']
  %s0 = inlined_call_operand.vmem [shape: f32[2,3,256], index: 0, kind: input, shape index: {}]
  %s1 = inlined_call_operand.vmem [shape: f32[2,8,256], index: 1, kind: input, shape index: {}]
  %s2 = inlined_call_operand.vmem [shape: f32[2,8,12], index: 2, kind: output, shape index: {}]
  %s3 = sld [smem:[#allocation0]]
  $region18: #{_smoke_forward_fixed.1} parent=0
    _
  %s5 = ssub.s32 1, %s3
  %s6 = scalar_select 0, %s5, %s3
  // Predicated region
  $region2: #{_smoke_forward_fixed.1} parent=0 // pred_check
    _
  $region3: #{_smoke_forward_fixed.1} parent=0 // pred_check_branch
    %8 = sbr.rel (0) target = $region5
  $region4: #{_smoke_forward_fixed.1} parent=0 // pred_region
    _
  $region5: #{_smoke_forward_fixed.1} parent=0 // pred_fallthru
    _
  // Predicated region
  $region6: #{_smoke_forward_fixed.1} parent=0 // pred_check
    _
  $region7: #{_smoke_forward_fixed.1} parent=0 // pred_check_branch
    %10 = sbr.rel (0) target = $region9
  $region8: #{_smoke_forward_fixed.1} parent=0 // pred_region
    _
  $region9: #{_smoke_forward_fixed.1} parent=0 // pred_fallthru
    _
  %v11 = vld [vmem:[%s0] sm:$0x77]
  %v12 = vld [vmem:[%s0 + $0x8] sm:$0x77]
  %v13 = vlaneseq
  %v14 = vand.u32 %v13, 127
  %v15 = vadd.s32 %v14, 128
  %v16 = vand.u32 %v14, 15
  %v17 = vand.u32 %v15, 15
  %vm18 = vcmp.ge.s32.totalorder %v16, 1
  %vm19 = vcmp.ge.s32.totalorder %v17, 1
  %vm20 = vcmp.le.s32.totalorder %v16, 14
  %vm21 = vcmp.le.s32.totalorder %v17, 14
  %vm22 = vcmp.ge.s32.totalorder %v14, 16
  %vm23 = vcmp.ge.s32.totalorder %v15, 16
  %vm24 = vcmp.lt.s32.totalorder %v14, 240
  %vm25 = vcmp.lt.s32.totalorder %v15, 240
  %28 = vst [vmem:[#allocation1] ss:$2 sm:$0xff] %v11
  %v29 = vld.sshfl [vmem:[#allocation1] sm:$0xff pattern:$0x75316420]
  %v30 = vld.sshfl [vmem:[#allocation1 + $0x8] sm:$0xff pattern:$0x75316420]
  %s31 = scalar_lea.vmem [#allocation1], 16
  %32 = vst [vmem:[%s31] ss:$2 sm:$0xff] %v12
  %v33 = vld.sshfl [vmem:[#allocation1 + $0x10] sm:$0xff pattern:$0x75316420]
  %v34 = vld.sshfl [vmem:[#allocation1 + $0x18] sm:$0xff pattern:$0x75316420]
  %39 = vrot.lane.b32.xlu0 %v29, 1
  %v40 = vpop.permute.xlu0 %39
  %41 = vrot.lane.b32.xlu0 %v33, 1
  %v42 = vpop.permute.xlu0 %41
  %43 = vrot.lane.b32.xlu0 %v30, 1
  %v44 = vpop.permute.xlu0 %43
  %45 = vrot.lane.b32.xlu0 %v34, 1
  %v46 = vpop.permute.xlu0 %45
  %vm47 = vcmp.lt.s32.totalorder %v14, 1
  %v48 = vsel %vm47, %v40, %v44
  %v49 = vsel %vm47, %v42, %v46
  %v50 = vsel %vm47, %v44, %v40
  %v51 = vsel %vm47, %v46, %v42
  %v52 = vsel %vm18, 1, 0
  %v53 = vsel %vm19, 1, 0
  %vm54 = vcmp.eq.s32.totalorder %v52, 1
  %vm55 = vcmp.eq.s32.totalorder %v53, 1
  %v56 = vsel %vm54, %v50, -inf
  %v57 = vsel %vm55, %v48, -inf
  %v58 = vsel %vm54, %v51, -inf
  %v59 = vsel %vm55, %v49, -inf
  %60 = vst [vmem:[#allocation1] ss:$2 sm:$0xff] %v11
  %v61 = vld.sshfl [vmem:[#allocation1] sm:$0xff pattern:$0x75316420]
  %v62 = vld.sshfl [vmem:[#allocation1 + $0x8] sm:$0xff pattern:$0x75316420]
  %s63 = scalar_lea.vmem [#allocation1], 16
  %64 = vst [vmem:[%s63] ss:$2 sm:$0xff] %v12
  %v65 = vld.sshfl [vmem:[#allocation1 + $0x10] sm:$0xff pattern:$0x75316420]
  %v66 = vld.sshfl [vmem:[#allocation1 + $0x18] sm:$0xff pattern:$0x75316420]
  %71 = vrot.lane.b32.xlu0 %v61, 127
  %v72 = vpop.permute.xlu0 %71
  %73 = vrot.lane.b32.xlu0 %v65, 127
  %v74 = vpop.permute.xlu0 %73
  %75 = vrot.lane.b32.xlu0 %v62, 127
  %v76 = vpop.permute.xlu0 %75
  %77 = vrot.lane.b32.xlu0 %v66, 127
  %v78 = vpop.permute.xlu0 %77
  %vm79 = vcmp.lt.s32.totalorder %v14, 127
  %v80 = vsel %vm79, %v72, %v76
  %v81 = vsel %vm79, %v74, %v78
  %v82 = vsel %vm79, %v76, %v72
  %v83 = vsel %vm79, %v78, %v74
  %v84 = vsel %vm20, 1, 0
  %v85 = vsel %vm21, 1, 0
  %vm86 = vcmp.eq.s32.totalorder %v84, 1
  %vm87 = vcmp.eq.s32.totalorder %v85, 1
  %v88 = vsel %vm86, %v80, -inf
  %v89 = vsel %vm87, %v82, -inf
  %v90 = vsel %vm86, %v81, -inf
  %v91 = vsel %vm87, %v83, -inf
  %92 = vst [vmem:[#allocation1] ss:$2 sm:$0xff] %v11
  %v93 = vld.sshfl [vmem:[#allocation1] sm:$0xff pattern:$0x75316420]
  %v94 = vld.sshfl [vmem:[#allocation1 + $0x8] sm:$0xff pattern:$0x75316420]
  %s95 = scalar_lea.vmem [#allocation1], 16
  %96 = vst [vmem:[%s95] ss:$2 sm:$0xff] %v12
  %v97 = vld.sshfl [vmem:[#allocation1 + $0x10] sm:$0xff pattern:$0x75316420]
  %v98 = vld.sshfl [vmem:[#allocation1 + $0x18] sm:$0xff pattern:$0x75316420]
  %v103 = vmax.f32 %v56, %v93
  %v104 = vmax.f32 %v57, %v94
  %v105 = vmax.f32 %v58, %v97
  %v106 = vmax.f32 %v59, %v98
  %v107 = vmax.f32 %v103, %v88
  %v108 = vmax.f32 %v104, %v89
  %v109 = vmax.f32 %v105, %v90
  %v110 = vmax.f32 %v106, %v91
  %111 = vrot.lane.b32.xlu0 %v107, 16
  %v112 = vpop.permute.xlu0 %111
  %113 = vrot.lane.b32.xlu0 %v109, 16
  %v114 = vpop.permute.xlu0 %113
  %115 = vrot.lane.b32.xlu0 %v108, 16
  %v116 = vpop.permute.xlu0 %115
  %117 = vrot.lane.b32.xlu0 %v110, 16
  %v118 = vpop.permute.xlu0 %117
  %vm119 = vcmp.lt.s32.totalorder %v14, 16
  %v120 = vsel %vm119, %v112, %v116
  %v121 = vsel %vm119, %v114, %v118
  %v122 = vsel %vm119, %v116, %v112
  %v123 = vsel %vm119, %v118, %v114
  %v124 = vsel %vm22, 1, 0
  %v125 = vsel %vm23, 1, 0
  %vm126 = vcmp.eq.s32.totalorder %v124, 1
  %vm127 = vcmp.eq.s32.totalorder %v125, 1
  %v128 = vsel %vm126, %v122, -inf
  %v129 = vsel %vm127, %v120, -inf
  %v130 = vsel %vm126, %v123, -inf
  %v131 = vsel %vm127, %v121, -inf
  %132 = vrot.lane.b32.xlu0 %v107, 112
  %v133 = vpop.permute.xlu0 %132
  %134 = vrot.lane.b32.xlu0 %v109, 112
  %v135 = vpop.permute.xlu0 %134
  %136 = vrot.lane.b32.xlu0 %v108, 112
  %v137 = vpop.permute.xlu0 %136
  %138 = vrot.lane.b32.xlu0 %v110, 112
  %v139 = vpop.permute.xlu0 %138
  %vm140 = vcmp.lt.s32.totalorder %v14, 112
  %v141 = vsel %vm140, %v133, %v137
  %v142 = vsel %vm140, %v135, %v139
  %v143 = vsel %vm140, %v137, %v133
  %v144 = vsel %vm140, %v139, %v135
  %v145 = vsel %vm24, 1, 0
  %v146 = vsel %vm25, 1, 0
  %vm147 = vcmp.eq.s32.totalorder %v145, 1
  %vm148 = vcmp.eq.s32.totalorder %v146, 1
  %v149 = vsel %vm147, %v141, -inf
  %v150 = vsel %vm148, %v143, -inf
  %v151 = vsel %vm147, %v142, -inf
  %v152 = vsel %vm148, %v144, -inf
  %v153 = vmax.f32 %v128, %v107
  %v154 = vmax.f32 %v129, %v108
  %v155 = vmax.f32 %v130, %v109
  %v156 = vmax.f32 %v131, %v110
  %v157 = vmax.f32 %v153, %v149
  %v158 = vmax.f32 %v154, %v150
  %v159 = vmax.f32 %v155, %v151
  %v160 = vmax.f32 %v156, %v152
  %161 = vst [vmem:[#allocation1] ss:$2 sm:$0xff] %v11
  %v162 = vld.sshfl [vmem:[#allocation1] sm:$0xff pattern:$0x75316420]
  %v163 = vld.sshfl [vmem:[#allocation1 + $0x8] sm:$0xff pattern:$0x75316420]
  %s164 = scalar_lea.vmem [#allocation1], 16
  %165 = vst [vmem:[%s164] ss:$2 sm:$0xff] %v12
  %v166 = vld.sshfl [vmem:[#allocation1 + $0x10] sm:$0xff pattern:$0x75316420]
  %v167 = vld.sshfl [vmem:[#allocation1 + $0x18] sm:$0xff pattern:$0x75316420]
  %vm172 = vcmp.eq.f32.partialorder %v157, %v162
  %vm173 = vcmp.eq.f32.partialorder %v158, %v163
  %vm174 = vcmp.eq.f32.partialorder %v159, %v166
  %vm175 = vcmp.eq.f32.partialorder %v160, %v167
  %176 = vst [vmem:[#allocation1] ss:$2 sm:$0xff] %v11
  %v177 = vld.sshfl [vmem:[#allocation1] sm:$0xff pattern:$0x75316420]
  %v178 = vld.sshfl [vmem:[#allocation1 + $0x8] sm:$0xff pattern:$0x75316420]
  %s179 = scalar_lea.vmem [#allocation1], 16
  %180 = vst [vmem:[%s179] ss:$2 sm:$0xff] %v12
  %v181 = vld.sshfl [vmem:[#allocation1 + $0x10] sm:$0xff pattern:$0x75316420]
  %v182 = vld.sshfl [vmem:[#allocation1 + $0x18] sm:$0xff pattern:$0x75316420]
  %v187 = vsel %vm172, %v177, 0.0
  %v188 = vsel %vm173, %v178, 0.0
  %v189 = vsel %vm174, %v181, 0.0
  %v190 = vsel %vm175, %v182, 0.0
  %v191 = vlaneseq
  %v192 = vshrl.u32 %v191, 7
  %v193 = vmul.u32 %v192, 256
  %v194 = vadd.s32 %v193, %v14
  %v195 = vadd.s32 %v194, 128
  %vm196 = vcmp.eq.s32.totalorder %v14, 0
  %vm197 = vcmask 1042432
  %v198 = vsel %vm197, %v187, -inf
  %199 = vmax.xlane.f32.xlu0 %v198
  %v200 = vpop.xlane.xlu0 %199
  %v201 = vsel %vm197, %v189, -inf
  %202 = vmax.xlane.f32.xlu0 %v201
  %v203 = vpop.xlane.xlu0 %202
  %v204 = vsel %vm197, %v200, -inf
  %v205 = vrot.slane %v204, 4
  %v206 = vmax.f32 %v204, %v205
  %v207 = vrot.slane %v206, 2
  %v208 = vmax.f32 %v206, %v207
  %v209 = vrot.slane %v208, 1
  %v210 = vmax.f32 %v208, %v209
  %v211 = vsel %vm197, %v203, -inf
  %v212 = vrot.slane %v211, 4
  %v213 = vmax.f32 %v211, %v212
  %v214 = vrot.slane %v213, 2
  %v215 = vmax.f32 %v213, %v214
  %v216 = vrot.slane %v215, 1
  %v217 = vmax.f32 %v215, %v216
  %vm218 = vcmp.ge.f32.partialorder %v187, %v210
  %vm219 = vcmp.ge.f32.partialorder %v189, %v217
  %v220 = vsel %vm218, %v194, 768
  %v221 = vsel %vm219, %v194, 768
  %v222 = vsel %vm197, %v220, 2147483647
  %v223 = vand.u32 %v222, 65535
  %v224 = vshra.s32 %v222, 16
  %v225 = vcvt.s32.f32 %v223
  %v226 = vcvt.s32.f32 %v224
  %227 = vmin.xlane.f32.xlu0 %v226
  %v228 = vpop.xlane.xlu0 %227
  %vm229 = vcmp.eq.f32.partialorder %v226, %v228
  %v230 = vsel %vm229, %v225, inf
  %231 = vmin.xlane.f32.xlu0 %v230
  %v232 = vpop.xlane.xlu0 %231
  %v233 = vcvt.f32.s32 %v232
  %v234 = vcvt.f32.s32 %v228
  %v235 = vshll.u32 %v234, 16
  %v236 = vadd.s32 %v235, %v233
  %v237 = vsel %vm197, %v221, 2147483647
  %v238 = vand.u32 %v237, 65535
  %v239 = vshra.s32 %v237, 16
  %v240 = vcvt.s32.f32 %v238
  %v241 = vcvt.s32.f32 %v239
  %242 = vmin.xlane.f32.xlu0 %v241
  %v243 = vpop.xlane.xlu0 %242
  %vm244 = vcmp.eq.f32.partialorder %v241, %v243
  %v245 = vsel %vm244, %v240, inf
  %246 = vmin.xlane.f32.xlu0 %v245
  %v247 = vpop.xlane.xlu0 %246
  %v248 = vcvt.f32.s32 %v247
  %v249 = vcvt.f32.s32 %v243
  %v250 = vshll.u32 %v249, 16
  %v251 = vadd.s32 %v250, %v248
  %v252 = vsel %vm197, %v236, 2147483647
  %v253 = vrot.slane %v252, 4
  %vm254 = vcmp.lt.s32.totalorder %v252, %v253
  %v255 = vsel %vm254, %v252, %v253
  %v256 = vrot.slane %v255, 2
  %vm257 = vcmp.lt.s32.totalorder %v255, %v256
  %v258 = vsel %vm257, %v255, %v256
  %v259 = vrot.slane %v258, 1
  %vm260 = vcmp.lt.s32.totalorder %v258, %v259
  %v261 = vsel %vm260, %v258, %v259
  %v262 = vsel %vm197, %v251, 2147483647
  %v263 = vrot.slane %v262, 4
  %vm264 = vcmp.lt.s32.totalorder %v262, %v263
  %v265 = vsel %vm264, %v262, %v263
  %v266 = vrot.slane %v265, 2
  %vm267 = vcmp.lt.s32.totalorder %v265, %v266
  %v268 = vsel %vm267, %v265, %v266
  %v269 = vrot.slane %v268, 1
  %vm270 = vcmp.lt.s32.totalorder %v268, %v269
  %v271 = vsel %vm270, %v268, %v269
  %v272 = vsel %vm196, 1, 0
  %vm273 = vcmp.eq.s32.totalorder %v272, 1
  %vm276 = vcmask 1041409
  %v277 = vsel %vm276, %v217, %v210
  %v279 = vsel %vm273, %v277, 0.0
  %v280 = vsel %vm276, %v271, %v261
  %v281 = vsel %vm273, %v280, 0
  %vm282 = vcmp.eq.s32.totalorder %v194, %v261
  %vm283 = vcmp.eq.s32.totalorder %v194, %v271
  %v284 = vsel %vm282, -inf, %v187
  %v285 = vsel %vm283, -inf, %v189
  %v286 = vsel %vm197, %v188, -inf
  %287 = vmax.xlane.f32.xlu0 %v286
  %v288 = vpop.xlane.xlu0 %287
  %v289 = vsel %vm197, %v190, -inf
  %290 = vmax.xlane.f32.xlu0 %v289
  %v291 = vpop.xlane.xlu0 %290
  %v292 = vsel %vm197, %v288, -inf
  %v293 = vrot.slane %v292, 4
  %v294 = vmax.f32 %v292, %v293
  %v295 = vrot.slane %v294, 2
  %v296 = vmax.f32 %v294, %v295
  %v297 = vrot.slane %v296, 1
  %v298 = vmax.f32 %v296, %v297
  %v299 = vsel %vm197, %v291, -inf
  %v300 = vrot.slane %v299, 4
  %v301 = vmax.f32 %v299, %v300
  %v302 = vrot.slane %v301, 2
  %v303 = vmax.f32 %v301, %v302
  %v304 = vrot.slane %v303, 1
  %v305 = vmax.f32 %v303, %v304
  %vm306 = vcmp.ge.f32.partialorder %v188, %v298
  %vm307 = vcmp.ge.f32.partialorder %v190, %v305
  %v308 = vsel %vm306, %v195, 768
  %v309 = vsel %vm307, %v195, 768
  %v310 = vsel %vm197, %v308, 2147483647
  %v311 = vand.u32 %v310, 65535
  %v312 = vshra.s32 %v310, 16
  %v313 = vcvt.s32.f32 %v311
  %v314 = vcvt.s32.f32 %v312
  %315 = vmin.xlane.f32.xlu0 %v314
  %v316 = vpop.xlane.xlu0 %315
  %vm317 = vcmp.eq.f32.partialorder %v314, %v316
  %v318 = vsel %vm317, %v313, inf
  %319 = vmin.xlane.f32.xlu0 %v318
  %v320 = vpop.xlane.xlu0 %319
  %v321 = vcvt.f32.s32 %v320
  %v322 = vcvt.f32.s32 %v316
  %v323 = vshll.u32 %v322, 16
  %v324 = vadd.s32 %v323, %v321
  %v325 = vsel %vm197, %v309, 2147483647
  %v326 = vand.u32 %v325, 65535
  %v327 = vshra.s32 %v325, 16
  %v328 = vcvt.s32.f32 %v326
  %v329 = vcvt.s32.f32 %v327
  %330 = vmin.xlane.f32.xlu0 %v329
  %v331 = vpop.xlane.xlu0 %330
  %vm332 = vcmp.eq.f32.partialorder %v329, %v331
  %v333 = vsel %vm332, %v328, inf
  %334 = vmin.xlane.f32.xlu0 %v333
  %v335 = vpop.xlane.xlu0 %334
  %v336 = vcvt.f32.s32 %v335
  %v337 = vcvt.f32.s32 %v331
  %v338 = vshll.u32 %v337, 16
  %v339 = vadd.s32 %v338, %v336
  %v340 = vsel %vm197, %v324, 2147483647
  %v341 = vrot.slane %v340, 4
  %vm342 = vcmp.lt.s32.totalorder %v340, %v341
  %v343 = vsel %vm342, %v340, %v341
  %v344 = vrot.slane %v343, 2
  %vm345 = vcmp.lt.s32.totalorder %v343, %v344
  %v346 = vsel %vm345, %v343, %v344
  %v347 = vrot.slane %v346, 1
  %vm348 = vcmp.lt.s32.totalorder %v346, %v347
  %v349 = vsel %vm348, %v346, %v347
  %v350 = vsel %vm197, %v339, 2147483647
  %v351 = vrot.slane %v350, 4
  %vm352 = vcmp.lt.s32.totalorder %v350, %v351
  %v353 = vsel %vm352, %v350, %v351
  %v354 = vrot.slane %v353, 2
  %vm355 = vcmp.lt.s32.totalorder %v353, %v354
  %v356 = vsel %vm355, %v353, %v354
  %v357 = vrot.slane %v356, 1
  %vm358 = vcmp.lt.s32.totalorder %v356, %v357
  %v359 = vsel %vm358, %v356, %v357
  %v362 = vsel %vm276, %v305, %v298
  %v364 = vsel %vm273, %v362, 0.0
  %v365 = vsel %vm276, %v359, %v349
  %v366 = vsel %vm273, %v365, 0
  %vm367 = vcmp.eq.s32.totalorder %v195, %v349
  %vm368 = vcmp.eq.s32.totalorder %v195, %v359
  %v369 = vsel %vm367, -inf, %v188
  %v370 = vsel %vm368, -inf, %v190
  %vm371 = vcmp.eq.s32.totalorder %v14, 1
  %v372 = vsel %vm197, %v284, -inf
  %373 = vmax.xlane.f32.xlu0 %v372
  %v374 = vpop.xlane.xlu0 %373
  %v375 = vsel %vm197, %v285, -inf
  %376 = vmax.xlane.f32.xlu0 %v375
  %v377 = vpop.xlane.xlu0 %376
  %v378 = vsel %vm197, %v374, -inf
  %v379 = vrot.slane %v378, 4
  %v380 = vmax.f32 %v378, %v379
  %v381 = vrot.slane %v380, 2
  %v382 = vmax.f32 %v380, %v381
  %v383 = vrot.slane %v382, 1
  %v384 = vmax.f32 %v382, %v383
  %v385 = vsel %vm197, %v377, -inf
  %v386 = vrot.slane %v385, 4
  %v387 = vmax.f32 %v385, %v386
  %v388 = vrot.slane %v387, 2
  %v389 = vmax.f32 %v387, %v388
  %v390 = vrot.slane %v389, 1
  %v391 = vmax.f32 %v389, %v390
  %vm392 = vcmp.ge.f32.partialorder %v284, %v384
  %vm393 = vcmp.ge.f32.partialorder %v285, %v391
  %v394 = vsel %vm392, %v194, 768
  %v395 = vsel %vm393, %v194, 768
  %v396 = vsel %vm197, %v394, 2147483647
  %v397 = vand.u32 %v396, 65535
  %v398 = vshra.s32 %v396, 16
  %v399 = vcvt.s32.f32 %v397
  %v400 = vcvt.s32.f32 %v398
  %401 = vmin.xlane.f32.xlu0 %v400
  %v402 = vpop.xlane.xlu0 %401
  %vm403 = vcmp.eq.f32.partialorder %v400, %v402
  %v404 = vsel %vm403, %v399, inf
  %405 = vmin.xlane.f32.xlu0 %v404
  %v406 = vpop.xlane.xlu0 %405
  %v407 = vcvt.f32.s32 %v406
  %v408 = vcvt.f32.s32 %v402
  %v409 = vshll.u32 %v408, 16
  %v410 = vadd.s32 %v409, %v407
  %v411 = vsel %vm197, %v395, 2147483647
  %v412 = vand.u32 %v411, 65535
  %v413 = vshra.s32 %v411, 16
  %v414 = vcvt.s32.f32 %v412
  %v415 = vcvt.s32.f32 %v413
  %416 = vmin.xlane.f32.xlu0 %v415
  %v417 = vpop.xlane.xlu0 %416
  %vm418 = vcmp.eq.f32.partialorder %v415, %v417
  %v419 = vsel %vm418, %v414, inf
  %420 = vmin.xlane.f32.xlu0 %v419
  %v421 = vpop.xlane.xlu0 %420
  %v422 = vcvt.f32.s32 %v421
  %v423 = vcvt.f32.s32 %v417
  %v424 = vshll.u32 %v423, 16
  %v425 = vadd.s32 %v424, %v422
  %v426 = vsel %vm197, %v410, 2147483647
  %v427 = vrot.slane %v426, 4
  %vm428 = vcmp.lt.s32.totalorder %v426, %v427
  %v429 = vsel %vm428, %v426, %v427
  %v430 = vrot.slane %v429, 2
  %vm431 = vcmp.lt.s32.totalorder %v429, %v430
  %v432 = vsel %vm431, %v429, %v430
  %v433 = vrot.slane %v432, 1
  %vm434 = vcmp.lt.s32.totalorder %v432, %v433
  %v435 = vsel %vm434, %v432, %v433
  %v436 = vsel %vm197, %v425, 2147483647
  %v437 = vrot.slane %v436, 4
  %vm438 = vcmp.lt.s32.totalorder %v436, %v437
  %v439 = vsel %vm438, %v436, %v437
  %v440 = vrot.slane %v439, 2
  %vm441 = vcmp.lt.s32.totalorder %v439, %v440
  %v442 = vsel %vm441, %v439, %v440
  %v443 = vrot.slane %v442, 1
  %vm444 = vcmp.lt.s32.totalorder %v442, %v443
  %v445 = vsel %vm444, %v442, %v443
  %v446 = vsel %vm371, 1, 0
  %vm447 = vcmp.eq.s32.totalorder %v446, 1
  %v450 = vsel %vm276, %v391, %v384
  %v452 = vsel %vm447, %v450, %v279
  %v453 = vsel %vm276, %v445, %v435
  %v454 = vsel %vm447, %v453, %v281
  %vm455 = vcmp.eq.s32.totalorder %v194, %v435
  %vm456 = vcmp.eq.s32.totalorder %v194, %v445
  %v457 = vsel %vm455, -inf, %v284
  %v458 = vsel %vm456, -inf, %v285
  %v459 = vsel %vm197, %v369, -inf
  %460 = vmax.xlane.f32.xlu0 %v459
  %v461 = vpop.xlane.xlu0 %460
  %v462 = vsel %vm197, %v370, -inf
  %463 = vmax.xlane.f32.xlu0 %v462
  %v464 = vpop.xlane.xlu0 %463
  %v465 = vsel %vm197, %v461, -inf
  %v466 = vrot.slane %v465, 4
  %v467 = vmax.f32 %v465, %v466
  %v468 = vrot.slane %v467, 2
  %v469 = vmax.f32 %v467, %v468
  %v470 = vrot.slane %v469, 1
  %v471 = vmax.f32 %v469, %v470
  %v472 = vsel %vm197, %v464, -inf
  %v473 = vrot.slane %v472, 4
  %v474 = vmax.f32 %v472, %v473
  %v475 = vrot.slane %v474, 2
  %v476 = vmax.f32 %v474, %v475
  %v477 = vrot.slane %v476, 1
  %v478 = vmax.f32 %v476, %v477
  %vm479 = vcmp.ge.f32.partialorder %v369, %v471
  %vm480 = vcmp.ge.f32.partialorder %v370, %v478
  %v481 = vsel %vm479, %v195, 768
  %v482 = vsel %vm480, %v195, 768
  %v483 = vsel %vm197, %v481, 2147483647
  %v484 = vand.u32 %v483, 65535
  %v485 = vshra.s32 %v483, 16
  %v486 = vcvt.s32.f32 %v484
  %v487 = vcvt.s32.f32 %v485
  %488 = vmin.xlane.f32.xlu0 %v487
  %v489 = vpop.xlane.xlu0 %488
  %vm490 = vcmp.eq.f32.partialorder %v487, %v489
  %v491 = vsel %vm490, %v486, inf
  %492 = vmin.xlane.f32.xlu0 %v491
  %v493 = vpop.xlane.xlu0 %492
  %v494 = vcvt.f32.s32 %v493
  %v495 = vcvt.f32.s32 %v489
  %v496 = vshll.u32 %v495, 16
  %v497 = vadd.s32 %v496, %v494
  %v498 = vsel %vm197, %v482, 2147483647
  %v499 = vand.u32 %v498, 65535
  %v500 = vshra.s32 %v498, 16
  %v501 = vcvt.s32.f32 %v499
  %v502 = vcvt.s32.f32 %v500
  %503 = vmin.xlane.f32.xlu0 %v502
  %v504 = vpop.xlane.xlu0 %503
  %vm505 = vcmp.eq.f32.partialorder %v502, %v504
  %v506 = vsel %vm505, %v501, inf
  %507 = vmin.xlane.f32.xlu0 %v506
  %v508 = vpop.xlane.xlu0 %507
  %v509 = vcvt.f32.s32 %v508
  %v510 = vcvt.f32.s32 %v504
  %v511 = vshll.u32 %v510, 16
  %v512 = vadd.s32 %v511, %v509
  %v513 = vsel %vm197, %v497, 2147483647
  %v514 = vrot.slane %v513, 4
  %vm515 = vcmp.lt.s32.totalorder %v513, %v514
  %v516 = vsel %vm515, %v513, %v514
  %v517 = vrot.slane %v516, 2
  %vm518 = vcmp.lt.s32.totalorder %v516, %v517
  %v519 = vsel %vm518, %v516, %v517
  %v520 = vrot.slane %v519, 1
  %vm521 = vcmp.lt.s32.totalorder %v519, %v520
  %v522 = vsel %vm521, %v519, %v520
  %v523 = vsel %vm197, %v512, 2147483647
  %v524 = vrot.slane %v523, 4
  %vm525 = vcmp.lt.s32.totalorder %v523, %v524
  %v526 = vsel %vm525, %v523, %v524
  %v527 = vrot.slane %v526, 2
  %vm528 = vcmp.lt.s32.totalorder %v526, %v527
  %v529 = vsel %vm528, %v526, %v527
  %v530 = vrot.slane %v529, 1
  %vm531 = vcmp.lt.s32.totalorder %v529, %v530
  %v532 = vsel %vm531, %v529, %v530
  %v535 = vsel %vm276, %v478, %v471
  %v537 = vsel %vm447, %v535, %v364
  %v538 = vsel %vm276, %v532, %v522
  %v539 = vsel %vm447, %v538, %v366
  %vm540 = vcmp.eq.s32.totalorder %v195, %v522
  %vm541 = vcmp.eq.s32.totalorder %v195, %v532
  %v542 = vsel %vm540, -inf, %v369
  %v543 = vsel %vm541, -inf, %v370
  %vm544 = vcmp.eq.s32.totalorder %v14, 2
  %v545 = vsel %vm197, %v457, -inf
  %546 = vmax.xlane.f32.xlu0 %v545
  %v547 = vpop.xlane.xlu0 %546
  %v548 = vsel %vm197, %v458, -inf
  %549 = vmax.xlane.f32.xlu0 %v548
  %v550 = vpop.xlane.xlu0 %549
  %v551 = vsel %vm197, %v547, -inf
  %v552 = vrot.slane %v551, 4
  %v553 = vmax.f32 %v551, %v552
  %v554 = vrot.slane %v553, 2
  %v555 = vmax.f32 %v553, %v554
  %v556 = vrot.slane %v555, 1
  %v557 = vmax.f32 %v555, %v556
  %v558 = vsel %vm197, %v550, -inf
  %v559 = vrot.slane %v558, 4
  %v560 = vmax.f32 %v558, %v559
  %v561 = vrot.slane %v560, 2
  %v562 = vmax.f32 %v560, %v561
  %v563 = vrot.slane %v562, 1
  %v564 = vmax.f32 %v562, %v563
  %vm565 = vcmp.ge.f32.partialorder %v457, %v557
  %vm566 = vcmp.ge.f32.partialorder %v458, %v564
  %v567 = vsel %vm565, %v194, 768
  %v568 = vsel %vm566, %v194, 768
  %v569 = vsel %vm197, %v567, 2147483647
  %v570 = vand.u32 %v569, 65535
  %v571 = vshra.s32 %v569, 16
  %v572 = vcvt.s32.f32 %v570
  %v573 = vcvt.s32.f32 %v571
  %574 = vmin.xlane.f32.xlu0 %v573
  %v575 = vpop.xlane.xlu0 %574
  %vm576 = vcmp.eq.f32.partialorder %v573, %v575
  %v577 = vsel %vm576, %v572, inf
  %578 = vmin.xlane.f32.xlu0 %v577
  %v579 = vpop.xlane.xlu0 %578
  %v580 = vcvt.f32.s32 %v579
  %v581 = vcvt.f32.s32 %v575
  %v582 = vshll.u32 %v581, 16
  %v583 = vadd.s32 %v582, %v580
  %v584 = vsel %vm197, %v568, 2147483647
  %v585 = vand.u32 %v584, 65535
  %v586 = vshra.s32 %v584, 16
  %v587 = vcvt.s32.f32 %v585
  %v588 = vcvt.s32.f32 %v586
  %589 = vmin.xlane.f32.xlu0 %v588
  %v590 = vpop.xlane.xlu0 %589
  %vm591 = vcmp.eq.f32.partialorder %v588, %v590
  %v592 = vsel %vm591, %v587, inf
  %593 = vmin.xlane.f32.xlu0 %v592
  %v594 = vpop.xlane.xlu0 %593
  %v595 = vcvt.f32.s32 %v594
  %v596 = vcvt.f32.s32 %v590
  %v597 = vshll.u32 %v596, 16
  %v598 = vadd.s32 %v597, %v595
  %v599 = vsel %vm197, %v583, 2147483647
  %v600 = vrot.slane %v599, 4
  %vm601 = vcmp.lt.s32.totalorder %v599, %v600
  %v602 = vsel %vm601, %v599, %v600
  %v603 = vrot.slane %v602, 2
  %vm604 = vcmp.lt.s32.totalorder %v602, %v603
  %v605 = vsel %vm604, %v602, %v603
  %v606 = vrot.slane %v605, 1
  %vm607 = vcmp.lt.s32.totalorder %v605, %v606
  %v608 = vsel %vm607, %v605, %v606
  %v609 = vsel %vm197, %v598, 2147483647
  %v610 = vrot.slane %v609, 4
  %vm611 = vcmp.lt.s32.totalorder %v609, %v610
  %v612 = vsel %vm611, %v609, %v610
  %v613 = vrot.slane %v612, 2
  %vm614 = vcmp.lt.s32.totalorder %v612, %v613
  %v615 = vsel %vm614, %v612, %v613
  %v616 = vrot.slane %v615, 1
  %vm617 = vcmp.lt.s32.totalorder %v615, %v616
  %v618 = vsel %vm617, %v615, %v616
  %v619 = vsel %vm544, 1, 0
  %vm620 = vcmp.eq.s32.totalorder %v619, 1
  %v623 = vsel %vm276, %v564, %v557
  %v625 = vsel %vm620, %v623, %v452
  %v626 = vsel %vm276, %v618, %v608
  %v627 = vsel %vm620, %v626, %v454
  %vm628 = vcmp.eq.s32.totalorder %v194, %v608
  %vm629 = vcmp.eq.s32.totalorder %v194, %v618
  %v630 = vsel %vm628, -inf, %v457
  %v631 = vsel %vm629, -inf, %v458
  %v632 = vsel %vm197, %v542, -inf
  %633 = vmax.xlane.f32.xlu0 %v632
  %v634 = vpop.xlane.xlu0 %633
  %v635 = vsel %vm197, %v543, -inf
  %636 = vmax.xlane.f32.xlu0 %v635
  %v637 = vpop.xlane.xlu0 %636
  %v638 = vsel %vm197, %v634, -inf
  %v639 = vrot.slane %v638, 4
  %v640 = vmax.f32 %v638, %v639
  %v641 = vrot.slane %v640, 2
  %v642 = vmax.f32 %v640, %v641
  %v643 = vrot.slane %v642, 1
  %v644 = vmax.f32 %v642, %v643
  %v645 = vsel %vm197, %v637, -inf
  %v646 = vrot.slane %v645, 4
  %v647 = vmax.f32 %v645, %v646
  %v648 = vrot.slane %v647, 2
  %v649 = vmax.f32 %v647, %v648
  %v650 = vrot.slane %v649, 1
  %v651 = vmax.f32 %v649, %v650
  %vm652 = vcmp.ge.f32.partialorder %v542, %v644
  %vm653 = vcmp.ge.f32.partialorder %v543, %v651
  %v654 = vsel %vm652, %v195, 768
  %v655 = vsel %vm653, %v195, 768
  %v656 = vsel %vm197, %v654, 2147483647
  %v657 = vand.u32 %v656, 65535
  %v658 = vshra.s32 %v656, 16
  %v659 = vcvt.s32.f32 %v657
  %v660 = vcvt.s32.f32 %v658
  %661 = vmin.xlane.f32.xlu0 %v660
  %v662 = vpop.xlane.xlu0 %661
  %vm663 = vcmp.eq.f32.partialorder %v660, %v662
  %v664 = vsel %vm663, %v659, inf
  %665 = vmin.xlane.f32.xlu0 %v664
  %v666 = vpop.xlane.xlu0 %665
  %v667 = vcvt.f32.s32 %v666
  %v668 = vcvt.f32.s32 %v662
  %v669 = vshll.u32 %v668, 16
  %v670 = vadd.s32 %v669, %v667
  %v671 = vsel %vm197, %v655, 2147483647
  %v672 = vand.u32 %v671, 65535
  %v673 = vshra.s32 %v671, 16
  %v674 = vcvt.s32.f32 %v672
  %v675 = vcvt.s32.f32 %v673
  %676 = vmin.xlane.f32.xlu0 %v675
  %v677 = vpop.xlane.xlu0 %676
  %vm678 = vcmp.eq.f32.partialorder %v675, %v677
  %v679 = vsel %vm678, %v674, inf
  %680 = vmin.xlane.f32.xlu0 %v679
  %v681 = vpop.xlane.xlu0 %680
  %v682 = vcvt.f32.s32 %v681
  %v683 = vcvt.f32.s32 %v677
  %v684 = vshll.u32 %v683, 16
  %v685 = vadd.s32 %v684, %v682
  %v686 = vsel %vm197, %v670, 2147483647
  %v687 = vrot.slane %v686, 4
  %vm688 = vcmp.lt.s32.totalorder %v686, %v687
  %v689 = vsel %vm688, %v686, %v687
  %v690 = vrot.slane %v689, 2
  %vm691 = vcmp.lt.s32.totalorder %v689, %v690
  %v692 = vsel %vm691, %v689, %v690
  %v693 = vrot.slane %v692, 1
  %vm694 = vcmp.lt.s32.totalorder %v692, %v693
  %v695 = vsel %vm694, %v692, %v693
  %v696 = vsel %vm197, %v685, 2147483647
  %v697 = vrot.slane %v696, 4
  %vm698 = vcmp.lt.s32.totalorder %v696, %v697
  %v699 = vsel %vm698, %v696, %v697
  %v700 = vrot.slane %v699, 2
  %vm701 = vcmp.lt.s32.totalorder %v699, %v700
  %v702 = vsel %vm701, %v699, %v700
  %v703 = vrot.slane %v702, 1
  %vm704 = vcmp.lt.s32.totalorder %v702, %v703
  %v705 = vsel %vm704, %v702, %v703
  %v708 = vsel %vm276, %v651, %v644
  %v710 = vsel %vm620, %v708, %v537
  %v711 = vsel %vm276, %v705, %v695
  %v712 = vsel %vm620, %v711, %v539
  %vm713 = vcmp.eq.s32.totalorder %v195, %v695
  %vm714 = vcmp.eq.s32.totalorder %v195, %v705
  %v715 = vsel %vm713, -inf, %v542
  %v716 = vsel %vm714, -inf, %v543
  %vm717 = vcmp.eq.s32.totalorder %v14, 3
  %v718 = vsel %vm197, %v630, -inf
  %719 = vmax.xlane.f32.xlu0 %v718
  %v720 = vpop.xlane.xlu0 %719
  %v721 = vsel %vm197, %v631, -inf
  %722 = vmax.xlane.f32.xlu0 %v721
  %v723 = vpop.xlane.xlu0 %722
  %v724 = vsel %vm197, %v720, -inf
  %v725 = vrot.slane %v724, 4
  %v726 = vmax.f32 %v724, %v725
  %v727 = vrot.slane %v726, 2
  %v728 = vmax.f32 %v726, %v727
  %v729 = vrot.slane %v728, 1
  %v730 = vmax.f32 %v728, %v729
  %v731 = vsel %vm197, %v723, -inf
  %v732 = vrot.slane %v731, 4
  %v733 = vmax.f32 %v731, %v732
  %v734 = vrot.slane %v733, 2
  %v735 = vmax.f32 %v733, %v734
  %v736 = vrot.slane %v735, 1
  %v737 = vmax.f32 %v735, %v736
  %vm738 = vcmp.ge.f32.partialorder %v630, %v730
  %vm739 = vcmp.ge.f32.partialorder %v631, %v737
  %v740 = vsel %vm738, %v194, 768
  %v741 = vsel %vm739, %v194, 768
  %v742 = vsel %vm197, %v740, 2147483647
  %v743 = vand.u32 %v742, 65535
  %v744 = vshra.s32 %v742, 16
  %v745 = vcvt.s32.f32 %v743
  %v746 = vcvt.s32.f32 %v744
  %747 = vmin.xlane.f32.xlu0 %v746
  %v748 = vpop.xlane.xlu0 %747
  %vm749 = vcmp.eq.f32.partialorder %v746, %v748
  %v750 = vsel %vm749, %v745, inf
  %751 = vmin.xlane.f32.xlu0 %v750
  %v752 = vpop.xlane.xlu0 %751
  %v753 = vcvt.f32.s32 %v752
  %v754 = vcvt.f32.s32 %v748
  %v755 = vshll.u32 %v754, 16
  %v756 = vadd.s32 %v755, %v753
  %v757 = vsel %vm197, %v741, 2147483647
  %v758 = vand.u32 %v757, 65535
  %v759 = vshra.s32 %v757, 16
  %v760 = vcvt.s32.f32 %v758
  %v761 = vcvt.s32.f32 %v759
  %762 = vmin.xlane.f32.xlu0 %v761
  %v763 = vpop.xlane.xlu0 %762
  %vm764 = vcmp.eq.f32.partialorder %v761, %v763
  %v765 = vsel %vm764, %v760, inf
  %766 = vmin.xlane.f32.xlu0 %v765
  %v767 = vpop.xlane.xlu0 %766
  %v768 = vcvt.f32.s32 %v767
  %v769 = vcvt.f32.s32 %v763
  %v770 = vshll.u32 %v769, 16
  %v771 = vadd.s32 %v770, %v768
  %v772 = vsel %vm197, %v756, 2147483647
  %v773 = vrot.slane %v772, 4
  %vm774 = vcmp.lt.s32.totalorder %v772, %v773
  %v775 = vsel %vm774, %v772, %v773
  %v776 = vrot.slane %v775, 2
  %vm777 = vcmp.lt.s32.totalorder %v775, %v776
  %v778 = vsel %vm777, %v775, %v776
  %v779 = vrot.slane %v778, 1
  %vm780 = vcmp.lt.s32.totalorder %v778, %v779
  %v781 = vsel %vm780, %v778, %v779
  %v782 = vsel %vm197, %v771, 2147483647
  %v783 = vrot.slane %v782, 4
  %vm784 = vcmp.lt.s32.totalorder %v782, %v783
  %v785 = vsel %vm784, %v782, %v783
  %v786 = vrot.slane %v785, 2
  %vm787 = vcmp.lt.s32.totalorder %v785, %v786
  %v788 = vsel %vm787, %v785, %v786
  %v789 = vrot.slane %v788, 1
  %vm790 = vcmp.lt.s32.totalorder %v788, %v789
  %v791 = vsel %vm790, %v788, %v789
  %v792 = vsel %vm717, 1, 0
  %vm793 = vcmp.eq.s32.totalorder %v792, 1
  %v796 = vsel %vm276, %v737, %v730
  %v798 = vsel %vm793, %v796, %v625
  %v799 = vsel %vm276, %v791, %v781
  %v800 = vsel %vm793, %v799, %v627
  %vm801 = vcmp.eq.s32.totalorder %v194, %v781
  %vm802 = vcmp.eq.s32.totalorder %v194, %v791
  %v803 = vsel %vm801, -inf, %v630
  %v804 = vsel %vm802, -inf, %v631
  %v805 = vsel %vm197, %v715, -inf
  %806 = vmax.xlane.f32.xlu0 %v805
  %v807 = vpop.xlane.xlu0 %806
  %v808 = vsel %vm197, %v716, -inf
  %809 = vmax.xlane.f32.xlu0 %v808
  %v810 = vpop.xlane.xlu0 %809
  %v811 = vsel %vm197, %v807, -inf
  %v812 = vrot.slane %v811, 4
  %v813 = vmax.f32 %v811, %v812
  %v814 = vrot.slane %v813, 2
  %v815 = vmax.f32 %v813, %v814
  %v816 = vrot.slane %v815, 1
  %v817 = vmax.f32 %v815, %v816
  %v818 = vsel %vm197, %v810, -inf
  %v819 = vrot.slane %v818, 4
  %v820 = vmax.f32 %v818, %v819
  %v821 = vrot.slane %v820, 2
  %v822 = vmax.f32 %v820, %v821
  %v823 = vrot.slane %v822, 1
  %v824 = vmax.f32 %v822, %v823
  %vm825 = vcmp.ge.f32.partialorder %v715, %v817
  %vm826 = vcmp.ge.f32.partialorder %v716, %v824
  %v827 = vsel %vm825, %v195, 768
  %v828 = vsel %vm826, %v195, 768
  %v829 = vsel %vm197, %v827, 2147483647
  %v830 = vand.u32 %v829, 65535
  %v831 = vshra.s32 %v829, 16
  %v832 = vcvt.s32.f32 %v830
  %v833 = vcvt.s32.f32 %v831
  %834 = vmin.xlane.f32.xlu0 %v833
  %v835 = vpop.xlane.xlu0 %834
  %vm836 = vcmp.eq.f32.partialorder %v833, %v835
  %v837 = vsel %vm836, %v832, inf
  %838 = vmin.xlane.f32.xlu0 %v837
  %v839 = vpop.xlane.xlu0 %838
  %v840 = vcvt.f32.s32 %v839
  %v841 = vcvt.f32.s32 %v835
  %v842 = vshll.u32 %v841, 16
  %v843 = vadd.s32 %v842, %v840
  %v844 = vsel %vm197, %v828, 2147483647
  %v845 = vand.u32 %v844, 65535
  %v846 = vshra.s32 %v844, 16
  %v847 = vcvt.s32.f32 %v845
  %v848 = vcvt.s32.f32 %v846
  %849 = vmin.xlane.f32.xlu0 %v848
  %v850 = vpop.xlane.xlu0 %849
  %vm851 = vcmp.eq.f32.partialorder %v848, %v850
  %v852 = vsel %vm851, %v847, inf
  %853 = vmin.xlane.f32.xlu0 %v852
  %v854 = vpop.xlane.xlu0 %853
  %v855 = vcvt.f32.s32 %v854
  %v856 = vcvt.f32.s32 %v850
  %v857 = vshll.u32 %v856, 16
  %v858 = vadd.s32 %v857, %v855
  %v859 = vsel %vm197, %v843, 2147483647
  %v860 = vrot.slane %v859, 4
  %vm861 = vcmp.lt.s32.totalorder %v859, %v860
  %v862 = vsel %vm861, %v859, %v860
  %v863 = vrot.slane %v862, 2
  %vm864 = vcmp.lt.s32.totalorder %v862, %v863
  %v865 = vsel %vm864, %v862, %v863
  %v866 = vrot.slane %v865, 1
  %vm867 = vcmp.lt.s32.totalorder %v865, %v866
  %v868 = vsel %vm867, %v865, %v866
  %v869 = vsel %vm197, %v858, 2147483647
  %v870 = vrot.slane %v869, 4
  %vm871 = vcmp.lt.s32.totalorder %v869, %v870
  %v872 = vsel %vm871, %v869, %v870
  %v873 = vrot.slane %v872, 2
  %vm874 = vcmp.lt.s32.totalorder %v872, %v873
  %v875 = vsel %vm874, %v872, %v873
  %v876 = vrot.slane %v875, 1
  %vm877 = vcmp.lt.s32.totalorder %v875, %v876
  %v878 = vsel %vm877, %v875, %v876
  %v881 = vsel %vm276, %v824, %v817
  %v883 = vsel %vm793, %v881, %v710
  %v884 = vsel %vm276, %v878, %v868
  %v885 = vsel %vm793, %v884, %v712
  %vm886 = vcmp.eq.s32.totalorder %v195, %v868
  %vm887 = vcmp.eq.s32.totalorder %v195, %v878
  %v888 = vsel %vm886, -inf, %v715
  %v889 = vsel %vm887, -inf, %v716
  %vm890 = vcmp.eq.s32.totalorder %v14, 4
  %v891 = vsel %vm197, %v803, -inf
  %892 = vmax.xlane.f32.xlu0 %v891
  %v893 = vpop.xlane.xlu0 %892
  %v894 = vsel %vm197, %v804, -inf
  %895 = vmax.xlane.f32.xlu0 %v894
  %v896 = vpop.xlane.xlu0 %895
  %v897 = vsel %vm197, %v893, -inf
  %v898 = vrot.slane %v897, 4
  %v899 = vmax.f32 %v897, %v898
  %v900 = vrot.slane %v899, 2
  %v901 = vmax.f32 %v899, %v900
  %v902 = vrot.slane %v901, 1
  %v903 = vmax.f32 %v901, %v902
  %v904 = vsel %vm197, %v896, -inf
  %v905 = vrot.slane %v904, 4
  %v906 = vmax.f32 %v904, %v905
  %v907 = vrot.slane %v906, 2
  %v908 = vmax.f32 %v906, %v907
  %v909 = vrot.slane %v908, 1
  %v910 = vmax.f32 %v908, %v909
  %vm911 = vcmp.ge.f32.partialorder %v803, %v903
  %vm912 = vcmp.ge.f32.partialorder %v804, %v910
  %v913 = vsel %vm911, %v194, 768
  %v914 = vsel %vm912, %v194, 768
  %v915 = vsel %vm197, %v913, 2147483647
  %v916 = vand.u32 %v915, 65535
  %v917 = vshra.s32 %v915, 16
  %v918 = vcvt.s32.f32 %v916
  %v919 = vcvt.s32.f32 %v917
  %920 = vmin.xlane.f32.xlu0 %v919
  %v921 = vpop.xlane.xlu0 %920
  %vm922 = vcmp.eq.f32.partialorder %v919, %v921
  %v923 = vsel %vm922, %v918, inf
  %924 = vmin.xlane.f32.xlu0 %v923
  %v925 = vpop.xlane.xlu0 %924
  %v926 = vcvt.f32.s32 %v925
  %v927 = vcvt.f32.s32 %v921
  %v928 = vshll.u32 %v927, 16
  %v929 = vadd.s32 %v928, %v926
  %v930 = vsel %vm197, %v914, 2147483647
  %v931 = vand.u32 %v930, 65535
  %v932 = vshra.s32 %v930, 16
  %v933 = vcvt.s32.f32 %v931
  %v934 = vcvt.s32.f32 %v932
  %935 = vmin.xlane.f32.xlu0 %v934
  %v936 = vpop.xlane.xlu0 %935
  %vm937 = vcmp.eq.f32.partialorder %v934, %v936
  %v938 = vsel %vm937, %v933, inf
  %939 = vmin.xlane.f32.xlu0 %v938
  %v940 = vpop.xlane.xlu0 %939
  %v941 = vcvt.f32.s32 %v940
  %v942 = vcvt.f32.s32 %v936
  %v943 = vshll.u32 %v942, 16
  %v944 = vadd.s32 %v943, %v941
  %v945 = vsel %vm197, %v929, 2147483647
  %v946 = vrot.slane %v945, 4
  %vm947 = vcmp.lt.s32.totalorder %v945, %v946
  %v948 = vsel %vm947, %v945, %v946
  %v949 = vrot.slane %v948, 2
  %vm950 = vcmp.lt.s32.totalorder %v948, %v949
  %v951 = vsel %vm950, %v948, %v949
  %v952 = vrot.slane %v951, 1
  %vm953 = vcmp.lt.s32.totalorder %v951, %v952
  %v954 = vsel %vm953, %v951, %v952
  %v955 = vsel %vm197, %v944, 2147483647
  %v956 = vrot.slane %v955, 4
  %vm957 = vcmp.lt.s32.totalorder %v955, %v956
  %v958 = vsel %vm957, %v955, %v956
  %v959 = vrot.slane %v958, 2
  %vm960 = vcmp.lt.s32.totalorder %v958, %v959
  %v961 = vsel %vm960, %v958, %v959
  %v962 = vrot.slane %v961, 1
  %vm963 = vcmp.lt.s32.totalorder %v961, %v962
  %v964 = vsel %vm963, %v961, %v962
  %v965 = vsel %vm890, 1, 0
  %vm966 = vcmp.eq.s32.totalorder %v965, 1
  %v969 = vsel %vm276, %v910, %v903
  %v971 = vsel %vm966, %v969, %v798
  %v972 = vsel %vm276, %v964, %v954
  %v973 = vsel %vm966, %v972, %v800
  %vm974 = vcmp.eq.s32.totalorder %v194, %v954
  %vm975 = vcmp.eq.s32.totalorder %v194, %v964
  %v976 = vsel %vm974, -inf, %v803
  %v977 = vsel %vm975, -inf, %v804
  %v978 = vsel %vm197, %v888, -inf
  %979 = vmax.xlane.f32.xlu0 %v978
  %v980 = vpop.xlane.xlu0 %979
  %v981 = vsel %vm197, %v889, -inf
  %982 = vmax.xlane.f32.xlu0 %v981
  %v983 = vpop.xlane.xlu0 %982
  %v984 = vsel %vm197, %v980, -inf
  %v985 = vrot.slane %v984, 4
  %v986 = vmax.f32 %v984, %v985
  %v987 = vrot.slane %v986, 2
  %v988 = vmax.f32 %v986, %v987
  %v989 = vrot.slane %v988, 1
  %v990 = vmax.f32 %v988, %v989
  %v991 = vsel %vm197, %v983, -inf
  %v992 = vrot.slane %v991, 4
  %v993 = vmax.f32 %v991, %v992
  %v994 = vrot.slane %v993, 2
  %v995 = vmax.f32 %v993, %v994
  %v996 = vrot.slane %v995, 1
  %v997 = vmax.f32 %v995, %v996
  %vm998 = vcmp.ge.f32.partialorder %v888, %v990
  %vm999 = vcmp.ge.f32.partialorder %v889, %v997
  %v1000 = vsel %vm998, %v195, 768
  %v1001 = vsel %vm999, %v195, 768
  %v1002 = vsel %vm197, %v1000, 2147483647
  %v1003 = vand.u32 %v1002, 65535
  %v1004 = vshra.s32 %v1002, 16
  %v1005 = vcvt.s32.f32 %v1003
  %v1006 = vcvt.s32.f32 %v1004
  %1007 = vmin.xlane.f32.xlu0 %v1006
  %v1008 = vpop.xlane.xlu0 %1007
  %vm1009 = vcmp.eq.f32.partialorder %v1006, %v1008
  %v1010 = vsel %vm1009, %v1005, inf
  %1011 = vmin.xlane.f32.xlu0 %v1010
  %v1012 = vpop.xlane.xlu0 %1011
  %v1013 = vcvt.f32.s32 %v1012
  %v1014 = vcvt.f32.s32 %v1008
  %v1015 = vshll.u32 %v1014, 16
  %v1016 = vadd.s32 %v1015, %v1013
  %v1017 = vsel %vm197, %v1001, 2147483647
  %v1018 = vand.u32 %v1017, 65535
  %v1019 = vshra.s32 %v1017, 16
  %v1020 = vcvt.s32.f32 %v1018
  %v1021 = vcvt.s32.f32 %v1019
  %1022 = vmin.xlane.f32.xlu0 %v1021
  %v1023 = vpop.xlane.xlu0 %1022
  %vm1024 = vcmp.eq.f32.partialorder %v1021, %v1023
  %v1025 = vsel %vm1024, %v1020, inf
  %1026 = vmin.xlane.f32.xlu0 %v1025
  %v1027 = vpop.xlane.xlu0 %1026
  %v1028 = vcvt.f32.s32 %v1027
  %v1029 = vcvt.f32.s32 %v1023
  %v1030 = vshll.u32 %v1029, 16
  %v1031 = vadd.s32 %v1030, %v1028
  %v1032 = vsel %vm197, %v1016, 2147483647
  %v1033 = vrot.slane %v1032, 4
  %vm1034 = vcmp.lt.s32.totalorder %v1032, %v1033
  %v1035 = vsel %vm1034, %v1032, %v1033
  %v1036 = vrot.slane %v1035, 2
  %vm1037 = vcmp.lt.s32.totalorder %v1035, %v1036
  %v1038 = vsel %vm1037, %v1035, %v1036
  %v1039 = vrot.slane %v1038, 1
  %vm1040 = vcmp.lt.s32.totalorder %v1038, %v1039
  %v1041 = vsel %vm1040, %v1038, %v1039
  %v1042 = vsel %vm197, %v1031, 2147483647
  %v1043 = vrot.slane %v1042, 4
  %vm1044 = vcmp.lt.s32.totalorder %v1042, %v1043
  %v1045 = vsel %vm1044, %v1042, %v1043
  %v1046 = vrot.slane %v1045, 2
  %vm1047 = vcmp.lt.s32.totalorder %v1045, %v1046
  %v1048 = vsel %vm1047, %v1045, %v1046
  %v1049 = vrot.slane %v1048, 1
  %vm1050 = vcmp.lt.s32.totalorder %v1048, %v1049
  %v1051 = vsel %vm1050, %v1048, %v1049
  %v1054 = vsel %vm276, %v997, %v990
  %v1056 = vsel %vm966, %v1054, %v883
  %v1057 = vsel %vm276, %v1051, %v1041
  %v1058 = vsel %vm966, %v1057, %v885
  %vm1059 = vcmp.eq.s32.totalorder %v195, %v1041
  %vm1060 = vcmp.eq.s32.totalorder %v195, %v1051
  %v1061 = vsel %vm1059, -inf, %v888
  %v1062 = vsel %vm1060, -inf, %v889
  %vm1063 = vcmp.eq.s32.totalorder %v14, 5
  %v1064 = vsel %vm197, %v976, -inf
  %1065 = vmax.xlane.f32.xlu0 %v1064
  %v1066 = vpop.xlane.xlu0 %1065
  %v1067 = vsel %vm197, %v977, -inf
  %1068 = vmax.xlane.f32.xlu0 %v1067
  %v1069 = vpop.xlane.xlu0 %1068
  %v1070 = vsel %vm197, %v1066, -inf
  %v1071 = vrot.slane %v1070, 4
  %v1072 = vmax.f32 %v1070, %v1071
  %v1073 = vrot.slane %v1072, 2
  %v1074 = vmax.f32 %v1072, %v1073
  %v1075 = vrot.slane %v1074, 1
  %v1076 = vmax.f32 %v1074, %v1075
  %v1077 = vsel %vm197, %v1069, -inf
  %v1078 = vrot.slane %v1077, 4
  %v1079 = vmax.f32 %v1077, %v1078
  %v1080 = vrot.slane %v1079, 2
  %v1081 = vmax.f32 %v1079, %v1080
  %v1082 = vrot.slane %v1081, 1
  %v1083 = vmax.f32 %v1081, %v1082
  %vm1084 = vcmp.ge.f32.partialorder %v976, %v1076
  %vm1085 = vcmp.ge.f32.partialorder %v977, %v1083
  %v1086 = vsel %vm1084, %v194, 768
  %v1087 = vsel %vm1085, %v194, 768
  %v1088 = vsel %vm197, %v1086, 2147483647
  %v1089 = vand.u32 %v1088, 65535
  %v1090 = vshra.s32 %v1088, 16
  %v1091 = vcvt.s32.f32 %v1089
  %v1092 = vcvt.s32.f32 %v1090
  %1093 = vmin.xlane.f32.xlu0 %v1092
  %v1094 = vpop.xlane.xlu0 %1093
  %vm1095 = vcmp.eq.f32.partialorder %v1092, %v1094
  %v1096 = vsel %vm1095, %v1091, inf
  %1097 = vmin.xlane.f32.xlu0 %v1096
  %v1098 = vpop.xlane.xlu0 %1097
  %v1099 = vcvt.f32.s32 %v1098
  %v1100 = vcvt.f32.s32 %v1094
  %v1101 = vshll.u32 %v1100, 16
  %v1102 = vadd.s32 %v1101, %v1099
  %v1103 = vsel %vm197, %v1087, 2147483647
  %v1104 = vand.u32 %v1103, 65535
  %v1105 = vshra.s32 %v1103, 16
  %v1106 = vcvt.s32.f32 %v1104
  %v1107 = vcvt.s32.f32 %v1105
  %1108 = vmin.xlane.f32.xlu0 %v1107
  %v1109 = vpop.xlane.xlu0 %1108
  %vm1110 = vcmp.eq.f32.partialorder %v1107, %v1109
  %v1111 = vsel %vm1110, %v1106, inf
  %1112 = vmin.xlane.f32.xlu0 %v1111
  %v1113 = vpop.xlane.xlu0 %1112
  %v1114 = vcvt.f32.s32 %v1113
  %v1115 = vcvt.f32.s32 %v1109
  %v1116 = vshll.u32 %v1115, 16
  %v1117 = vadd.s32 %v1116, %v1114
  %v1118 = vsel %vm197, %v1102, 2147483647
  %v1119 = vrot.slane %v1118, 4
  %vm1120 = vcmp.lt.s32.totalorder %v1118, %v1119
  %v1121 = vsel %vm1120, %v1118, %v1119
  %v1122 = vrot.slane %v1121, 2
  %vm1123 = vcmp.lt.s32.totalorder %v1121, %v1122
  %v1124 = vsel %vm1123, %v1121, %v1122
  %v1125 = vrot.slane %v1124, 1
  %vm1126 = vcmp.lt.s32.totalorder %v1124, %v1125
  %v1127 = vsel %vm1126, %v1124, %v1125
  %v1128 = vsel %vm197, %v1117, 2147483647
  %v1129 = vrot.slane %v1128, 4
  %vm1130 = vcmp.lt.s32.totalorder %v1128, %v1129
  %v1131 = vsel %vm1130, %v1128, %v1129
  %v1132 = vrot.slane %v1131, 2
  %vm1133 = vcmp.lt.s32.totalorder %v1131, %v1132
  %v1134 = vsel %vm1133, %v1131, %v1132
  %v1135 = vrot.slane %v1134, 1
  %vm1136 = vcmp.lt.s32.totalorder %v1134, %v1135
  %v1137 = vsel %vm1136, %v1134, %v1135
  %v1138 = vsel %vm1063, 1, 0
  %vm1139 = vcmp.eq.s32.totalorder %v1138, 1
  %v1142 = vsel %vm276, %v1083, %v1076
  %v1144 = vsel %vm1139, %v1142, %v971
  %v1145 = vsel %vm276, %v1137, %v1127
  %v1146 = vsel %vm1139, %v1145, %v973
  %vm1147 = vcmp.eq.s32.totalorder %v194, %v1127
  %vm1148 = vcmp.eq.s32.totalorder %v194, %v1137
  %v1149 = vsel %vm1147, -inf, %v976
  %v1150 = vsel %vm1148, -inf, %v977
  %v1151 = vsel %vm197, %v1061, -inf
  %1152 = vmax.xlane.f32.xlu0 %v1151
  %v1153 = vpop.xlane.xlu0 %1152
  %v1154 = vsel %vm197, %v1062, -inf
  %1155 = vmax.xlane.f32.xlu0 %v1154
  %v1156 = vpop.xlane.xlu0 %1155
  %v1157 = vsel %vm197, %v1153, -inf
  %v1158 = vrot.slane %v1157, 4
  %v1159 = vmax.f32 %v1157, %v1158
  %v1160 = vrot.slane %v1159, 2
  %v1161 = vmax.f32 %v1159, %v1160
  %v1162 = vrot.slane %v1161, 1
  %v1163 = vmax.f32 %v1161, %v1162
  %v1164 = vsel %vm197, %v1156, -inf
  %v1165 = vrot.slane %v1164, 4
  %v1166 = vmax.f32 %v1164, %v1165
  %v1167 = vrot.slane %v1166, 2
  %v1168 = vmax.f32 %v1166, %v1167
  %v1169 = vrot.slane %v1168, 1
  %v1170 = vmax.f32 %v1168, %v1169
  %vm1171 = vcmp.ge.f32.partialorder %v1061, %v1163
  %vm1172 = vcmp.ge.f32.partialorder %v1062, %v1170
  %v1173 = vsel %vm1171, %v195, 768
  %v1174 = vsel %vm1172, %v195, 768
  %v1175 = vsel %vm197, %v1173, 2147483647
  %v1176 = vand.u32 %v1175, 65535
  %v1177 = vshra.s32 %v1175, 16
  %v1178 = vcvt.s32.f32 %v1176
  %v1179 = vcvt.s32.f32 %v1177
  %1180 = vmin.xlane.f32.xlu0 %v1179
  %v1181 = vpop.xlane.xlu0 %1180
  %vm1182 = vcmp.eq.f32.partialorder %v1179, %v1181
  %v1183 = vsel %vm1182, %v1178, inf
  %1184 = vmin.xlane.f32.xlu0 %v1183
  %v1185 = vpop.xlane.xlu0 %1184
  %v1186 = vcvt.f32.s32 %v1185
  %v1187 = vcvt.f32.s32 %v1181
  %v1188 = vshll.u32 %v1187, 16
  %v1189 = vadd.s32 %v1188, %v1186
  %v1190 = vsel %vm197, %v1174, 2147483647
  %v1191 = vand.u32 %v1190, 65535
  %v1192 = vshra.s32 %v1190, 16
  %v1193 = vcvt.s32.f32 %v1191
  %v1194 = vcvt.s32.f32 %v1192
  %1195 = vmin.xlane.f32.xlu0 %v1194
  %v1196 = vpop.xlane.xlu0 %1195
  %vm1197 = vcmp.eq.f32.partialorder %v1194, %v1196
  %v1198 = vsel %vm1197, %v1193, inf
  %1199 = vmin.xlane.f32.xlu0 %v1198
  %v1200 = vpop.xlane.xlu0 %1199
  %v1201 = vcvt.f32.s32 %v1200
  %v1202 = vcvt.f32.s32 %v1196
  %v1203 = vshll.u32 %v1202, 16
  %v1204 = vadd.s32 %v1203, %v1201
  %v1205 = vsel %vm197, %v1189, 2147483647
  %v1206 = vrot.slane %v1205, 4
  %vm1207 = vcmp.lt.s32.totalorder %v1205, %v1206
  %v1208 = vsel %vm1207, %v1205, %v1206
  %v1209 = vrot.slane %v1208, 2
  %vm1210 = vcmp.lt.s32.totalorder %v1208, %v1209
  %v1211 = vsel %vm1210, %v1208, %v1209
  %v1212 = vrot.slane %v1211, 1
  %vm1213 = vcmp.lt.s32.totalorder %v1211, %v1212
  %v1214 = vsel %vm1213, %v1211, %v1212
  %v1215 = vsel %vm197, %v1204, 2147483647
  %v1216 = vrot.slane %v1215, 4
  %vm1217 = vcmp.lt.s32.totalorder %v1215, %v1216
  %v1218 = vsel %vm1217, %v1215, %v1216
  %v1219 = vrot.slane %v1218, 2
  %vm1220 = vcmp.lt.s32.totalorder %v1218, %v1219
  %v1221 = vsel %vm1220, %v1218, %v1219
  %v1222 = vrot.slane %v1221, 1
  %vm1223 = vcmp.lt.s32.totalorder %v1221, %v1222
  %v1224 = vsel %vm1223, %v1221, %v1222
  %v1227 = vsel %vm276, %v1170, %v1163
  %v1229 = vsel %vm1139, %v1227, %v1056
  %v1230 = vsel %vm276, %v1224, %v1214
  %v1231 = vsel %vm1139, %v1230, %v1058
  %vm1232 = vcmp.eq.s32.totalorder %v195, %v1214
  %vm1233 = vcmp.eq.s32.totalorder %v195, %v1224
  %v1234 = vsel %vm1232, -inf, %v1061
  %v1235 = vsel %vm1233, -inf, %v1062
  %vm1236 = vcmp.eq.s32.totalorder %v14, 6
  %v1237 = vsel %vm197, %v1149, -inf
  %1238 = vmax.xlane.f32.xlu0 %v1237
  %v1239 = vpop.xlane.xlu0 %1238
  %v1240 = vsel %vm197, %v1150, -inf
  %1241 = vmax.xlane.f32.xlu0 %v1240
  %v1242 = vpop.xlane.xlu0 %1241
  %v1243 = vsel %vm197, %v1239, -inf
  %v1244 = vrot.slane %v1243, 4
  %v1245 = vmax.f32 %v1243, %v1244
  %v1246 = vrot.slane %v1245, 2
  %v1247 = vmax.f32 %v1245, %v1246
  %v1248 = vrot.slane %v1247, 1
  %v1249 = vmax.f32 %v1247, %v1248
  %v1250 = vsel %vm197, %v1242, -inf
  %v1251 = vrot.slane %v1250, 4
  %v1252 = vmax.f32 %v1250, %v1251
  %v1253 = vrot.slane %v1252, 2
  %v1254 = vmax.f32 %v1252, %v1253
  %v1255 = vrot.slane %v1254, 1
  %v1256 = vmax.f32 %v1254, %v1255
  %vm1257 = vcmp.ge.f32.partialorder %v1149, %v1249
  %vm1258 = vcmp.ge.f32.partialorder %v1150, %v1256
  %v1259 = vsel %vm1257, %v194, 768
  %v1260 = vsel %vm1258, %v194, 768
  %v1261 = vsel %vm197, %v1259, 2147483647
  %v1262 = vand.u32 %v1261, 65535
  %v1263 = vshra.s32 %v1261, 16
  %v1264 = vcvt.s32.f32 %v1262
  %v1265 = vcvt.s32.f32 %v1263
  %1266 = vmin.xlane.f32.xlu0 %v1265
  %v1267 = vpop.xlane.xlu0 %1266
  %vm1268 = vcmp.eq.f32.partialorder %v1265, %v1267
  %v1269 = vsel %vm1268, %v1264, inf
  %1270 = vmin.xlane.f32.xlu0 %v1269
  %v1271 = vpop.xlane.xlu0 %1270
  %v1272 = vcvt.f32.s32 %v1271
  %v1273 = vcvt.f32.s32 %v1267
  %v1274 = vshll.u32 %v1273, 16
  %v1275 = vadd.s32 %v1274, %v1272
  %v1276 = vsel %vm197, %v1260, 2147483647
  %v1277 = vand.u32 %v1276, 65535
  %v1278 = vshra.s32 %v1276, 16
  %v1279 = vcvt.s32.f32 %v1277
  %v1280 = vcvt.s32.f32 %v1278
  %1281 = vmin.xlane.f32.xlu0 %v1280
  %v1282 = vpop.xlane.xlu0 %1281
  %vm1283 = vcmp.eq.f32.partialorder %v1280, %v1282
  %v1284 = vsel %vm1283, %v1279, inf
  %1285 = vmin.xlane.f32.xlu0 %v1284
  %v1286 = vpop.xlane.xlu0 %1285
  %v1287 = vcvt.f32.s32 %v1286
  %v1288 = vcvt.f32.s32 %v1282
  %v1289 = vshll.u32 %v1288, 16
  %v1290 = vadd.s32 %v1289, %v1287
  %v1291 = vsel %vm197, %v1275, 2147483647
  %v1292 = vrot.slane %v1291, 4
  %vm1293 = vcmp.lt.s32.totalorder %v1291, %v1292
  %v1294 = vsel %vm1293, %v1291, %v1292
  %v1295 = vrot.slane %v1294, 2
  %vm1296 = vcmp.lt.s32.totalorder %v1294, %v1295
  %v1297 = vsel %vm1296, %v1294, %v1295
  %v1298 = vrot.slane %v1297, 1
  %vm1299 = vcmp.lt.s32.totalorder %v1297, %v1298
  %v1300 = vsel %vm1299, %v1297, %v1298
  %v1301 = vsel %vm197, %v1290, 2147483647
  %v1302 = vrot.slane %v1301, 4
  %vm1303 = vcmp.lt.s32.totalorder %v1301, %v1302
  %v1304 = vsel %vm1303, %v1301, %v1302
  %v1305 = vrot.slane %v1304, 2
  %vm1306 = vcmp.lt.s32.totalorder %v1304, %v1305
  %v1307 = vsel %vm1306, %v1304, %v1305
  %v1308 = vrot.slane %v1307, 1
  %vm1309 = vcmp.lt.s32.totalorder %v1307, %v1308
  %v1310 = vsel %vm1309, %v1307, %v1308
  %v1311 = vsel %vm1236, 1, 0
  %vm1312 = vcmp.eq.s32.totalorder %v1311, 1
  %v1315 = vsel %vm276, %v1256, %v1249
  %v1317 = vsel %vm1312, %v1315, %v1144
  %v1318 = vsel %vm276, %v1310, %v1300
  %v1319 = vsel %vm1312, %v1318, %v1146
  %vm1320 = vcmp.eq.s32.totalorder %v194, %v1300
  %vm1321 = vcmp.eq.s32.totalorder %v194, %v1310
  %v1322 = vsel %vm1320, -inf, %v1149
  %v1323 = vsel %vm1321, -inf, %v1150
  %v1324 = vsel %vm197, %v1234, -inf
  %1325 = vmax.xlane.f32.xlu0 %v1324
  %v1326 = vpop.xlane.xlu0 %1325
  %v1327 = vsel %vm197, %v1235, -inf
  %1328 = vmax.xlane.f32.xlu0 %v1327
  %v1329 = vpop.xlane.xlu0 %1328
  %v1330 = vsel %vm197, %v1326, -inf
  %v1331 = vrot.slane %v1330, 4
  %v1332 = vmax.f32 %v1330, %v1331
  %v1333 = vrot.slane %v1332, 2
  %v1334 = vmax.f32 %v1332, %v1333
  %v1335 = vrot.slane %v1334, 1
  %v1336 = vmax.f32 %v1334, %v1335
  %v1337 = vsel %vm197, %v1329, -inf
  %v1338 = vrot.slane %v1337, 4
  %v1339 = vmax.f32 %v1337, %v1338
  %v1340 = vrot.slane %v1339, 2
  %v1341 = vmax.f32 %v1339, %v1340
  %v1342 = vrot.slane %v1341, 1
  %v1343 = vmax.f32 %v1341, %v1342
  %vm1344 = vcmp.ge.f32.partialorder %v1234, %v1336
  %vm1345 = vcmp.ge.f32.partialorder %v1235, %v1343
  %v1346 = vsel %vm1344, %v195, 768
  %v1347 = vsel %vm1345, %v195, 768
  %v1348 = vsel %vm197, %v1346, 2147483647
  %v1349 = vand.u32 %v1348, 65535
  %v1350 = vshra.s32 %v1348, 16
  %v1351 = vcvt.s32.f32 %v1349
  %v1352 = vcvt.s32.f32 %v1350
  %1353 = vmin.xlane.f32.xlu0 %v1352
  %v1354 = vpop.xlane.xlu0 %1353
  %vm1355 = vcmp.eq.f32.partialorder %v1352, %v1354
  %v1356 = vsel %vm1355, %v1351, inf
  %1357 = vmin.xlane.f32.xlu0 %v1356
  %v1358 = vpop.xlane.xlu0 %1357
  %v1359 = vcvt.f32.s32 %v1358
  %v1360 = vcvt.f32.s32 %v1354
  %v1361 = vshll.u32 %v1360, 16
  %v1362 = vadd.s32 %v1361, %v1359
  %v1363 = vsel %vm197, %v1347, 2147483647
  %v1364 = vand.u32 %v1363, 65535
  %v1365 = vshra.s32 %v1363, 16
  %v1366 = vcvt.s32.f32 %v1364
  %v1367 = vcvt.s32.f32 %v1365
  %1368 = vmin.xlane.f32.xlu0 %v1367
  %v1369 = vpop.xlane.xlu0 %1368
  %vm1370 = vcmp.eq.f32.partialorder %v1367, %v1369
  %v1371 = vsel %vm1370, %v1366, inf
  %1372 = vmin.xlane.f32.xlu0 %v1371
  %v1373 = vpop.xlane.xlu0 %1372
  %v1374 = vcvt.f32.s32 %v1373
  %v1375 = vcvt.f32.s32 %v1369
  %v1376 = vshll.u32 %v1375, 16
  %v1377 = vadd.s32 %v1376, %v1374
  %v1378 = vsel %vm197, %v1362, 2147483647
  %v1379 = vrot.slane %v1378, 4
  %vm1380 = vcmp.lt.s32.totalorder %v1378, %v1379
  %v1381 = vsel %vm1380, %v1378, %v1379
  %v1382 = vrot.slane %v1381, 2
  %vm1383 = vcmp.lt.s32.totalorder %v1381, %v1382
  %v1384 = vsel %vm1383, %v1381, %v1382
  %v1385 = vrot.slane %v1384, 1
  %vm1386 = vcmp.lt.s32.totalorder %v1384, %v1385
  %v1387 = vsel %vm1386, %v1384, %v1385
  %v1388 = vsel %vm197, %v1377, 2147483647
  %v1389 = vrot.slane %v1388, 4
  %vm1390 = vcmp.lt.s32.totalorder %v1388, %v1389
  %v1391 = vsel %vm1390, %v1388, %v1389
  %v1392 = vrot.slane %v1391, 2
  %vm1393 = vcmp.lt.s32.totalorder %v1391, %v1392
  %v1394 = vsel %vm1393, %v1391, %v1392
  %v1395 = vrot.slane %v1394, 1
  %vm1396 = vcmp.lt.s32.totalorder %v1394, %v1395
  %v1397 = vsel %vm1396, %v1394, %v1395
  %v1400 = vsel %vm276, %v1343, %v1336
  %v1402 = vsel %vm1312, %v1400, %v1229
  %v1403 = vsel %vm276, %v1397, %v1387
  %v1404 = vsel %vm1312, %v1403, %v1231
  %vm1405 = vcmp.eq.s32.totalorder %v195, %v1387
  %vm1406 = vcmp.eq.s32.totalorder %v195, %v1397
  %v1407 = vsel %vm1405, -inf, %v1234
  %v1408 = vsel %vm1406, -inf, %v1235
  %vm1409 = vcmp.eq.s32.totalorder %v14, 7
  %v1410 = vsel %vm197, %v1322, -inf
  %1411 = vmax.xlane.f32.xlu0 %v1410
  %v1412 = vpop.xlane.xlu0 %1411
  %v1413 = vsel %vm197, %v1323, -inf
  %1414 = vmax.xlane.f32.xlu0 %v1413
  %v1415 = vpop.xlane.xlu0 %1414
  %v1416 = vsel %vm197, %v1412, -inf
  %v1417 = vrot.slane %v1416, 4
  %v1418 = vmax.f32 %v1416, %v1417
  %v1419 = vrot.slane %v1418, 2
  %v1420 = vmax.f32 %v1418, %v1419
  %v1421 = vrot.slane %v1420, 1
  %v1422 = vmax.f32 %v1420, %v1421
  %v1423 = vsel %vm197, %v1415, -inf
  %v1424 = vrot.slane %v1423, 4
  %v1425 = vmax.f32 %v1423, %v1424
  %v1426 = vrot.slane %v1425, 2
  %v1427 = vmax.f32 %v1425, %v1426
  %v1428 = vrot.slane %v1427, 1
  %v1429 = vmax.f32 %v1427, %v1428
  %vm1430 = vcmp.ge.f32.partialorder %v1322, %v1422
  %vm1431 = vcmp.ge.f32.partialorder %v1323, %v1429
  %v1432 = vsel %vm1430, %v194, 768
  %v1433 = vsel %vm1431, %v194, 768
  %v1434 = vsel %vm197, %v1432, 2147483647
  %v1435 = vand.u32 %v1434, 65535
  %v1436 = vshra.s32 %v1434, 16
  %v1437 = vcvt.s32.f32 %v1435
  %v1438 = vcvt.s32.f32 %v1436
  %1439 = vmin.xlane.f32.xlu0 %v1438
  %v1440 = vpop.xlane.xlu0 %1439
  %vm1441 = vcmp.eq.f32.partialorder %v1438, %v1440
  %v1442 = vsel %vm1441, %v1437, inf
  %1443 = vmin.xlane.f32.xlu0 %v1442
  %v1444 = vpop.xlane.xlu0 %1443
  %v1445 = vcvt.f32.s32 %v1444
  %v1446 = vcvt.f32.s32 %v1440
  %v1447 = vshll.u32 %v1446, 16
  %v1448 = vadd.s32 %v1447, %v1445
  %v1449 = vsel %vm197, %v1433, 2147483647
  %v1450 = vand.u32 %v1449, 65535
  %v1451 = vshra.s32 %v1449, 16
  %v1452 = vcvt.s32.f32 %v1450
  %v1453 = vcvt.s32.f32 %v1451
  %1454 = vmin.xlane.f32.xlu0 %v1453
  %v1455 = vpop.xlane.xlu0 %1454
  %vm1456 = vcmp.eq.f32.partialorder %v1453, %v1455
  %v1457 = vsel %vm1456, %v1452, inf
  %1458 = vmin.xlane.f32.xlu0 %v1457
  %v1459 = vpop.xlane.xlu0 %1458
  %v1460 = vcvt.f32.s32 %v1459
  %v1461 = vcvt.f32.s32 %v1455
  %v1462 = vshll.u32 %v1461, 16
  %v1463 = vadd.s32 %v1462, %v1460
  %v1464 = vsel %vm197, %v1448, 2147483647
  %v1465 = vrot.slane %v1464, 4
  %vm1466 = vcmp.lt.s32.totalorder %v1464, %v1465
  %v1467 = vsel %vm1466, %v1464, %v1465
  %v1468 = vrot.slane %v1467, 2
  %vm1469 = vcmp.lt.s32.totalorder %v1467, %v1468
  %v1470 = vsel %vm1469, %v1467, %v1468
  %v1471 = vrot.slane %v1470, 1
  %vm1472 = vcmp.lt.s32.totalorder %v1470, %v1471
  %v1473 = vsel %vm1472, %v1470, %v1471
  %v1474 = vsel %vm197, %v1463, 2147483647
  %v1475 = vrot.slane %v1474, 4
  %vm1476 = vcmp.lt.s32.totalorder %v1474, %v1475
  %v1477 = vsel %vm1476, %v1474, %v1475
  %v1478 = vrot.slane %v1477, 2
  %vm1479 = vcmp.lt.s32.totalorder %v1477, %v1478
  %v1480 = vsel %vm1479, %v1477, %v1478
  %v1481 = vrot.slane %v1480, 1
  %vm1482 = vcmp.lt.s32.totalorder %v1480, %v1481
  %v1483 = vsel %vm1482, %v1480, %v1481
  %v1484 = vsel %vm1409, 1, 0
  %vm1485 = vcmp.eq.s32.totalorder %v1484, 1
  %v1488 = vsel %vm276, %v1429, %v1422
  %v1490 = vsel %vm1485, %v1488, %v1317
  %v1491 = vsel %vm276, %v1483, %v1473
  %v1492 = vsel %vm1485, %v1491, %v1319
  %v1493 = vsel %vm197, %v1407, -inf
  %1494 = vmax.xlane.f32.xlu0 %v1493
  %v1495 = vpop.xlane.xlu0 %1494
  %v1496 = vsel %vm197, %v1408, -inf
  %1497 = vmax.xlane.f32.xlu0 %v1496
  %v1498 = vpop.xlane.xlu0 %1497
  %v1499 = vsel %vm197, %v1495, -inf
  %v1500 = vrot.slane %v1499, 4
  %v1501 = vmax.f32 %v1499, %v1500
  %v1502 = vrot.slane %v1501, 2
  %v1503 = vmax.f32 %v1501, %v1502
  %v1504 = vrot.slane %v1503, 1
  %v1505 = vmax.f32 %v1503, %v1504
  %v1506 = vsel %vm197, %v1498, -inf
  %v1507 = vrot.slane %v1506, 4
  %v1508 = vmax.f32 %v1506, %v1507
  %v1509 = vrot.slane %v1508, 2
  %v1510 = vmax.f32 %v1508, %v1509
  %v1511 = vrot.slane %v1510, 1
  %v1512 = vmax.f32 %v1510, %v1511
  %vm1513 = vcmp.ge.f32.partialorder %v1407, %v1505
  %vm1514 = vcmp.ge.f32.partialorder %v1408, %v1512
  %v1515 = vsel %vm1513, %v195, 768
  %v1516 = vsel %vm1514, %v195, 768
  %v1517 = vsel %vm197, %v1515, 2147483647
  %v1518 = vand.u32 %v1517, 65535
  %v1519 = vshra.s32 %v1517, 16
  %v1520 = vcvt.s32.f32 %v1518
  %v1521 = vcvt.s32.f32 %v1519
  %1522 = vmin.xlane.f32.xlu0 %v1521
  %v1523 = vpop.xlane.xlu0 %1522
  %vm1524 = vcmp.eq.f32.partialorder %v1521, %v1523
  %v1525 = vsel %vm1524, %v1520, inf
  %1526 = vmin.xlane.f32.xlu0 %v1525
  %v1527 = vpop.xlane.xlu0 %1526
  %v1528 = vcvt.f32.s32 %v1527
  %v1529 = vcvt.f32.s32 %v1523
  %v1530 = vshll.u32 %v1529, 16
  %v1531 = vadd.s32 %v1530, %v1528
  %v1532 = vsel %vm197, %v1516, 2147483647
  %v1533 = vand.u32 %v1532, 65535
  %v1534 = vshra.s32 %v1532, 16
  %v1535 = vcvt.s32.f32 %v1533
  %v1536 = vcvt.s32.f32 %v1534
  %1537 = vmin.xlane.f32.xlu0 %v1536
  %v1538 = vpop.xlane.xlu0 %1537
  %vm1539 = vcmp.eq.f32.partialorder %v1536, %v1538
  %v1540 = vsel %vm1539, %v1535, inf
  %1541 = vmin.xlane.f32.xlu0 %v1540
  %v1542 = vpop.xlane.xlu0 %1541
  %v1543 = vcvt.f32.s32 %v1542
  %v1544 = vcvt.f32.s32 %v1538
  %v1545 = vshll.u32 %v1544, 16
  %v1546 = vadd.s32 %v1545, %v1543
  %v1547 = vsel %vm197, %v1531, 2147483647
  %v1548 = vrot.slane %v1547, 4
  %vm1549 = vcmp.lt.s32.totalorder %v1547, %v1548
  %v1550 = vsel %vm1549, %v1547, %v1548
  %v1551 = vrot.slane %v1550, 2
  %vm1552 = vcmp.lt.s32.totalorder %v1550, %v1551
  %v1553 = vsel %vm1552, %v1550, %v1551
  %v1554 = vrot.slane %v1553, 1
  %vm1555 = vcmp.lt.s32.totalorder %v1553, %v1554
  %v1556 = vsel %vm1555, %v1553, %v1554
  %v1557 = vsel %vm197, %v1546, 2147483647
  %v1558 = vrot.slane %v1557, 4
  %vm1559 = vcmp.lt.s32.totalorder %v1557, %v1558
  %v1560 = vsel %vm1559, %v1557, %v1558
  %v1561 = vrot.slane %v1560, 2
  %vm1562 = vcmp.lt.s32.totalorder %v1560, %v1561
  %v1563 = vsel %vm1562, %v1560, %v1561
  %v1564 = vrot.slane %v1563, 1
  %vm1565 = vcmp.lt.s32.totalorder %v1563, %v1564
  %v1566 = vsel %vm1565, %v1563, %v1564
  %v1569 = vsel %vm276, %v1512, %v1505
  %v1571 = vsel %vm1485, %v1569, %v1402
  %v1572 = vsel %vm276, %v1566, %v1556
  %v1573 = vsel %vm1485, %v1572, %v1404
  %1575 = vrot.lane.b32.xlu0 %v1571, 8
  %v1576 = vpop.permute.xlu0 %1575
  %vm1578 = vcmask 64512
  %v1579 = vsel %vm1578, %v1490, %v1576
  %1580 = vrot.lane.b32.xlu0 %v1573, 8
  %v1581 = vpop.permute.xlu0 %1580
  %v1582 = vsel %vm1578, %v1492, %v1581
  %vm1583 = vcmask 123904
  %v1584 = vsel %vm1583, %v1579, -inf
  %1585 = vmax.xlane.f32.xlu0 %v1584
  %v1586 = vpop.xlane.xlu0 %1585
  %vm1587 = vcmp.ge.f32.partialorder %v1579, %v1586
  %v1588 = vsel %vm1587, %v1582, 768
  %v1589 = vsel %vm1583, %v1588, 2147483647
  %v1590 = vand.u32 %v1589, 65535
  %v1591 = vshra.s32 %v1589, 16
  %v1592 = vcvt.s32.f32 %v1590
  %v1593 = vcvt.s32.f32 %v1591
  %1594 = vmin.xlane.f32.xlu0 %v1593
  %v1595 = vpop.xlane.xlu0 %1594
  %vm1596 = vcmp.eq.f32.partialorder %v1593, %v1595
  %v1597 = vsel %vm1596, %v1592, inf
  %1598 = vmin.xlane.f32.xlu0 %v1597
  %v1599 = vpop.xlane.xlu0 %1598
  %v1600 = vcvt.f32.s32 %v1599
  %v1601 = vcvt.f32.s32 %v1595
  %v1602 = vshll.u32 %v1601, 16
  %v1603 = vadd.s32 %v1602, %v1600
  %v1604 = vsel %vm273, %v1586, 0.0
  %v1605 = vsel %vm273, %v1603, 0
  %vm1606 = vcmp.eq.s32.totalorder %v1582, %v1603
  %v1607 = vsel %vm1606, -inf, %v1579
  %v1608 = vsel %vm1583, %v1607, -inf
  %1609 = vmax.xlane.f32.xlu0 %v1608
  %v1610 = vpop.xlane.xlu0 %1609
  %vm1611 = vcmp.ge.f32.partialorder %v1607, %v1610
  %v1612 = vsel %vm1611, %v1582, 768
  %v1613 = vsel %vm1583, %v1612, 2147483647
  %v1614 = vand.u32 %v1613, 65535
  %v1615 = vshra.s32 %v1613, 16
  %v1616 = vcvt.s32.f32 %v1614
  %v1617 = vcvt.s32.f32 %v1615
  %1618 = vmin.xlane.f32.xlu0 %v1617
  %v1619 = vpop.xlane.xlu0 %1618
  %vm1620 = vcmp.eq.f32.partialorder %v1617, %v1619
  %v1621 = vsel %vm1620, %v1616, inf
  %1622 = vmin.xlane.f32.xlu0 %v1621
  %v1623 = vpop.xlane.xlu0 %1622
  %v1624 = vcvt.f32.s32 %v1623
  %v1625 = vcvt.f32.s32 %v1619
  %v1626 = vshll.u32 %v1625, 16
  %v1627 = vadd.s32 %v1626, %v1624
  %v1628 = vsel %vm447, %v1610, %v1604
  %v1629 = vsel %vm447, %v1627, %v1605
  %vm1630 = vcmp.eq.s32.totalorder %v1582, %v1627
  %v1631 = vsel %vm1630, -inf, %v1607
  %v1632 = vsel %vm1583, %v1631, -inf
  %1633 = vmax.xlane.f32.xlu0 %v1632
  %v1634 = vpop.xlane.xlu0 %1633
  %vm1635 = vcmp.ge.f32.partialorder %v1631, %v1634
  %v1636 = vsel %vm1635, %v1582, 768
  %v1637 = vsel %vm1583, %v1636, 2147483647
  %v1638 = vand.u32 %v1637, 65535
  %v1639 = vshra.s32 %v1637, 16
  %v1640 = vcvt.s32.f32 %v1638
  %v1641 = vcvt.s32.f32 %v1639
  %1642 = vmin.xlane.f32.xlu0 %v1641
  %v1643 = vpop.xlane.xlu0 %1642
  %vm1644 = vcmp.eq.f32.partialorder %v1641, %v1643
  %v1645 = vsel %vm1644, %v1640, inf
  %1646 = vmin.xlane.f32.xlu0 %v1645
  %v1647 = vpop.xlane.xlu0 %1646
  %v1648 = vcvt.f32.s32 %v1647
  %v1649 = vcvt.f32.s32 %v1643
  %v1650 = vshll.u32 %v1649, 16
  %v1651 = vadd.s32 %v1650, %v1648
  %v1652 = vsel %vm620, %v1634, %v1628
  %v1653 = vsel %vm620, %v1651, %v1629
  %vm1654 = vcmp.eq.s32.totalorder %v1582, %v1651
  %v1655 = vsel %vm1654, -inf, %v1631
  %v1656 = vsel %vm1583, %v1655, -inf
  %1657 = vmax.xlane.f32.xlu0 %v1656
  %v1658 = vpop.xlane.xlu0 %1657
  %vm1659 = vcmp.ge.f32.partialorder %v1655, %v1658
  %v1660 = vsel %vm1659, %v1582, 768
  %v1661 = vsel %vm1583, %v1660, 2147483647
  %v1662 = vand.u32 %v1661, 65535
  %v1663 = vshra.s32 %v1661, 16
  %v1664 = vcvt.s32.f32 %v1662
  %v1665 = vcvt.s32.f32 %v1663
  %1666 = vmin.xlane.f32.xlu0 %v1665
  %v1667 = vpop.xlane.xlu0 %1666
  %vm1668 = vcmp.eq.f32.partialorder %v1665, %v1667
  %v1669 = vsel %vm1668, %v1664, inf
  %1670 = vmin.xlane.f32.xlu0 %v1669
  %v1671 = vpop.xlane.xlu0 %1670
  %v1672 = vcvt.f32.s32 %v1671
  %v1673 = vcvt.f32.s32 %v1667
  %v1674 = vshll.u32 %v1673, 16
  %v1675 = vadd.s32 %v1674, %v1672
  %v1676 = vsel %vm793, %v1658, %v1652
  %v1677 = vsel %vm793, %v1675, %v1653
  %vm1678 = vcmp.eq.s32.totalorder %v1582, %v1675
  %v1679 = vsel %vm1678, -inf, %v1655
  %v1680 = vsel %vm1583, %v1679, -inf
  %1681 = vmax.xlane.f32.xlu0 %v1680
  %v1682 = vpop.xlane.xlu0 %1681
  %vm1683 = vcmp.ge.f32.partialorder %v1679, %v1682
  %v1684 = vsel %vm1683, %v1582, 768
  %v1685 = vsel %vm1583, %v1684, 2147483647
  %v1686 = vand.u32 %v1685, 65535
  %v1687 = vshra.s32 %v1685, 16
  %v1688 = vcvt.s32.f32 %v1686
  %v1689 = vcvt.s32.f32 %v1687
  %1690 = vmin.xlane.f32.xlu0 %v1689
  %v1691 = vpop.xlane.xlu0 %1690
  %vm1692 = vcmp.eq.f32.partialorder %v1689, %v1691
  %v1693 = vsel %vm1692, %v1688, inf
  %1694 = vmin.xlane.f32.xlu0 %v1693
  %v1695 = vpop.xlane.xlu0 %1694
  %v1696 = vcvt.f32.s32 %v1695
  %v1697 = vcvt.f32.s32 %v1691
  %v1698 = vshll.u32 %v1697, 16
  %v1699 = vadd.s32 %v1698, %v1696
  %v1700 = vsel %vm966, %v1682, %v1676
  %v1701 = vsel %vm966, %v1699, %v1677
  %vm1702 = vcmp.eq.s32.totalorder %v1582, %v1699
  %v1703 = vsel %vm1702, -inf, %v1679
  %v1704 = vsel %vm1583, %v1703, -inf
  %1705 = vmax.xlane.f32.xlu0 %v1704
  %v1706 = vpop.xlane.xlu0 %1705
  %vm1707 = vcmp.ge.f32.partialorder %v1703, %v1706
  %v1708 = vsel %vm1707, %v1582, 768
  %v1709 = vsel %vm1583, %v1708, 2147483647
  %v1710 = vand.u32 %v1709, 65535
  %v1711 = vshra.s32 %v1709, 16
  %v1712 = vcvt.s32.f32 %v1710
  %v1713 = vcvt.s32.f32 %v1711
  %1714 = vmin.xlane.f32.xlu0 %v1713
  %v1715 = vpop.xlane.xlu0 %1714
  %vm1716 = vcmp.eq.f32.partialorder %v1713, %v1715
  %v1717 = vsel %vm1716, %v1712, inf
  %1718 = vmin.xlane.f32.xlu0 %v1717
  %v1719 = vpop.xlane.xlu0 %1718
  %v1720 = vcvt.f32.s32 %v1719
  %v1721 = vcvt.f32.s32 %v1715
  %v1722 = vshll.u32 %v1721, 16
  %v1723 = vadd.s32 %v1722, %v1720
  %v1724 = vsel %vm1139, %v1706, %v1700
  %v1725 = vsel %vm1139, %v1723, %v1701
  %vm1726 = vcmp.eq.s32.totalorder %v1582, %v1723
  %v1727 = vsel %vm1726, -inf, %v1703
  %v1728 = vsel %vm1583, %v1727, -inf
  %1729 = vmax.xlane.f32.xlu0 %v1728
  %v1730 = vpop.xlane.xlu0 %1729
  %vm1731 = vcmp.ge.f32.partialorder %v1727, %v1730
  %v1732 = vsel %vm1731, %v1582, 768
  %v1733 = vsel %vm1583, %v1732, 2147483647
  %v1734 = vand.u32 %v1733, 65535
  %v1735 = vshra.s32 %v1733, 16
  %v1736 = vcvt.s32.f32 %v1734
  %v1737 = vcvt.s32.f32 %v1735
  %1738 = vmin.xlane.f32.xlu0 %v1737
  %v1739 = vpop.xlane.xlu0 %1738
  %vm1740 = vcmp.eq.f32.partialorder %v1737, %v1739
  %v1741 = vsel %vm1740, %v1736, inf
  %1742 = vmin.xlane.f32.xlu0 %v1741
  %v1743 = vpop.xlane.xlu0 %1742
  %v1744 = vcvt.f32.s32 %v1743
  %v1745 = vcvt.f32.s32 %v1739
  %v1746 = vshll.u32 %v1745, 16
  %v1747 = vadd.s32 %v1746, %v1744
  %v1748 = vsel %vm1312, %v1730, %v1724
  %v1749 = vsel %vm1312, %v1747, %v1725
  %vm1750 = vcmp.eq.s32.totalorder %v1582, %v1747
  %v1751 = vsel %vm1750, -inf, %v1727
  %v1752 = vsel %vm1583, %v1751, -inf
  %1753 = vmax.xlane.f32.xlu0 %v1752
  %v1754 = vpop.xlane.xlu0 %1753
  %vm1755 = vcmp.ge.f32.partialorder %v1751, %v1754
  %v1756 = vsel %vm1755, %v1582, 768
  %v1757 = vsel %vm1583, %v1756, 2147483647
  %v1758 = vand.u32 %v1757, 65535
  %v1759 = vshra.s32 %v1757, 16
  %v1760 = vcvt.s32.f32 %v1758
  %v1761 = vcvt.s32.f32 %v1759
  %1762 = vmin.xlane.f32.xlu0 %v1761
  %v1763 = vpop.xlane.xlu0 %1762
  %vm1764 = vcmp.eq.f32.partialorder %v1761, %v1763
  %v1765 = vsel %vm1764, %v1760, inf
  %1766 = vmin.xlane.f32.xlu0 %v1765
  %v1767 = vpop.xlane.xlu0 %1766
  %v1768 = vcvt.f32.s32 %v1767
  %v1769 = vcvt.f32.s32 %v1763
  %v1770 = vshll.u32 %v1769, 16
  %v1771 = vadd.s32 %v1770, %v1768
  %v1772 = vsel %vm1485, %v1754, %v1748
  %v1773 = vsel %vm1485, %v1771, %v1749
  %v1774 = vshra.s32 %v1773, 8
  %v1775 = vand.u32 %v1773, 255
  %v1776 = vshra.s32 %v1775, 4
  %v1777 = vand.u32 %v1775, 15
  %v1778 = vperm.slane %v1775, 0
  %v1779 = vlaneseq
  %v1780 = vshrl.u32 %v1779, 7
  %1782 = vset.pattern.permute.xlu0 %v1780
  %1783 = vperm.xlu0 %1782, %v1778
  %v1784 = vpop.permute.xlu0 %1783
  %v1785 = vperm.slane %v1775, 1
  %v1786 = vlaneseq
  %v1787 = vshrl.u32 %v1786, 7
  %1789 = vset.pattern.permute.xlu0 %v1787
  %1790 = vperm.xlu0 %1789, %v1785
  %v1791 = vpop.permute.xlu0 %1790
  %vm1792 = vcmp.eq.s32.totalorder %v1784, %v14
  %vm1793 = vcmp.eq.s32.totalorder %v1784, %v15
  %vm1794 = vcmp.eq.s32.totalorder %v1791, %v14
  %vm1795 = vcmp.eq.s32.totalorder %v1791, %v15
  %v1796 = vsel %vm1792, 1, 0
  %v1797 = vsel %vm1793, 1, 0
  %v1798 = vsel %vm1794, 1, 0
  %v1799 = vsel %vm1795, 1, 0
  %v1800 = vcvt.s32.f32 %v1796
  %v1801 = vcvt.s32.f32 %v1797
  %v1802 = vcvt.s32.f32 %v1798
  %v1803 = vcvt.s32.f32 %v1799
  %v1804 = vld [vmem:[%s1] sm:$0xff]
  %v1805 = vld [vmem:[%s1 + $0x8] sm:$0xff]
  %v1806 = vld [vmem:[%s1 + $0x10] sm:$0xff]
  %v1807 = vld [vmem:[%s1 + $0x18] sm:$0xff]
  %1808 = vmatpush.xpose.msra.mxu0 0.0
  %1809 = vmatpush.xpose.msra.mxu0 0.0
  %1810 = vmatpush.xpose.msra.mxu0 0.0
  %1811 = vmatpush.xpose.msra.mxu0 0.0
  %1812 = vmatpush.xpose.msra.mxu0 0.0
  %1813 = vmatpush.xpose.msra.mxu0 0.0
  %1814 = vmatpush.xpose.msra.mxu0 0.0
  %1815 = vmatpush.xpose.msra.mxu0 0.0
  %1816 = vmatpush.xpose.msra.mxu0 0.0
  %1817 = vmatpush.xpose.msra.mxu0 0.0
  %1818 = vmatpush.xpose.msra.mxu0 0.0
  %1819 = vmatpush.xpose.msra.mxu0 0.0
  %1820 = vmatpush.xpose.msra.mxu0 0.0
  %1821 = vmatpush.xpose.msra.mxu0 0.0
  %1822 = vmatpush.xpose.msra.mxu0 0.0
  %1823 = vmatpush.xpose.msra.mxu0 %v1804
  %1824 = vmatmul.f32.gmra.mxu0 %v1800
  %v1825 = vpop.f32.mrf.mxu0
  %v1826 = vadd.f32 0.0, %v1825
  %1827 = vdwg.mxu0
  %1828 = vmatpush.xpose.msra.mxu0 0.0
  %1829 = vmatpush.xpose.msra.mxu0 0.0
  %1830 = vmatpush.xpose.msra.mxu0 0.0
  %1831 = vmatpush.xpose.msra.mxu0 0.0
  %1832 = vmatpush.xpose.msra.mxu0 0.0
  %1833 = vmatpush.xpose.msra.mxu0 0.0
  %1834 = vmatpush.xpose.msra.mxu0 0.0
  %1835 = vmatpush.xpose.msra.mxu0 0.0
  %1836 = vmatpush.xpose.msra.mxu0 0.0
  %1837 = vmatpush.xpose.msra.mxu0 0.0
  %1838 = vmatpush.xpose.msra.mxu0 0.0
  %1839 = vmatpush.xpose.msra.mxu0 0.0
  %1840 = vmatpush.xpose.msra.mxu0 0.0
  %1841 = vmatpush.xpose.msra.mxu0 0.0
  %1842 = vmatpush.xpose.msra.mxu0 0.0
  %1843 = vmatpush.xpose.msra.mxu0 %v1805
  %1844 = vmatmul.f32.gmra.mxu0 %v1801
  %v1845 = vpop.f32.mrf.mxu0
  %v1846 = vadd.f32 %v1826, %v1845
  %1847 = vdwg.mxu0
  %1848 = vmatpush.xpose.msra.mxu0 0.0
  %1849 = vmatpush.xpose.msra.mxu0 0.0
  %1850 = vmatpush.xpose.msra.mxu0 0.0
  %1851 = vmatpush.xpose.msra.mxu0 0.0
  %1852 = vmatpush.xpose.msra.mxu0 0.0
  %1853 = vmatpush.xpose.msra.mxu0 0.0
  %1854 = vmatpush.xpose.msra.mxu0 0.0
  %1855 = vmatpush.xpose.msra.mxu0 0.0
  %1856 = vmatpush.xpose.msra.mxu0 0.0
  %1857 = vmatpush.xpose.msra.mxu0 0.0
  %1858 = vmatpush.xpose.msra.mxu0 0.0
  %1859 = vmatpush.xpose.msra.mxu0 0.0
  %1860 = vmatpush.xpose.msra.mxu0 0.0
  %1861 = vmatpush.xpose.msra.mxu0 0.0
  %1862 = vmatpush.xpose.msra.mxu0 0.0
  %1863 = vmatpush.xpose.msra.mxu0 %v1806
  %1864 = vmatmul.f32.gmra.mxu0 %v1802
  %v1865 = vpop.f32.mrf.mxu0
  %v1866 = vadd.f32 0.0, %v1865
  %1867 = vdwg.mxu0
  %1868 = vmatpush.xpose.msra.mxu0 0.0
  %1869 = vmatpush.xpose.msra.mxu0 0.0
  %1870 = vmatpush.xpose.msra.mxu0 0.0
  %1871 = vmatpush.xpose.msra.mxu0 0.0
  %1872 = vmatpush.xpose.msra.mxu0 0.0
  %1873 = vmatpush.xpose.msra.mxu0 0.0
  %1874 = vmatpush.xpose.msra.mxu0 0.0
  %1875 = vmatpush.xpose.msra.mxu0 0.0
  %1876 = vmatpush.xpose.msra.mxu0 0.0
  %1877 = vmatpush.xpose.msra.mxu0 0.0
  %1878 = vmatpush.xpose.msra.mxu0 0.0
  %1879 = vmatpush.xpose.msra.mxu0 0.0
  %1880 = vmatpush.xpose.msra.mxu0 0.0
  %1881 = vmatpush.xpose.msra.mxu0 0.0
  %1882 = vmatpush.xpose.msra.mxu0 0.0
  %1883 = vmatpush.xpose.msra.mxu0 %v1807
  %1884 = vmatmul.f32.gmra.mxu0 %v1803
  %v1885 = vpop.f32.mrf.mxu0
  %v1886 = vadd.f32 %v1866, %v1885
  %1887 = vdwg.mxu0
  %v1888 = vperm.slane %v1772, 0
  %v1889 = vlaneseq
  %v1890 = vshrl.u32 %v1889, 7
  %1892 = vset.pattern.permute.xlu0 %v1890
  %1893 = vperm.xlu0 %1892, %v1888
  %v1894 = vpop.permute.xlu0 %1893
  %v1895 = vperm.slane %v1772, 1
  %v1896 = vlaneseq
  %v1897 = vshrl.u32 %v1896, 7
  %1899 = vset.pattern.permute.xlu0 %v1897
  %1900 = vperm.xlu0 %1899, %v1895
  %v1901 = vpop.permute.xlu0 %1900
  %v1902 = vcvt.s32.f32 %v1774
  %v1903 = vperm.slane %v1902, 0
  %v1904 = vlaneseq
  %v1905 = vshrl.u32 %v1904, 7
  %1907 = vset.pattern.permute.xlu0 %v1905
  %1908 = vperm.xlu0 %1907, %v1903
  %v1909 = vpop.permute.xlu0 %1908
  %v1910 = vperm.slane %v1902, 1
  %v1911 = vlaneseq
  %v1912 = vshrl.u32 %v1911, 7
  %1914 = vset.pattern.permute.xlu0 %v1912
  %1915 = vperm.xlu0 %1914, %v1910
  %v1916 = vpop.permute.xlu0 %1915
  %v1917 = vcvt.s32.f32 %v1777
  %v1918 = vperm.slane %v1917, 0
  %v1919 = vlaneseq
  %v1920 = vshrl.u32 %v1919, 7
  %1922 = vset.pattern.permute.xlu0 %v1920
  %1923 = vperm.xlu0 %1922, %v1918
  %v1924 = vpop.permute.xlu0 %1923
  %v1925 = vperm.slane %v1917, 1
  %v1926 = vlaneseq
  %v1927 = vshrl.u32 %v1926, 7
  %1929 = vset.pattern.permute.xlu0 %v1927
  %1930 = vperm.xlu0 %1929, %v1925
  %v1931 = vpop.permute.xlu0 %1930
  %v1932 = vcvt.s32.f32 %v1776
  %v1933 = vperm.slane %v1932, 0
  %v1934 = vlaneseq
  %v1935 = vshrl.u32 %v1934, 7
  %1937 = vset.pattern.permute.xlu0 %v1935
  %1938 = vperm.xlu0 %1937, %v1933
  %v1939 = vpop.permute.xlu0 %1938
  %v1940 = vperm.slane %v1932, 1
  %v1941 = vlaneseq
  %v1942 = vshrl.u32 %v1941, 7
  %1944 = vset.pattern.permute.xlu0 %v1942
  %1945 = vperm.xlu0 %1944, %v1940
  %v1946 = vpop.permute.xlu0 %1945
  %v1947 = vsel %vm1578, %v1846, %v1894
  %v1948 = vsel %vm1578, %v1886, %v1901
  %vm1949 = vcmask 72704
  %v1950 = vsel %vm1949, %v1947, %v1909
  %v1951 = vsel %vm1949, %v1948, %v1916
  %vm1952 = vcmask 80896
  %v1953 = vsel %vm1952, %v1950, %v1924
  %v1954 = vsel %vm1952, %v1951, %v1931
  %vm1955 = vcmask 89088
  %v1956 = vsel %vm1955, %v1953, %v1939
  %v1957 = vsel %vm1955, %v1954, %v1946
  %vm1958 = vcmask 97280
  %1959 = vst.msk [vmem:[%s2] sm:$0xff] %vm1958, %v1956
  %1960 = vst.msk [vmem:[%s2 + $0x8] sm:$0xff] %vm1958, %v1957
  // Predicated region
  $region10: #{_smoke_forward_fixed.1} parent=0 // pred_check
    _
  $region11: #{_smoke_forward_fixed.1} parent=0 // pred_check_branch
    %1962 = sbr.rel (0) target = $region13
  $region12: #{_smoke_forward_fixed.1} parent=0 // pred_region
    _
  $region13: #{_smoke_forward_fixed.1} parent=0 // pred_fallthru
    _
  // Predicated region
  $region14: #{_smoke_forward_fixed.1} parent=0 // pred_check
    _
  $region15: #{_smoke_forward_fixed.1} parent=0 // pred_check_branch
    %1964 = sbr.rel (0) target = $region17
  $region16: #{_smoke_forward_fixed.1} parent=0 // pred_region
    _
  $region17: #{_smoke_forward_fixed.1} parent=0 // pred_fallthru
    _

</llo_original>
